<compile_context>
chip_gen: v7x
topology: tpu7x:2x2x1
jax: 0.10.0
libtpu: 0.0.40
codegen_flags: <defaults>
</compile_context>

<pallas_src>
import functools

import jax
import jax.numpy as jnp
from jax import lax
from jax.experimental import pallas as pl
from jax.experimental.pallas import tpu as pltpu


# ----------------------------------------------------------------------------
# In-kernel helpers
# ----------------------------------------------------------------------------
def _lrelu(v):
    return jnp.maximum(v, 0.2 * v)


def _conv9(pad_ref, w_ref, r0, rows, W, C):
    """3x3 SAME conv as 9 accumulated tap-dots on the MXU.

    pad_ref : (>= r0+rows+2, W+2, C) bf16 buffer whose 1-px halo ring is zero.
    w_ref   : (9, C, C) bf16, w_ref[ky*3+kx][cin, cout].
    Output row j (0 <= j < rows) is the conv centered on pad row r0 + j + 1.
    Returns (rows*W, C) float32.
    """
    acc = jnp.zeros((rows * W, C), jnp.float32)
    for t in range(9):
        ky, kx = t // 3, t % 3
        sl = pad_ref[r0 + ky:r0 + ky + rows, kx:kx + W, :]        # (rows, W, C) bf16
        acc = acc + jnp.dot(sl.reshape(rows * W, C), w_ref[t],
                            preferred_element_type=jnp.float32)
    return acc


# ----------------------------------------------------------------------------
# Pallas kernels
# ----------------------------------------------------------------------------
def _body_kernel(x_ref, xt_ref, xb_ref, w1_ref, w2_ref, o_ref, pad, *, SH, W, C):
    """Fused RCBdown body on one H-strip: conv3x3 + lrelu + conv3x3 + lrelu.

    x_ref   : (1, SH, W, C) f32 main strip
    xt_ref  : (1, 2, W, C)  f32 two rows just above the strip (clamped block)
    xb_ref  : (1, 2, W, C)  f32 two rows just below the strip (clamped block)
    w1/w2   : (9, C, C) bf16 tap weights
    o_ref   : (1, SH*W, C) bf16 strip output
    pad     : VMEM (SH+4, W+2, C) bf16 scratch (x, then the conv1 activation)
    """
    s = pl.program_id(1)
    ns = pl.num_programs(1)
    bf = jnp.bfloat16

    # Zero only the 1-px halo: two columns + boundary rows. Interior is overwritten.
    zcol = jnp.zeros((SH + 4, 1, C), bf)
    pad[:, 0:1, :] = zcol
    pad[:, W + 1:W + 2, :] = zcol

    ztwo = jnp.zeros((2, W + 2, C), bf)

    @pl.when(s == 0)
    def _():
        pad[0:2, :, :] = ztwo                                  # image rows -2, -1

    @pl.when(s > 0)
    def _():
        pad[0:2, 1:W + 1, :] = xt_ref[0].astype(bf)            # prev-strip halo

    @pl.when(s == ns - 1)
    def _():
        pad[SH + 2:SH + 4, :, :] = ztwo                        # image rows H, H+1

    @pl.when(s < ns - 1)
    def _():
        pad[SH + 2:SH + 4, 1:W + 1, :] = xb_ref[0].astype(bf)  # next-strip halo

    pad[2:SH + 2, 1:W + 1, :] = x_ref[0].astype(bf)            # main strip

    # conv1 (+lrelu) over SH+2 rows so conv2 has its 1-row halo already in VMEM.
    h1 = _lrelu(_conv9(pad, w1_ref, 0, SH + 2, W, C))
    pad[1:SH + 3, 1:W + 1, :] = h1.reshape(SH + 2, W, C).astype(bf)

    # SAME padding for conv2 at the image edges: h1 just outside the image is zero.
    zone = jnp.zeros((1, W + 2, C), bf)

    @pl.when(s == 0)
    def _():
        pad[1:2, :, :] = zone

    @pl.when(s == ns - 1)
    def _():
        pad[SH + 2:SH + 3, :, :] = zone

    h2 = _lrelu(_conv9(pad, w2_ref, 1, SH, W, C))
    o_ref[...] = h2.reshape(1, SH * W, C).astype(o_ref.dtype)


def _head_kernel(h_ref, x_ref, wh1_ref, wh2_ref, wm_ref, wa1_ref, wa2_ref,
                 o_ref, pad, *, H, W, C):
    """Fused gcnet.head + global context + channel_add + both residual adds.

    h_ref   : (1, H*W, C) bf16 body output (ContextBlock input / inner residual)
    x_ref   : (1, H*W, C) f32  original RCBdown input (outer residual)
    wh1/wh2 : (9, C, C) bf16 block-diagonal (groups=2) tap weights
    wm      : (1, C) f32 conv_mask weight
    wa1/wa2 : (C, C) f32 channel_add 1x1 weights (row = in-channel)
    pad     : VMEM (H+2, W+2, C) bf16 scratch
    """
    bf = jnp.bfloat16
    f32 = jnp.float32

    # Zero only the 1-px halo ring each step.
    zrow = jnp.zeros((1, W + 2, C), bf)
    zcol = jnp.zeros((H + 2, 1, C), bf)
    pad[0:1, :, :] = zrow
    pad[H + 1:H + 2, :, :] = zrow
    pad[:, 0:1, :] = zcol
    pad[:, W + 1:W + 2, :] = zcol

    h_flat = h_ref[0]                                          # (H*W, C) bf16
    pad[1:H + 1, 1:W + 1, :] = h_flat.reshape(H, W, C)

    # head conv1 (groups=2 via block-diagonal weights) + LeakyReLU
    y1 = _lrelu(_conv9(pad, wh1_ref, 0, H, W, C))
    pad[1:H + 1, 1:W + 1, :] = y1.reshape(H, W, C).astype(bf)

    # head conv2 (no activation)
    y = _conv9(pad, wh2_ref, 0, H, W, C)                       # (H*W, C) f32

    # conv_mask (1x1, C -> 1) + spatial softmax over all positions (flat layout).
    logits = jnp.sum(y * wm_ref[...], axis=1, keepdims=True)   # (H*W, 1)
    m = jnp.max(logits, axis=0, keepdims=True)
    e = jnp.exp(logits - m)
    ssum = jnp.sum(e, axis=0, keepdims=True)
    attn = e * pl.reciprocal(ssum, approx=True)                # (H*W, 1)

    # context[c] = sum_hw attn[hw] * y[hw, c]   (no relayout / broadcast of y)
    ctx = jnp.sum(y * attn, axis=0, keepdims=True)             # (1, C)

    # channel_add_conv: 1x1 -> LeakyReLU -> 1x1 (tiny, f32)
    t = jnp.dot(ctx, wa1_ref[...], preferred_element_type=f32)
    t = _lrelu(t)
    t = jnp.dot(t, wa2_ref[...], preferred_element_type=f32)   # (1, C)

    # ContextBlock tail: gc = h + lrelu(y + t);  RCBdown tail: out = x + lrelu(gc)
    gc = h_flat.astype(f32) + _lrelu(y + t)
    out = x_ref[0] + _lrelu(gc)
    o_ref[...] = out.reshape(1, H * W, C).astype(o_ref.dtype)


# ----------------------------------------------------------------------------
# pallas_call wrappers
# ----------------------------------------------------------------------------
def _vmem_limit_bytes():
    try:
        cap = int(pltpu.get_tpu_info().vmem_capacity_bytes)
    except Exception:
        return None
    # Leave headroom for double-buffered blocks + Mosaic internal scratch
    # (matters on v7x's 64 MiB; allows bigger tiles on 128 MiB chips).
    return min((cap * 3) // 4, 100 * 1024 * 1024)


def _compiler_params(dim_sem):
    return pltpu.CompilerParams(dimension_semantics=dim_sem,
                                vmem_limit_bytes=_vmem_limit_bytes())


def _pick_strip(H):
    """Largest strip height in {32,16,8} that divides H with >= 2 strips, else H."""
    for d in (32, 16, 8):
        if H % d == 0 and H // d >= 2:
            return d
    return H


def body_fused(x_nhwc, w1, w2):
    B, H, W, C = x_nhwc.shape
    SH = _pick_strip(H)
    NS = H // SH
    halo_hi = max(H // 2 - 1, 0)
    kernel = functools.partial(_body_kernel, SH=SH, W=W, C=C)

    def top_map(b, s):
        # 2-row block just above the strip; clamped (contents unused when s == 0).
        return (b, jnp.maximum(s * (SH // 2) - 1, 0), 0, 0)

    def bot_map(b, s):
        # 2-row block just below the strip; clamped (contents unused on the last strip).
        return (b, jnp.minimum((s + 1) * (SH // 2), halo_hi), 0, 0)

    return pl.pallas_call(
        kernel,
        out_shape=jax.ShapeDtypeStruct((B, H * W, C), jnp.bfloat16),
        grid=(B, NS),
        in_specs=[
            pl.BlockSpec((1, SH, W, C), lambda b, s: (b, s, 0, 0)),
            pl.BlockSpec((1, 2, W, C), top_map),
            pl.BlockSpec((1, 2, W, C), bot_map),
            pl.BlockSpec((9, C, C), lambda b, s: (0, 0, 0)),
            pl.BlockSpec((9, C, C), lambda b, s: (0, 0, 0)),
        ],
        out_specs=pl.BlockSpec((1, SH * W, C), lambda b, s: (b, s, 0)),
        scratch_shapes=[pltpu.VMEM((SH + 4, W + 2, C), jnp.bfloat16)],
        compiler_params=_compiler_params(("parallel", "parallel")),
    )(x_nhwc, x_nhwc, x_nhwc, w1, w2)


def head_context_fused(h_flat, x_flat, wh1, wh2, wm, wa1, wa2, *, H, W, C):
    B = h_flat.shape[0]
    kernel = functools.partial(_head_kernel, H=H, W=W, C=C)
    return pl.pallas_call(
        kernel,
        out_shape=jax.ShapeDtypeStruct((B, H * W, C), jnp.float32),
        grid=(B,),
        in_specs=[
            pl.BlockSpec((1, H * W, C), lambda b: (b, 0, 0)),
            pl.BlockSpec((1, H * W, C), lambda b: (b, 0, 0)),
            pl.BlockSpec((9, C, C), lambda b: (0, 0, 0)),
            pl.BlockSpec((9, C, C), lambda b: (0, 0, 0)),
            pl.BlockSpec((1, C), lambda b: (0, 0)),
            pl.BlockSpec((C, C), lambda b: (0, 0)),
            pl.BlockSpec((C, C), lambda b: (0, 0)),
        ],
        out_specs=pl.BlockSpec((1, H * W, C), lambda b: (b, 0, 0)),
        scratch_shapes=[pltpu.VMEM((H + 2, W + 2, C), jnp.bfloat16)],
        compiler_params=_compiler_params(("parallel",)),
    )(h_flat, x_flat, wh1, wh2, wm, wa1, wa2)


# ----------------------------------------------------------------------------
# Parameter setup / layout conversion (plain-JAX glue)
# ----------------------------------------------------------------------------
def _taps_dense(w_oihw):
    """(Cout, Cin, 3, 3) -> (9, Cin, Cout) bf16, tap index t = ky*3 + kx."""
    cout, cin = w_oihw.shape[:2]
    return jnp.transpose(w_oihw, (2, 3, 1, 0)).reshape(9, cin, cout).astype(jnp.bfloat16)


def _taps_grouped_blockdiag(w_oihw, groups):
    """Grouped (Cout, Cin//g, 3, 3) weight -> block-diagonal (9, Cin, Cout) bf16."""
    cout, cin_g = w_oihw.shape[:2]
    cout_g = cout // groups
    cin = cin_g * groups
    w = jnp.zeros((9, cin, cout), jnp.float32)
    for g in range(groups):
        wg = w_oihw[g * cout_g:(g + 1) * cout_g]              # (Cout_g, Cin_g, 3, 3)
        wt = jnp.transpose(wg, (2, 3, 1, 0)).reshape(9, cin_g, cout_g)
        w = w.at[:, g * cin_g:(g + 1) * cin_g, g * cout_g:(g + 1) * cout_g].set(wt)
    return w.astype(jnp.bfloat16)


def make_params(key, n_feat):
    """Deterministic synthetic weights (PyTorch OIHW shapes, all bias=False)."""
    c = n_feat
    ks = jax.random.split(key, 7)
    std3 = 1.0 / jnp.sqrt(9.0 * c)
    std1 = 1.0 / jnp.sqrt(1.0 * c)
    raw = {
        "body0": jax.random.normal(ks[0], (c, c, 3, 3), jnp.float32) * std3,
        "body2": jax.random.normal(ks[1], (c, c, 3, 3), jnp.float32) * std3,
        "head0": jax.random.normal(ks[2], (c, c // 2, 3, 3), jnp.float32) * std3,
        "head2": jax.random.normal(ks[3], (c, c // 2, 3, 3), jnp.float32) * std3,
        "conv_mask": jax.random.normal(ks[4], (1, c, 1, 1), jnp.float32) * std1,
        "add0": jax.random.normal(ks[5], (c, c, 1, 1), jnp.float32) * std1,
        "add2": jax.random.normal(ks[6], (c, c, 1, 1), jnp.float32) * std1,
    }
    kp = {
        "wb1": _taps_dense(raw["body0"]),
        "wb2": _taps_dense(raw["body2"]),
        "wh1": _taps_grouped_blockdiag(raw["head0"], 2),
        "wh2": _taps_grouped_blockdiag(raw["head2"], 2),
        "wm": raw["conv_mask"][:, :, 0, 0],        # (1, C)
        "wa1": raw["add0"][:, :, 0, 0].T,          # (Cin, Cout)
        "wa2": raw["add2"][:, :, 0, 0].T,          # (Cin, Cout)
    }
    return raw, kp


# ----------------------------------------------------------------------------
# Full RCBdown forward (Pallas) and a pure-JAX reference
# ----------------------------------------------------------------------------
def rcbdown_pallas(x_nchw, kp):
    x = jnp.transpose(x_nchw, (0, 2, 3, 1))                    # NCHW -> NHWC
    B, H, W, C = x.shape
    h = body_fused(x, kp["wb1"], kp["wb2"])                    # (B, H*W, C) bf16
    x_flat = x.reshape(B, H * W, C)                            # free reshape
    out = head_context_fused(h, x_flat, kp["wh1"], kp["wh2"],
                             kp["wm"], kp["wa1"], kp["wa2"], H=H, W=W, C=C)
    return jnp.transpose(out.reshape(B, H, W, C), (0, 3, 1, 2))


def _conv_ref(x, w_oihw, groups, act):
    # bf16 operands / f32 accumulation, matching the kernel's MXU precision.
    w = jnp.transpose(w_oihw, (2, 3, 1, 0)).astype(jnp.bfloat16)   # OIHW -> HWIO
    y = lax.conv_general_dilated(
        x.astype(jnp.bfloat16), w, (1, 1), "SAME",
        dimension_numbers=("NHWC", "HWIO", "NHWC"),
        feature_group_count=groups,
        preferred_element_type=jnp.float32)
    return jnp.maximum(y, 0.2 * y) if act else y


def rcbdown_ref(x_nchw, raw):
    hp = lax.Precision.HIGHEST
    x = jnp.transpose(x_nchw, (0, 2, 3, 1))
    h = _conv_ref(x, raw["body0"], 1, True)
    h = _conv_ref(h, raw["body2"], 1, True)
    # The Pallas pipeline materialises the body output in bf16 before the head.
    h = h.astype(jnp.bfloat16).astype(jnp.float32)
    y = _conv_ref(h, raw["head0"], 2, True)
    y = _conv_ref(y, raw["head2"], 2, False)
    B, H, W, C = y.shape
    yv = y.reshape(B, H * W, C)
    logits = jnp.matmul(yv, raw["conv_mask"][:, :, 0, 0].T, precision=hp)  # (B, HW, 1)
    attn = jax.nn.softmax(logits, axis=1)
    context = jnp.sum(yv * attn, axis=1)                                   # (B, C)
    t = jnp.matmul(context, raw["add0"][:, :, 0, 0].T, precision=hp)
    t = jnp.maximum(t, 0.2 * t)
    t = jnp.matmul(t, raw["add2"][:, :, 0, 0].T, precision=hp)             # (B, C)
    gi = y + t[:, None, None, :]
    gc = h + jnp.maximum(gi, 0.2 * gi)
    out = x + jnp.maximum(gc, 0.2 * gc)
    return jnp.transpose(out, (0, 3, 1, 2))


if __name__ == "__main__":
    B, C, H, W = 2, 4, 16, 16
    key = jax.random.PRNGKey(0)
    k_x, k_w = jax.random.split(key)
    x = jax.random.normal(k_x, (B, C, H, W), jnp.float32)   # NCHW, like PyTorch
    raw, kp = make_params(k_w, C)

    out = jax.block_until_ready(rcbdown_pallas(x, kp))
    ref = jax.block_until_ready(rcbdown_ref(x, raw))

    assert out.shape == (B, C, H, W)
    assert bool(jnp.all(jnp.isfinite(out)))
    max_diff = float(jnp.max(jnp.abs(out - ref)))
    # Tolerance reflects bf16 MXU operands / bf16 intermediate + approx reciprocal.
    assert bool(jnp.allclose(out, ref, atol=3e-2, rtol=3e-2)), \
        f"max abs diff {max_diff}"
    print("KERNEL_OK")
</pallas_src>

<mosaic_0001>
module attributes {stable_mosaic.version = 11 : i64} {
  func.func @_body_kernel(%arg0: i32, %arg1: i32, %arg2: memref<1x8x16x4xf32, #tpu.memory_space<vmem>>, %arg3: memref<1x2x16x4xf32, #tpu.memory_space<vmem>>, %arg4: memref<1x2x16x4xf32, #tpu.memory_space<vmem>>, %arg5: memref<9x4x4xbf16, #tpu.memory_space<vmem>>, %arg6: memref<9x4x4xbf16, #tpu.memory_space<vmem>>, %arg7: memref<1x128x4xbf16, #tpu.memory_space<vmem>>, %arg8: memref<12x18x4xbf16, #tpu.memory_space<vmem>>) attributes {dimension_semantics = [#tpu.dimension_semantics<parallel>, #tpu.dimension_semantics<parallel>], iteration_bounds = array<i64: 2, 2>, scalar_prefetch = 0 : i64, scratch_operands = 1 : i64, tpu.core_type = #tpu.core_type<tc>, window_params = [{transform_indices = @transform_0, window_bounds = array<i64: 1, 8, 16, 4>}, {transform_indices = @transform_1, window_bounds = array<i64: 1, 2, 16, 4>}, {transform_indices = @transform_2, window_bounds = array<i64: 1, 2, 16, 4>}, {pipeline_mode = #tpu.pipeline_mode<synchronous>, transform_indices = @transform_3, window_bounds = array<i64: 9, 4, 4>}, {pipeline_mode = #tpu.pipeline_mode<synchronous>, transform_indices = @transform_4, window_bounds = array<i64: 9, 4, 4>}, {transform_indices = @transform_5, window_bounds = array<i64: 1, 128, 4>}]} {
    %cst = arith.constant 0.000000e+00 : bf16
    %0 = vector.broadcast %cst : bf16 to vector<12x1x4xbf16>
    %c0 = arith.constant 0 : index
    %c0_0 = arith.constant 0 : index
    %c0_1 = arith.constant 0 : index
    %1 = vector.load %arg8[%c0, %c0_0, %c0_1] : memref<12x18x4xbf16, #tpu.memory_space<vmem>>, vector<12x1x4xbf16>
    tpu.vector_store %arg8[%c0, %c0_0, %c0_1], %0 {strides = array<i32>} : memref<12x18x4xbf16, #tpu.memory_space<vmem>>, vector<12x1x4xbf16>,
    %c0_2 = arith.constant 0 : index
    %c17 = arith.constant 17 : index
    %c0_3 = arith.constant 0 : index
    %2 = vector.load %arg8[%c0_2, %c17, %c0_3] : memref<12x18x4xbf16, #tpu.memory_space<vmem>>, vector<12x1x4xbf16>
    tpu.vector_store %arg8[%c0_2, %c17, %c0_3], %0 {strides = array<i32>} : memref<12x18x4xbf16, #tpu.memory_space<vmem>>, vector<12x1x4xbf16>,
    %cst_4 = arith.constant 0.000000e+00 : bf16
    %3 = vector.broadcast %cst_4 : bf16 to vector<2x18x4xbf16>
    %c0_i32 = arith.constant 0 : i32
    %4 = arith.cmpi eq, %arg1, %c0_i32 : i32
    %5 = arith.extui %4 : i1 to i32
    %c0_i32_5 = arith.constant 0 : i32
    %6 = arith.cmpi ne, %5, %c0_i32_5 : i32
    scf.if %6 {
      %c0_151 = arith.constant 0 : index
      %c0_152 = arith.constant 0 : index
      %c0_153 = arith.constant 0 : index
      %149 = vector.load %arg8[%c0_151, %c0_152, %c0_153] : memref<12x18x4xbf16, #tpu.memory_space<vmem>>, vector<2x18x4xbf16>
      tpu.vector_store %arg8[%c0_151, %c0_152, %c0_153], %3 {strides = array<i32>} : memref<12x18x4xbf16, #tpu.memory_space<vmem>>, vector<2x18x4xbf16>,
    } else {
    }
    %c0_i32_6 = arith.constant 0 : i32
    %7 = arith.cmpi sgt, %arg1, %c0_i32_6 : i32
    %8 = arith.extui %7 : i1 to i32
    %c0_i32_7 = arith.constant 0 : i32
    %9 = arith.cmpi ne, %8, %c0_i32_7 : i32
    scf.if %9 {
      %c0_151 = arith.constant 0 : index
      %c0_152 = arith.constant 0 : index
      %c0_153 = arith.constant 0 : index
      %c0_154 = arith.constant 0 : index
      %149 = vector.load %arg3[%c0_151, %c0_152, %c0_153, %c0_154] : memref<1x2x16x4xf32, #tpu.memory_space<vmem>>, vector<1x2x16x4xf32>
      %150 = vector.shape_cast %149 : vector<1x2x16x4xf32> to vector<2x16x4xf32>
      %151 = arith.truncf %150 : vector<2x16x4xf32> to vector<2x16x4xbf16>
      %c0_155 = arith.constant 0 : index
      %c1_156 = arith.constant 1 : index
      %c0_157 = arith.constant 0 : index
      %152 = vector.load %arg8[%c0_155, %c1_156, %c0_157] : memref<12x18x4xbf16, #tpu.memory_space<vmem>>, vector<2x16x4xbf16>
      tpu.vector_store %arg8[%c0_155, %c1_156, %c0_157], %151 {strides = array<i32>} : memref<12x18x4xbf16, #tpu.memory_space<vmem>>, vector<2x16x4xbf16>,
    } else {
    }
    %c1_i32 = arith.constant 1 : i32
    %10 = arith.cmpi eq, %arg1, %c1_i32 : i32
    %11 = arith.extui %10 : i1 to i32
    %c0_i32_8 = arith.constant 0 : i32
    %12 = arith.cmpi ne, %11, %c0_i32_8 : i32
    scf.if %12 {
      %c10 = arith.constant 10 : index
      %c0_151 = arith.constant 0 : index
      %c0_152 = arith.constant 0 : index
      %149 = vector.load %arg8[%c10, %c0_151, %c0_152] : memref<12x18x4xbf16, #tpu.memory_space<vmem>>, vector<2x18x4xbf16>
      tpu.vector_store %arg8[%c10, %c0_151, %c0_152], %3 {strides = array<i32>} : memref<12x18x4xbf16, #tpu.memory_space<vmem>>, vector<2x18x4xbf16>,
    } else {
    }
    %c1_i32_9 = arith.constant 1 : i32
    %13 = arith.cmpi slt, %arg1, %c1_i32_9 : i32
    %14 = arith.extui %13 : i1 to i32
    %c0_i32_10 = arith.constant 0 : i32
    %15 = arith.cmpi ne, %14, %c0_i32_10 : i32
    scf.if %15 {
      %c0_151 = arith.constant 0 : index
      %c0_152 = arith.constant 0 : index
      %c0_153 = arith.constant 0 : index
      %c0_154 = arith.constant 0 : index
      %149 = vector.load %arg4[%c0_151, %c0_152, %c0_153, %c0_154] : memref<1x2x16x4xf32, #tpu.memory_space<vmem>>, vector<1x2x16x4xf32>
      %150 = vector.shape_cast %149 : vector<1x2x16x4xf32> to vector<2x16x4xf32>
      %151 = arith.truncf %150 : vector<2x16x4xf32> to vector<2x16x4xbf16>
      %c10 = arith.constant 10 : index
      %c1_155 = arith.constant 1 : index
      %c0_156 = arith.constant 0 : index
      %152 = vector.load %arg8[%c10, %c1_155, %c0_156] : memref<12x18x4xbf16, #tpu.memory_space<vmem>>, vector<2x16x4xbf16>
      tpu.vector_store %arg8[%c10, %c1_155, %c0_156], %151 {strides = array<i32>} : memref<12x18x4xbf16, #tpu.memory_space<vmem>>, vector<2x16x4xbf16>,
    } else {
    }
    %c0_11 = arith.constant 0 : index
    %c0_12 = arith.constant 0 : index
    %c0_13 = arith.constant 0 : index
    %c0_14 = arith.constant 0 : index
    %16 = vector.load %arg2[%c0_11, %c0_12, %c0_13, %c0_14] : memref<1x8x16x4xf32, #tpu.memory_space<vmem>>, vector<1x8x16x4xf32>
    %17 = vector.shape_cast %16 : vector<1x8x16x4xf32> to vector<8x16x4xf32>
    %18 = arith.truncf %17 : vector<8x16x4xf32> to vector<8x16x4xbf16>
    %c2 = arith.constant 2 : index
    %c1 = arith.constant 1 : index
    %c0_15 = arith.constant 0 : index
    %19 = vector.load %arg8[%c2, %c1, %c0_15] : memref<12x18x4xbf16, #tpu.memory_space<vmem>>, vector<8x16x4xbf16>
    tpu.vector_store %arg8[%c2, %c1, %c0_15], %18 {strides = array<i32>} : memref<12x18x4xbf16, #tpu.memory_space<vmem>>, vector<8x16x4xbf16>,
    %cst_16 = arith.constant 0.000000e+00 : f32
    %20 = vector.broadcast %cst_16 : f32 to vector<160x4xf32>
    %c0_17 = arith.constant 0 : index
    %c0_18 = arith.constant 0 : index
    %c0_19 = arith.constant 0 : index
    %21 = vector.load %arg8[%c0_17, %c0_18, %c0_19] : memref<12x18x4xbf16, #tpu.memory_space<vmem>>, vector<10x16x4xbf16>
    %22 = vector.shape_cast %21 : vector<10x16x4xbf16> to vector<160x4xbf16>
    %c0_20 = arith.constant 0 : index
    %c0_21 = arith.constant 0 : index
    %c0_22 = arith.constant 0 : index
    %23 = vector.load %arg5[%c0_20, %c0_21, %c0_22] : memref<9x4x4xbf16, #tpu.memory_space<vmem>>, vector<1x4x4xbf16>
    %24 = vector.shape_cast %23 : vector<1x4x4xbf16> to vector<4x4xbf16>
    %cst_23 = arith.constant dense<0.000000e+00> : vector<160x4xf32>
    %25 = tpu.matmul %22, %24, %cst_23 {dimension_numbers = #tpu.dot_dimension_numbers<[1], [0], [0], [1], [0, 0, 1, 1], [], []>} : vector<160x4xbf16>, vector<4x4xbf16>, vector<160x4xf32> -> vector<160x4xf32>
    %26 = arith.addf %20, %25 : vector<160x4xf32>
    %c0_24 = arith.constant 0 : index
    %c1_25 = arith.constant 1 : index
    %c0_26 = arith.constant 0 : index
    %27 = vector.load %arg8[%c0_24, %c1_25, %c0_26] : memref<12x18x4xbf16, #tpu.memory_space<vmem>>, vector<10x16x4xbf16>
    %28 = vector.shape_cast %27 : vector<10x16x4xbf16> to vector<160x4xbf16>
    %c1_27 = arith.constant 1 : index
    %c0_28 = arith.constant 0 : index
    %c0_29 = arith.constant 0 : index
    %29 = vector.load %arg5[%c1_27, %c0_28, %c0_29] : memref<9x4x4xbf16, #tpu.memory_space<vmem>>, vector<1x4x4xbf16>
    %30 = vector.shape_cast %29 : vector<1x4x4xbf16> to vector<4x4xbf16>
    %cst_30 = arith.constant dense<0.000000e+00> : vector<160x4xf32>
    %31 = tpu.matmul %28, %30, %cst_30 {dimension_numbers = #tpu.dot_dimension_numbers<[1], [0], [0], [1], [0, 0, 1, 1], [], []>} : vector<160x4xbf16>, vector<4x4xbf16>, vector<160x4xf32> -> vector<160x4xf32>
    %32 = arith.addf %26, %31 : vector<160x4xf32>
    %c0_31 = arith.constant 0 : index
    %c2_32 = arith.constant 2 : index
    %c0_33 = arith.constant 0 : index
    %33 = vector.load %arg8[%c0_31, %c2_32, %c0_33] : memref<12x18x4xbf16, #tpu.memory_space<vmem>>, vector<10x16x4xbf16>
    %34 = vector.shape_cast %33 : vector<10x16x4xbf16> to vector<160x4xbf16>
    %c2_34 = arith.constant 2 : index
    %c0_35 = arith.constant 0 : index
    %c0_36 = arith.constant 0 : index
    %35 = vector.load %arg5[%c2_34, %c0_35, %c0_36] : memref<9x4x4xbf16, #tpu.memory_space<vmem>>, vector<1x4x4xbf16>
    %36 = vector.shape_cast %35 : vector<1x4x4xbf16> to vector<4x4xbf16>
    %cst_37 = arith.constant dense<0.000000e+00> : vector<160x4xf32>
    %37 = tpu.matmul %34, %36, %cst_37 {dimension_numbers = #tpu.dot_dimension_numbers<[1], [0], [0], [1], [0, 0, 1, 1], [], []>} : vector<160x4xbf16>, vector<4x4xbf16>, vector<160x4xf32> -> vector<160x4xf32>
    %38 = arith.addf %32, %37 : vector<160x4xf32>
    %c1_38 = arith.constant 1 : index
    %c0_39 = arith.constant 0 : index
    %c0_40 = arith.constant 0 : index
    %39 = vector.load %arg8[%c1_38, %c0_39, %c0_40] : memref<12x18x4xbf16, #tpu.memory_space<vmem>>, vector<10x16x4xbf16>
    %40 = vector.shape_cast %39 : vector<10x16x4xbf16> to vector<160x4xbf16>
    %c3 = arith.constant 3 : index
    %c0_41 = arith.constant 0 : index
    %c0_42 = arith.constant 0 : index
    %41 = vector.load %arg5[%c3, %c0_41, %c0_42] : memref<9x4x4xbf16, #tpu.memory_space<vmem>>, vector<1x4x4xbf16>
    %42 = vector.shape_cast %41 : vector<1x4x4xbf16> to vector<4x4xbf16>
    %cst_43 = arith.constant dense<0.000000e+00> : vector<160x4xf32>
    %43 = tpu.matmul %40, %42, %cst_43 {dimension_numbers = #tpu.dot_dimension_numbers<[1], [0], [0], [1], [0, 0, 1, 1], [], []>} : vector<160x4xbf16>, vector<4x4xbf16>, vector<160x4xf32> -> vector<160x4xf32>
    %44 = arith.addf %38, %43 : vector<160x4xf32>
    %c1_44 = arith.constant 1 : index
    %c1_45 = arith.constant 1 : index
    %c0_46 = arith.constant 0 : index
    %45 = vector.load %arg8[%c1_44, %c1_45, %c0_46] : memref<12x18x4xbf16, #tpu.memory_space<vmem>>, vector<10x16x4xbf16>
    %46 = vector.shape_cast %45 : vector<10x16x4xbf16> to vector<160x4xbf16>
    %c4 = arith.constant 4 : index
    %c0_47 = arith.constant 0 : index
    %c0_48 = arith.constant 0 : index
    %47 = vector.load %arg5[%c4, %c0_47, %c0_48] : memref<9x4x4xbf16, #tpu.memory_space<vmem>>, vector<1x4x4xbf16>
    %48 = vector.shape_cast %47 : vector<1x4x4xbf16> to vector<4x4xbf16>
    %cst_49 = arith.constant dense<0.000000e+00> : vector<160x4xf32>
    %49 = tpu.matmul %46, %48, %cst_49 {dimension_numbers = #tpu.dot_dimension_numbers<[1], [0], [0], [1], [0, 0, 1, 1], [], []>} : vector<160x4xbf16>, vector<4x4xbf16>, vector<160x4xf32> -> vector<160x4xf32>
    %50 = arith.addf %44, %49 : vector<160x4xf32>
    %c1_50 = arith.constant 1 : index
    %c2_51 = arith.constant 2 : index
    %c0_52 = arith.constant 0 : index
    %51 = vector.load %arg8[%c1_50, %c2_51, %c0_52] : memref<12x18x4xbf16, #tpu.memory_space<vmem>>, vector<10x16x4xbf16>
    %52 = vector.shape_cast %51 : vector<10x16x4xbf16> to vector<160x4xbf16>
    %c5 = arith.constant 5 : index
    %c0_53 = arith.constant 0 : index
    %c0_54 = arith.constant 0 : index
    %53 = vector.load %arg5[%c5, %c0_53, %c0_54] : memref<9x4x4xbf16, #tpu.memory_space<vmem>>, vector<1x4x4xbf16>
    %54 = vector.shape_cast %53 : vector<1x4x4xbf16> to vector<4x4xbf16>
    %cst_55 = arith.constant dense<0.000000e+00> : vector<160x4xf32>
    %55 = tpu.matmul %52, %54, %cst_55 {dimension_numbers = #tpu.dot_dimension_numbers<[1], [0], [0], [1], [0, 0, 1, 1], [], []>} : vector<160x4xbf16>, vector<4x4xbf16>, vector<160x4xf32> -> vector<160x4xf32>
    %56 = arith.addf %50, %55 : vector<160x4xf32>
    %c2_56 = arith.constant 2 : index
    %c0_57 = arith.constant 0 : index
    %c0_58 = arith.constant 0 : index
    %57 = vector.load %arg8[%c2_56, %c0_57, %c0_58] : memref<12x18x4xbf16, #tpu.memory_space<vmem>>, vector<10x16x4xbf16>
    %58 = vector.shape_cast %57 : vector<10x16x4xbf16> to vector<160x4xbf16>
    %c6 = arith.constant 6 : index
    %c0_59 = arith.constant 0 : index
    %c0_60 = arith.constant 0 : index
    %59 = vector.load %arg5[%c6, %c0_59, %c0_60] : memref<9x4x4xbf16, #tpu.memory_space<vmem>>, vector<1x4x4xbf16>
    %60 = vector.shape_cast %59 : vector<1x4x4xbf16> to vector<4x4xbf16>
    %cst_61 = arith.constant dense<0.000000e+00> : vector<160x4xf32>
    %61 = tpu.matmul %58, %60, %cst_61 {dimension_numbers = #tpu.dot_dimension_numbers<[1], [0], [0], [1], [0, 0, 1, 1], [], []>} : vector<160x4xbf16>, vector<4x4xbf16>, vector<160x4xf32> -> vector<160x4xf32>
    %62 = arith.addf %56, %61 : vector<160x4xf32>
    %c2_62 = arith.constant 2 : index
    %c1_63 = arith.constant 1 : index
    %c0_64 = arith.constant 0 : index
    %63 = vector.load %arg8[%c2_62, %c1_63, %c0_64] : memref<12x18x4xbf16, #tpu.memory_space<vmem>>, vector<10x16x4xbf16>
    %64 = vector.shape_cast %63 : vector<10x16x4xbf16> to vector<160x4xbf16>
    %c7 = arith.constant 7 : index
    %c0_65 = arith.constant 0 : index
    %c0_66 = arith.constant 0 : index
    %65 = vector.load %arg5[%c7, %c0_65, %c0_66] : memref<9x4x4xbf16, #tpu.memory_space<vmem>>, vector<1x4x4xbf16>
    %66 = vector.shape_cast %65 : vector<1x4x4xbf16> to vector<4x4xbf16>
    %cst_67 = arith.constant dense<0.000000e+00> : vector<160x4xf32>
    %67 = tpu.matmul %64, %66, %cst_67 {dimension_numbers = #tpu.dot_dimension_numbers<[1], [0], [0], [1], [0, 0, 1, 1], [], []>} : vector<160x4xbf16>, vector<4x4xbf16>, vector<160x4xf32> -> vector<160x4xf32>
    %68 = arith.addf %62, %67 : vector<160x4xf32>
    %c2_68 = arith.constant 2 : index
    %c2_69 = arith.constant 2 : index
    %c0_70 = arith.constant 0 : index
    %69 = vector.load %arg8[%c2_68, %c2_69, %c0_70] : memref<12x18x4xbf16, #tpu.memory_space<vmem>>, vector<10x16x4xbf16>
    %70 = vector.shape_cast %69 : vector<10x16x4xbf16> to vector<160x4xbf16>
    %c8 = arith.constant 8 : index
    %c0_71 = arith.constant 0 : index
    %c0_72 = arith.constant 0 : index
    %71 = vector.load %arg5[%c8, %c0_71, %c0_72] : memref<9x4x4xbf16, #tpu.memory_space<vmem>>, vector<1x4x4xbf16>
    %72 = vector.shape_cast %71 : vector<1x4x4xbf16> to vector<4x4xbf16>
    %cst_73 = arith.constant dense<0.000000e+00> : vector<160x4xf32>
    %73 = tpu.matmul %70, %72, %cst_73 {dimension_numbers = #tpu.dot_dimension_numbers<[1], [0], [0], [1], [0, 0, 1, 1], [], []>} : vector<160x4xbf16>, vector<4x4xbf16>, vector<160x4xf32> -> vector<160x4xf32>
    %74 = arith.addf %68, %73 : vector<160x4xf32>
    %cst_74 = arith.constant 2.000000e-01 : f32
    %75 = vector.broadcast %cst_74 : f32 to vector<160x4xf32>
    %76 = arith.mulf %75, %74 : vector<160x4xf32>
    %77 = arith.maximumf %74, %76 : vector<160x4xf32>
    %78 = vector.shape_cast %77 : vector<160x4xf32> to vector<10x16x4xf32>
    %79 = arith.truncf %78 : vector<10x16x4xf32> to vector<10x16x4xbf16>
    %c1_75 = arith.constant 1 : index
    %c1_76 = arith.constant 1 : index
    %c0_77 = arith.constant 0 : index
    %80 = vector.load %arg8[%c1_75, %c1_76, %c0_77] : memref<12x18x4xbf16, #tpu.memory_space<vmem>>, vector<10x16x4xbf16>
    tpu.vector_store %arg8[%c1_75, %c1_76, %c0_77], %79 {strides = array<i32>} : memref<12x18x4xbf16, #tpu.memory_space<vmem>>, vector<10x16x4xbf16>,
    %cst_78 = arith.constant 0.000000e+00 : bf16
    %81 = vector.broadcast %cst_78 : bf16 to vector<1x18x4xbf16>
    %c0_i32_79 = arith.constant 0 : i32
    %82 = arith.cmpi eq, %arg1, %c0_i32_79 : i32
    %83 = arith.extui %82 : i1 to i32
    %c0_i32_80 = arith.constant 0 : i32
    %84 = arith.cmpi ne, %83, %c0_i32_80 : i32
    scf.if %84 {
      %c1_151 = arith.constant 1 : index
      %c0_152 = arith.constant 0 : index
      %c0_153 = arith.constant 0 : index
      %149 = vector.load %arg8[%c1_151, %c0_152, %c0_153] : memref<12x18x4xbf16, #tpu.memory_space<vmem>>, vector<1x18x4xbf16>
      tpu.vector_store %arg8[%c1_151, %c0_152, %c0_153], %81 {strides = array<i32>} : memref<12x18x4xbf16, #tpu.memory_space<vmem>>, vector<1x18x4xbf16>,
    } else {
    }
    %c1_i32_81 = arith.constant 1 : i32
    %85 = arith.cmpi eq, %arg1, %c1_i32_81 : i32
    %86 = arith.extui %85 : i1 to i32
    %c0_i32_82 = arith.constant 0 : i32
    %87 = arith.cmpi ne, %86, %c0_i32_82 : i32
    scf.if %87 {
      %c10 = arith.constant 10 : index
      %c0_151 = arith.constant 0 : index
      %c0_152 = arith.constant 0 : index
      %149 = vector.load %arg8[%c10, %c0_151, %c0_152] : memref<12x18x4xbf16, #tpu.memory_space<vmem>>, vector<1x18x4xbf16>
      tpu.vector_store %arg8[%c10, %c0_151, %c0_152], %81 {strides = array<i32>} : memref<12x18x4xbf16, #tpu.memory_space<vmem>>, vector<1x18x4xbf16>,
    } else {
    }
    %cst_83 = arith.constant 0.000000e+00 : f32
    %88 = vector.broadcast %cst_83 : f32 to vector<128x4xf32>
    %c1_84 = arith.constant 1 : index
    %c0_85 = arith.constant 0 : index
    %c0_86 = arith.constant 0 : index
    %89 = vector.load %arg8[%c1_84, %c0_85, %c0_86] : memref<12x18x4xbf16, #tpu.memory_space<vmem>>, vector<8x16x4xbf16>
    %90 = vector.shape_cast %89 : vector<8x16x4xbf16> to vector<128x4xbf16>
    %c0_87 = arith.constant 0 : index
    %c0_88 = arith.constant 0 : index
    %c0_89 = arith.constant 0 : index
    %91 = vector.load %arg6[%c0_87, %c0_88, %c0_89] : memref<9x4x4xbf16, #tpu.memory_space<vmem>>, vector<1x4x4xbf16>
    %92 = vector.shape_cast %91 : vector<1x4x4xbf16> to vector<4x4xbf16>
    %cst_90 = arith.constant dense<0.000000e+00> : vector<128x4xf32>
    %93 = tpu.matmul %90, %92, %cst_90 {dimension_numbers = #tpu.dot_dimension_numbers<[1], [0], [0], [1], [0, 0, 1, 1], [], []>} : vector<128x4xbf16>, vector<4x4xbf16>, vector<128x4xf32> -> vector<128x4xf32>
    %94 = arith.addf %88, %93 : vector<128x4xf32>
    %c1_91 = arith.constant 1 : index
    %c1_92 = arith.constant 1 : index
    %c0_93 = arith.constant 0 : index
    %95 = vector.load %arg8[%c1_91, %c1_92, %c0_93] : memref<12x18x4xbf16, #tpu.memory_space<vmem>>, vector<8x16x4xbf16>
    %96 = vector.shape_cast %95 : vector<8x16x4xbf16> to vector<128x4xbf16>
    %c1_94 = arith.constant 1 : index
    %c0_95 = arith.constant 0 : index
    %c0_96 = arith.constant 0 : index
    %97 = vector.load %arg6[%c1_94, %c0_95, %c0_96] : memref<9x4x4xbf16, #tpu.memory_space<vmem>>, vector<1x4x4xbf16>
    %98 = vector.shape_cast %97 : vector<1x4x4xbf16> to vector<4x4xbf16>
    %cst_97 = arith.constant dense<0.000000e+00> : vector<128x4xf32>
    %99 = tpu.matmul %96, %98, %cst_97 {dimension_numbers = #tpu.dot_dimension_numbers<[1], [0], [0], [1], [0, 0, 1, 1], [], []>} : vector<128x4xbf16>, vector<4x4xbf16>, vector<128x4xf32> -> vector<128x4xf32>
    %100 = arith.addf %94, %99 : vector<128x4xf32>
    %c1_98 = arith.constant 1 : index
    %c2_99 = arith.constant 2 : index
    %c0_100 = arith.constant 0 : index
    %101 = vector.load %arg8[%c1_98, %c2_99, %c0_100] : memref<12x18x4xbf16, #tpu.memory_space<vmem>>, vector<8x16x4xbf16>
    %102 = vector.shape_cast %101 : vector<8x16x4xbf16> to vector<128x4xbf16>
    %c2_101 = arith.constant 2 : index
    %c0_102 = arith.constant 0 : index
    %c0_103 = arith.constant 0 : index
    %103 = vector.load %arg6[%c2_101, %c0_102, %c0_103] : memref<9x4x4xbf16, #tpu.memory_space<vmem>>, vector<1x4x4xbf16>
    %104 = vector.shape_cast %103 : vector<1x4x4xbf16> to vector<4x4xbf16>
    %cst_104 = arith.constant dense<0.000000e+00> : vector<128x4xf32>
    %105 = tpu.matmul %102, %104, %cst_104 {dimension_numbers = #tpu.dot_dimension_numbers<[1], [0], [0], [1], [0, 0, 1, 1], [], []>} : vector<128x4xbf16>, vector<4x4xbf16>, vector<128x4xf32> -> vector<128x4xf32>
    %106 = arith.addf %100, %105 : vector<128x4xf32>
    %c2_105 = arith.constant 2 : index
    %c0_106 = arith.constant 0 : index
    %c0_107 = arith.constant 0 : index
    %107 = vector.load %arg8[%c2_105, %c0_106, %c0_107] : memref<12x18x4xbf16, #tpu.memory_space<vmem>>, vector<8x16x4xbf16>
    %108 = vector.shape_cast %107 : vector<8x16x4xbf16> to vector<128x4xbf16>
    %c3_108 = arith.constant 3 : index
    %c0_109 = arith.constant 0 : index
    %c0_110 = arith.constant 0 : index
    %109 = vector.load %arg6[%c3_108, %c0_109, %c0_110] : memref<9x4x4xbf16, #tpu.memory_space<vmem>>, vector<1x4x4xbf16>
    %110 = vector.shape_cast %109 : vector<1x4x4xbf16> to vector<4x4xbf16>
    %cst_111 = arith.constant dense<0.000000e+00> : vector<128x4xf32>
    %111 = tpu.matmul %108, %110, %cst_111 {dimension_numbers = #tpu.dot_dimension_numbers<[1], [0], [0], [1], [0, 0, 1, 1], [], []>} : vector<128x4xbf16>, vector<4x4xbf16>, vector<128x4xf32> -> vector<128x4xf32>
    %112 = arith.addf %106, %111 : vector<128x4xf32>
    %c2_112 = arith.constant 2 : index
    %c1_113 = arith.constant 1 : index
    %c0_114 = arith.constant 0 : index
    %113 = vector.load %arg8[%c2_112, %c1_113, %c0_114] : memref<12x18x4xbf16, #tpu.memory_space<vmem>>, vector<8x16x4xbf16>
    %114 = vector.shape_cast %113 : vector<8x16x4xbf16> to vector<128x4xbf16>
    %c4_115 = arith.constant 4 : index
    %c0_116 = arith.constant 0 : index
    %c0_117 = arith.constant 0 : index
    %115 = vector.load %arg6[%c4_115, %c0_116, %c0_117] : memref<9x4x4xbf16, #tpu.memory_space<vmem>>, vector<1x4x4xbf16>
    %116 = vector.shape_cast %115 : vector<1x4x4xbf16> to vector<4x4xbf16>
    %cst_118 = arith.constant dense<0.000000e+00> : vector<128x4xf32>
    %117 = tpu.matmul %114, %116, %cst_118 {dimension_numbers = #tpu.dot_dimension_numbers<[1], [0], [0], [1], [0, 0, 1, 1], [], []>} : vector<128x4xbf16>, vector<4x4xbf16>, vector<128x4xf32> -> vector<128x4xf32>
    %118 = arith.addf %112, %117 : vector<128x4xf32>
    %c2_119 = arith.constant 2 : index
    %c2_120 = arith.constant 2 : index
    %c0_121 = arith.constant 0 : index
    %119 = vector.load %arg8[%c2_119, %c2_120, %c0_121] : memref<12x18x4xbf16, #tpu.memory_space<vmem>>, vector<8x16x4xbf16>
    %120 = vector.shape_cast %119 : vector<8x16x4xbf16> to vector<128x4xbf16>
    %c5_122 = arith.constant 5 : index
    %c0_123 = arith.constant 0 : index
    %c0_124 = arith.constant 0 : index
    %121 = vector.load %arg6[%c5_122, %c0_123, %c0_124] : memref<9x4x4xbf16, #tpu.memory_space<vmem>>, vector<1x4x4xbf16>
    %122 = vector.shape_cast %121 : vector<1x4x4xbf16> to vector<4x4xbf16>
    %cst_125 = arith.constant dense<0.000000e+00> : vector<128x4xf32>
    %123 = tpu.matmul %120, %122, %cst_125 {dimension_numbers = #tpu.dot_dimension_numbers<[1], [0], [0], [1], [0, 0, 1, 1], [], []>} : vector<128x4xbf16>, vector<4x4xbf16>, vector<128x4xf32> -> vector<128x4xf32>
    %124 = arith.addf %118, %123 : vector<128x4xf32>
    %c3_126 = arith.constant 3 : index
    %c0_127 = arith.constant 0 : index
    %c0_128 = arith.constant 0 : index
    %125 = vector.load %arg8[%c3_126, %c0_127, %c0_128] : memref<12x18x4xbf16, #tpu.memory_space<vmem>>, vector<8x16x4xbf16>
    %126 = vector.shape_cast %125 : vector<8x16x4xbf16> to vector<128x4xbf16>
    %c6_129 = arith.constant 6 : index
    %c0_130 = arith.constant 0 : index
    %c0_131 = arith.constant 0 : index
    %127 = vector.load %arg6[%c6_129, %c0_130, %c0_131] : memref<9x4x4xbf16, #tpu.memory_space<vmem>>, vector<1x4x4xbf16>
    %128 = vector.shape_cast %127 : vector<1x4x4xbf16> to vector<4x4xbf16>
    %cst_132 = arith.constant dense<0.000000e+00> : vector<128x4xf32>
    %129 = tpu.matmul %126, %128, %cst_132 {dimension_numbers = #tpu.dot_dimension_numbers<[1], [0], [0], [1], [0, 0, 1, 1], [], []>} : vector<128x4xbf16>, vector<4x4xbf16>, vector<128x4xf32> -> vector<128x4xf32>
    %130 = arith.addf %124, %129 : vector<128x4xf32>
    %c3_133 = arith.constant 3 : index
    %c1_134 = arith.constant 1 : index
    %c0_135 = arith.constant 0 : index
    %131 = vector.load %arg8[%c3_133, %c1_134, %c0_135] : memref<12x18x4xbf16, #tpu.memory_space<vmem>>, vector<8x16x4xbf16>
    %132 = vector.shape_cast %131 : vector<8x16x4xbf16> to vector<128x4xbf16>
    %c7_136 = arith.constant 7 : index
    %c0_137 = arith.constant 0 : index
    %c0_138 = arith.constant 0 : index
    %133 = vector.load %arg6[%c7_136, %c0_137, %c0_138] : memref<9x4x4xbf16, #tpu.memory_space<vmem>>, vector<1x4x4xbf16>
    %134 = vector.shape_cast %133 : vector<1x4x4xbf16> to vector<4x4xbf16>
    %cst_139 = arith.constant dense<0.000000e+00> : vector<128x4xf32>
    %135 = tpu.matmul %132, %134, %cst_139 {dimension_numbers = #tpu.dot_dimension_numbers<[1], [0], [0], [1], [0, 0, 1, 1], [], []>} : vector<128x4xbf16>, vector<4x4xbf16>, vector<128x4xf32> -> vector<128x4xf32>
    %136 = arith.addf %130, %135 : vector<128x4xf32>
    %c3_140 = arith.constant 3 : index
    %c2_141 = arith.constant 2 : index
    %c0_142 = arith.constant 0 : index
    %137 = vector.load %arg8[%c3_140, %c2_141, %c0_142] : memref<12x18x4xbf16, #tpu.memory_space<vmem>>, vector<8x16x4xbf16>
    %138 = vector.shape_cast %137 : vector<8x16x4xbf16> to vector<128x4xbf16>
    %c8_143 = arith.constant 8 : index
    %c0_144 = arith.constant 0 : index
    %c0_145 = arith.constant 0 : index
    %139 = vector.load %arg6[%c8_143, %c0_144, %c0_145] : memref<9x4x4xbf16, #tpu.memory_space<vmem>>, vector<1x4x4xbf16>
    %140 = vector.shape_cast %139 : vector<1x4x4xbf16> to vector<4x4xbf16>
    %cst_146 = arith.constant dense<0.000000e+00> : vector<128x4xf32>
    %141 = tpu.matmul %138, %140, %cst_146 {dimension_numbers = #tpu.dot_dimension_numbers<[1], [0], [0], [1], [0, 0, 1, 1], [], []>} : vector<128x4xbf16>, vector<4x4xbf16>, vector<128x4xf32> -> vector<128x4xf32>
    %142 = arith.addf %136, %141 : vector<128x4xf32>
    %cst_147 = arith.constant 2.000000e-01 : f32
    %143 = vector.broadcast %cst_147 : f32 to vector<128x4xf32>
    %144 = arith.mulf %143, %142 : vector<128x4xf32>
    %145 = arith.maximumf %142, %144 : vector<128x4xf32>
    %146 = vector.shape_cast %145 : vector<128x4xf32> to vector<1x128x4xf32>
    %147 = arith.truncf %146 : vector<1x128x4xf32> to vector<1x128x4xbf16>
    %c0_148 = arith.constant 0 : index
    %c0_149 = arith.constant 0 : index
    %c0_150 = arith.constant 0 : index
    %148 = vector.load %arg7[%c0_148, %c0_149, %c0_150] : memref<1x128x4xbf16, #tpu.memory_space<vmem>>, vector<1x128x4xbf16>
    tpu.vector_store %arg7[%c0_148, %c0_149, %c0_150], %147 {strides = array<i32>} : memref<1x128x4xbf16, #tpu.memory_space<vmem>>, vector<1x128x4xbf16>,
    return
  }
  func.func @transform_0(%arg0: i32, %arg1: i32) -> (i32, i32, i32, i32) {
    %c0_i32 = arith.constant 0 : i32
    %c0_i32_0 = arith.constant 0 : i32
    %c0_i32_1 = arith.constant 0 : i32
    return %arg0, %arg1, %c0_i32, %c0_i32_0 : i32, i32, i32, i32
  }
  func.func @transform_1(%arg0: i32, %arg1: i32) -> (i32, i32, i32, i32) {
    %c4_i32 = arith.constant 4 : i32
    %0 = arith.muli %arg1, %c4_i32 : i32
    %c1_i32 = arith.constant 1 : i32
    %1 = arith.subi %0, %c1_i32 : i32
    %c0_i32 = arith.constant 0 : i32
    %2 = arith.maxsi %1, %c0_i32 : i32
    %c0_i32_0 = arith.constant 0 : i32
    %c0_i32_1 = arith.constant 0 : i32
    %c0_i32_2 = arith.constant 0 : i32
    return %arg0, %2, %c0_i32_0, %c0_i32_1 : i32, i32, i32, i32
  }
  func.func @transform_2(%arg0: i32, %arg1: i32) -> (i32, i32, i32, i32) {
    %c1_i32 = arith.constant 1 : i32
    %0 = arith.addi %arg1, %c1_i32 : i32
    %c4_i32 = arith.constant 4 : i32
    %1 = arith.muli %0, %c4_i32 : i32
    %c7_i32 = arith.constant 7 : i32
    %2 = arith.minsi %1, %c7_i32 : i32
    %c0_i32 = arith.constant 0 : i32
    %c0_i32_0 = arith.constant 0 : i32
    %c0_i32_1 = arith.constant 0 : i32
    return %arg0, %2, %c0_i32, %c0_i32_0 : i32, i32, i32, i32
  }
  func.func @transform_3(%arg0: i32, %arg1: i32) -> (i32, i32, i32) {
    %c0_i32 = arith.constant 0 : i32
    %c0_i32_0 = arith.constant 0 : i32
    %c0_i32_1 = arith.constant 0 : i32
    %c0_i32_2 = arith.constant 0 : i32
    return %c0_i32, %c0_i32_0, %c0_i32_1 : i32, i32, i32
  }
  func.func @transform_4(%arg0: i32, %arg1: i32) -> (i32, i32, i32) {
    %c0_i32 = arith.constant 0 : i32
    %c0_i32_0 = arith.constant 0 : i32
    %c0_i32_1 = arith.constant 0 : i32
    %c0_i32_2 = arith.constant 0 : i32
    return %c0_i32, %c0_i32_0, %c0_i32_1 : i32, i32, i32
  }
  func.func @transform_5(%arg0: i32, %arg1: i32) -> (i32, i32, i32) {
    %c0_i32 = arith.constant 0 : i32
    %c0_i32_0 = arith.constant 0 : i32
    return %arg0, %arg1, %c0_i32 : i32, i32, i32
  }
}

</mosaic_0001>

<llo_original>
// kernel: tpu_custom_call.1
$region0: #{tpu_custom_call.1}
  #allocation0 [shape = 'u32[]', space=smem, size = 0x4, offset = 0x4, fixed_abs, tag = 'smem constant byte address 0x4 - core index']
  #allocation1 [shape = 'u32[144,128]{1,0:T(1,128)}', space=vmem, size = 0x12000, scoped, tag = 'internal scratch']
  #allocation2 [shape = 'bf16[12,18,4]{2,1,0:T(8,128)(2,1)}', space=vmem, size = 0x12000, scoped, tag = 'scratch operand']
  %s0 = inlined_call_operand.vmem [shape: f32[2,16,16,4], index: 0, kind: input, shape index: {}]
  %s1 = inlined_call_operand.vmem [shape: f32[2,16,16,4], index: 1, kind: input, shape index: {}]
  %s2 = inlined_call_operand.vmem [shape: f32[2,16,16,4], index: 2, kind: input, shape index: {}]
  %s3 = inlined_call_operand.vmem [shape: bf16[9,4,4], index: 3, kind: input, shape index: {}]
  %s4 = inlined_call_operand.vmem [shape: bf16[9,4,4], index: 4, kind: input, shape index: {}]
  %s5 = inlined_call_operand.vmem [shape: bf16[2,256,4], index: 5, kind: output, shape index: {}]
  %s6 = sld [smem:[#allocation0]]
  $region77: #{tpu_custom_call.1} parent=0
    _
  %s8 = ssub.s32 1, %s6
  %s9 = scalar_select 0, %s8, %s6
  loop: start=0, step=1, limit=6
  $region2: #{tpu_custom_call.1} parent=0 // loop_pre_header
    _
  $region3: #{tpu_custom_call.1} parent=0 // loop_header
    %s11 = sphi 0, %s15
    %p12 = scmp.ge.s32.totalorder %s11, 6
    %s18 = sphi 0, %s30
    %s19 = sphi 0, %s26
    %s20 = sphi 0, %s18
    %s21 = sphi 0, %s19
    %s22 = sphi 0, %s20
    %s23 = sphi 0, %s21
    %s35 = sphi 0, %s37
    %s38 = sphi 0, %s35
    %s39 = sphi 0, %s38
    %s55 = sphi 0, %s39
    %s71 = sphi 0, %s73
    %s74 = sphi 0, %s71
    %s75 = sphi 0, %s74
    %s91 = sphi 0, %s75
    %s107 = sphi 0, %s109
    %s110 = sphi 0, %s107
    %s111 = sphi 0, %s110
    %s127 = sphi 0, %s111
    %s131 = sphi 0, %s131
    %s133 = sphi 0, %s131
    %s134 = sphi 0, %s133
    %s148 = sphi 0, %s134
    %s152 = sphi 0, %s152
    %s154 = sphi 0, %s152
    %s155 = sphi 0, %s154
    %s169 = sphi 0, %s155
    %s177 = sphi 0, %s179
    %s180 = sphi 0, %s177
    %s181 = sphi 0, %s180
    %s197 = sphi 0, %s181
  $region4: #{tpu_custom_call.1} parent=0 // loop_header_branch
    %14 = sbr.rel (%p12) target = $region8
  $region5: #{tpu_custom_call.1} parent=0 // loop_body
    %s16 = ssub.s32 %s11, 1
    %s17 = ssub.s32 %s11, 2
    %s24 = sadd.s32 1, %s19
    %p25 = scmp.ge.s32.totalorder %s24, 2
    %s26 = scalar_select %p25, 0, %s24
    %s27 = sadd.s32 1, %s18
    %s28 = scalar_select %p25, %s27, %s18
    %p29 = scmp.ge.s32.totalorder %s28, 2
    %s30 = scalar_select %p29, 0, %s28
    %s31 = ssub.s32 %s18, %s30
    %s32 = ssub.s32 %s19, %s26
    %s33 = sor.u32 %s31, %s32
    %p34 = scmp.eq.s32.totalorder %s33, 0
    %s36 = sadd.s32 %s35, 1
    %s37 = scalar_select %p34, %s35, %s36
    %p40 = pneg %p34
    %p41 = scmp.eq.s32.totalorder %s11, 3
    %p42 = por %p40, %p41
    %p43 = scmp.ne.s32.totalorder %s35, %s38
    %p44 = scmp.eq.s32.totalorder %s11, 0
    %p45 = por %p43, %p44
    %p46 = scmp.ne.s32.totalorder %s35, %s38
    %p47 = scmp.eq.s32.totalorder %s16, 3
    %p48 = por %p46, %p47
    %p49 = scmp.ne.s32.totalorder %s38, %s39
    %p50 = scmp.eq.s32.totalorder %s16, 0
    %p51 = por %p49, %p50
    %p52 = scmp.ne.s32.totalorder %s38, %s39
    %p53 = scmp.eq.s32.totalorder %s17, 3
    %p54 = por %p52, %p53
    %p56 = scmp.ne.s32.totalorder %s39, %s55
    %p57 = scmp.eq.s32.totalorder %s17, 0
    %p58 = por %p56, %p57
    %s59 = smul.u32 %s19, 4
    %s60 = ssub.s32 %s59, 1
    %p61 = scmp.gt.s32.totalorder %s60, 0
    %s62 = scalar_select %p61, %s60, 0
    %s63 = smul.u32 %s26, 4
    %s64 = ssub.s32 %s63, 1
    %p65 = scmp.gt.s32.totalorder %s64, 0
    %s66 = scalar_select %p65, %s64, 0
    %s67 = ssub.s32 %s18, %s30
    %s68 = ssub.s32 %s62, %s66
    %s69 = sor.u32 %s67, %s68
    %p70 = scmp.eq.s32.totalorder %s69, 0
    %s72 = sadd.s32 %s71, 1
    %s73 = scalar_select %p70, %s71, %s72
    %p76 = pneg %p70
    %p77 = scmp.eq.s32.totalorder %s11, 3
    %p78 = por %p76, %p77
    %p79 = scmp.ne.s32.totalorder %s71, %s74
    %p80 = scmp.eq.s32.totalorder %s11, 0
    %p81 = por %p79, %p80
    %p82 = scmp.ne.s32.totalorder %s71, %s74
    %p83 = scmp.eq.s32.totalorder %s16, 3
    %p84 = por %p82, %p83
    %p85 = scmp.ne.s32.totalorder %s74, %s75
    %p86 = scmp.eq.s32.totalorder %s16, 0
    %p87 = por %p85, %p86
    %p88 = scmp.ne.s32.totalorder %s74, %s75
    %p89 = scmp.eq.s32.totalorder %s17, 3
    %p90 = por %p88, %p89
    %p92 = scmp.ne.s32.totalorder %s75, %s91
    %p93 = scmp.eq.s32.totalorder %s17, 0
    %p94 = por %p92, %p93
    %s95 = sadd.s32 %s19, 1
    %s96 = smul.u32 %s95, 4
    %p97 = scmp.lt.s32.totalorder %s96, 7
    %s98 = scalar_select %p97, %s96, 7
    %s99 = sadd.s32 %s26, 1
    %s100 = smul.u32 %s99, 4
    %p101 = scmp.lt.s32.totalorder %s100, 7
    %s102 = scalar_select %p101, %s100, 7
    %s103 = ssub.s32 %s18, %s30
    %s104 = ssub.s32 %s98, %s102
    %s105 = sor.u32 %s103, %s104
    %p106 = scmp.eq.s32.totalorder %s105, 0
    %s108 = sadd.s32 %s107, 1
    %s109 = scalar_select %p106, %s107, %s108
    %p112 = pneg %p106
    %p113 = scmp.eq.s32.totalorder %s11, 3
    %p114 = por %p112, %p113
    %p115 = scmp.ne.s32.totalorder %s107, %s110
    %p116 = scmp.eq.s32.totalorder %s11, 0
    %p117 = por %p115, %p116
    %p118 = scmp.ne.s32.totalorder %s107, %s110
    %p119 = scmp.eq.s32.totalorder %s16, 3
    %p120 = por %p118, %p119
    %p121 = scmp.ne.s32.totalorder %s110, %s111
    %p122 = scmp.eq.s32.totalorder %s16, 0
    %p123 = por %p121, %p122
    %p124 = scmp.ne.s32.totalorder %s110, %s111
    %p125 = scmp.eq.s32.totalorder %s17, 3
    %p126 = por %p124, %p125
    %p128 = scmp.ne.s32.totalorder %s111, %s127
    %p129 = scmp.eq.s32.totalorder %s17, 0
    %p130 = por %p128, %p129
    %s132 = sadd.s32 %s131, 1
    %p135 = scmp.eq.s32.totalorder %s11, 3
    %p136 = scmp.ne.s32.totalorder %s131, %s133
    %p137 = scmp.eq.s32.totalorder %s11, 0
    %p138 = por %p136, %p137
    %p139 = scmp.ne.s32.totalorder %s131, %s133
    %p140 = scmp.eq.s32.totalorder %s16, 3
    %p141 = por %p139, %p140
    %p142 = scmp.ne.s32.totalorder %s133, %s134
    %p143 = scmp.eq.s32.totalorder %s16, 0
    %p144 = por %p142, %p143
    %p145 = scmp.ne.s32.totalorder %s133, %s134
    %p146 = scmp.eq.s32.totalorder %s17, 3
    %p147 = por %p145, %p146
    %p149 = scmp.ne.s32.totalorder %s134, %s148
    %p150 = scmp.eq.s32.totalorder %s17, 0
    %p151 = por %p149, %p150
    %s153 = sadd.s32 %s152, 1
    %p156 = scmp.eq.s32.totalorder %s11, 3
    %p157 = scmp.ne.s32.totalorder %s152, %s154
    %p158 = scmp.eq.s32.totalorder %s11, 0
    %p159 = por %p157, %p158
    %p160 = scmp.ne.s32.totalorder %s152, %s154
    %p161 = scmp.eq.s32.totalorder %s16, 3
    %p162 = por %p160, %p161
    %p163 = scmp.ne.s32.totalorder %s154, %s155
    %p164 = scmp.eq.s32.totalorder %s16, 0
    %p165 = por %p163, %p164
    %p166 = scmp.ne.s32.totalorder %s154, %s155
    %p167 = scmp.eq.s32.totalorder %s17, 3
    %p168 = por %p166, %p167
    %p170 = scmp.ne.s32.totalorder %s155, %s169
    %p171 = scmp.eq.s32.totalorder %s17, 0
    %p172 = por %p170, %p171
    %s173 = ssub.s32 %s18, %s30
    %s174 = ssub.s32 %s19, %s26
    %s175 = sor.u32 %s173, %s174
    %p176 = scmp.eq.s32.totalorder %s175, 0
    %s178 = sadd.s32 %s177, 1
    %s179 = scalar_select %p176, %s177, %s178
    %p182 = pneg %p176
    %p183 = scmp.eq.s32.totalorder %s11, 3
    %p184 = por %p182, %p183
    %p185 = scmp.ne.s32.totalorder %s177, %s180
    %p186 = scmp.eq.s32.totalorder %s11, 0
    %p187 = por %p185, %p186
    %p188 = scmp.ne.s32.totalorder %s177, %s180
    %p189 = scmp.eq.s32.totalorder %s16, 3
    %p190 = por %p188, %p189
    %p191 = scmp.ne.s32.totalorder %s180, %s181
    %p192 = scmp.eq.s32.totalorder %s16, 0
    %p193 = por %p191, %p192
    %p194 = scmp.ne.s32.totalorder %s180, %s181
    %p195 = scmp.eq.s32.totalorder %s17, 3
    %p196 = por %p194, %p195
    %p198 = scmp.ne.s32.totalorder %s181, %s197
    %p199 = scmp.eq.s32.totalorder %s17, 0
    %p200 = por %p198, %p199
    %p201 = scmp.le.s32.totalorder 1, %s11
    %p202 = scmp.lt.s32.totalorder %s11, 5
    %p203 = pnand %p201, %p202
    %p204 = pneg %p203
    // Predicated region
    $region9: #{tpu_custom_call.1} parent=5 // pred_check
      _
    $region10: #{tpu_custom_call.1} parent=5 // pred_check_branch
      %206 = sbr.rel (%p203) target = $region12
    $region11: #{tpu_custom_call.1} parent=5 // pred_region
      %s207 = ssub.s32 %s11, 1
      // Predicated region
      $region13: #{tpu_custom_call.1} parent=11 // pred_check
        %p208 = pneg %p144
      $region14: #{tpu_custom_call.1} parent=11 // pred_check_branch
        %210 = sbr.rel (%p208) target = $region16
      $region15: #{tpu_custom_call.1} parent=11 // pred_region
        _
      $region16: #{tpu_custom_call.1} parent=11 // pred_fallthru
        _
      // Predicated region
      $region17: #{tpu_custom_call.1} parent=11 // pred_check
        %p211 = pneg %p165
      $region18: #{tpu_custom_call.1} parent=11 // pred_check_branch
        %213 = sbr.rel (%p211) target = $region20
      $region19: #{tpu_custom_call.1} parent=11 // pred_region
        _
      $region20: #{tpu_custom_call.1} parent=11 // pred_fallthru
        _
    $region12: #{tpu_custom_call.1} parent=5 // pred_fallthru
      _
    %p214 = scmp.lt.s32.totalorder %s11, 4
    // Predicated region
    $region21: #{tpu_custom_call.1} parent=5 // pred_check
      %p215 = pneg %p214
    $region22: #{tpu_custom_call.1} parent=5 // pred_check_branch
      %217 = sbr.rel (%p215) target = $region24
    $region23: #{tpu_custom_call.1} parent=5 // pred_region
      // Predicated region
      $region25: #{tpu_custom_call.1} parent=23 // pred_check
        %p218 = pneg %p45
      $region26: #{tpu_custom_call.1} parent=23 // pred_check_branch
        %220 = sbr.rel (%p218) target = $region28
      $region27: #{tpu_custom_call.1} parent=23 // pred_region
        %s221 = smul.u32 8, %s19
        %p222 = scmp.lt.s32.totalorder %s18, 1
        %s223 = scalar_select %p222, %s18, 1
        %p224 = scmp.lt.s32.totalorder %s221, 15
        %s225 = scalar_select %p224, %s221, 15
        %s226 = smul.addr %s225, 2
        %s227 = smul.addr %s223, 32
        %s228 = sadd.s32 %s226, %s227
        %s229 = smul.addr %s228, 8
        %s230 = scalar_lea.vmem %s0, %s229
        %s231 = smul.u32 8, %s19
      $region28: #{tpu_custom_call.1} parent=23 // pred_fallthru
        _
      // Predicated region
      $region29: #{tpu_custom_call.1} parent=23 // pred_check
        %p232 = pneg %p81
      $region30: #{tpu_custom_call.1} parent=23 // pred_check_branch
        %234 = sbr.rel (%p232) target = $region32
      $region31: #{tpu_custom_call.1} parent=23 // pred_region
        %s235 = smul.u32 %s19, 4
        %s236 = ssub.s32 %s235, 1
        %p237 = scmp.gt.s32.totalorder %s236, 0
        %s238 = scalar_select %p237, %s236, 0
        %s239 = smul.u32 2, %s238
        %p240 = scmp.lt.s32.totalorder %s18, 1
        %s241 = scalar_select %p240, %s18, 1
        %p242 = scmp.lt.s32.totalorder %s239, 15
        %s243 = scalar_select %p242, %s239, 15
        %s244 = smul.addr %s243, 2
        %s245 = smul.addr %s241, 32
        %s246 = sadd.s32 %s244, %s245
        %s247 = smul.addr %s246, 8
        %s248 = scalar_lea.vmem %s1, %s247
        %s249 = smul.u32 %s19, 4
        %s250 = ssub.s32 %s249, 1
        %p251 = scmp.gt.s32.totalorder %s250, 0
        %s252 = scalar_select %p251, %s250, 0
        %s253 = smul.u32 2, %s252
      $region32: #{tpu_custom_call.1} parent=23 // pred_fallthru
        _
      // Predicated region
      $region33: #{tpu_custom_call.1} parent=23 // pred_check
        %p254 = pneg %p117
      $region34: #{tpu_custom_call.1} parent=23 // pred_check_branch
        %256 = sbr.rel (%p254) target = $region36
      $region35: #{tpu_custom_call.1} parent=23 // pred_region
        %s257 = sadd.s32 %s19, 1
        %s258 = smul.u32 %s257, 4
        %p259 = scmp.lt.s32.totalorder %s258, 7
        %s260 = scalar_select %p259, %s258, 7
        %s261 = smul.u32 2, %s260
        %p262 = scmp.lt.s32.totalorder %s18, 1
        %s263 = scalar_select %p262, %s18, 1
        %p264 = scmp.lt.s32.totalorder %s261, 15
        %s265 = scalar_select %p264, %s261, 15
        %s266 = smul.addr %s265, 2
        %s267 = smul.addr %s263, 32
        %s268 = sadd.s32 %s266, %s267
        %s269 = smul.addr %s268, 8
        %s270 = scalar_lea.vmem %s2, %s269
        %s271 = sadd.s32 %s19, 1
        %s272 = smul.u32 %s271, 4
        %p273 = scmp.lt.s32.totalorder %s272, 7
        %s274 = scalar_select %p273, %s272, 7
        %s275 = smul.u32 2, %s274
      $region36: #{tpu_custom_call.1} parent=23 // pred_fallthru
        _
    $region24: #{tpu_custom_call.1} parent=5 // pred_fallthru
      _
    %p276 = scmp.le.s32.totalorder 1, %s11
    %p277 = scmp.lt.s32.totalorder %s11, 5
    %p278 = pnand %p276, %p277
    %p279 = pneg %p278
    // Predicated region
    $region37: #{tpu_custom_call.1} parent=5 // pred_check
      _
    $region38: #{tpu_custom_call.1} parent=5 // pred_check_branch
      %281 = sbr.rel (%p278) target = $region40
    $region39: #{tpu_custom_call.1} parent=5 // pred_region
      %s282 = ssub.s32 %s11, 1
      %s283 = smul.u32 8, %s21
      %p284 = scmp.lt.s32.totalorder %s20, 1
      %s285 = scalar_select %p284, %s20, 1
      %p286 = scmp.lt.s32.totalorder %s283, 15
      %s287 = scalar_select %p286, %s283, 15
      %s288 = smul.addr %s287, 2
      %s289 = smul.addr %s285, 32
      %s290 = sadd.s32 %s288, %s289
      %s291 = smul.addr %s290, 8
      %s292 = scalar_lea.vmem %s0, %s291
      %p293 = pneg %p51
      %p294 = pneg %p48
      %s295 = smul.u32 %s21, 4
      %s296 = ssub.s32 %s295, 1
      %p297 = scmp.gt.s32.totalorder %s296, 0
      %s298 = scalar_select %p297, %s296, 0
      %s299 = smul.u32 2, %s298
      %p300 = scmp.lt.s32.totalorder %s20, 1
      %s301 = scalar_select %p300, %s20, 1
      %p302 = scmp.lt.s32.totalorder %s299, 15
      %s303 = scalar_select %p302, %s299, 15
      %s304 = smul.addr %s303, 2
      %s305 = smul.addr %s301, 32
      %s306 = sadd.s32 %s304, %s305
      %s307 = smul.addr %s306, 8
      %s308 = scalar_lea.vmem %s1, %s307
      %p309 = pneg %p87
      %p310 = pneg %p84
      %s311 = sadd.s32 %s21, 1
      %s312 = smul.u32 %s311, 4
      %p313 = scmp.lt.s32.totalorder %s312, 7
      %s314 = scalar_select %p313, %s312, 7
      %s315 = smul.u32 2, %s314
      %p316 = scmp.lt.s32.totalorder %s20, 1
      %s317 = scalar_select %p316, %s20, 1
      %p318 = scmp.lt.s32.totalorder %s315, 15
      %s319 = scalar_select %p318, %s315, 15
      %s320 = smul.addr %s319, 2
      %s321 = smul.addr %s317, 32
      %s322 = sadd.s32 %s320, %s321
      %s323 = smul.addr %s322, 8
      %s324 = scalar_lea.vmem %s2, %s323
      %p325 = pneg %p123
      %p326 = pneg %p120
      %p327 = pneg %p144
      %p328 = pneg %p141
      %p329 = pneg %p165
      %p330 = pneg %p162
      %p331 = pneg %p193
      %p332 = pneg %p190
      %s333 = smul.u32 16, %s21
      %p334 = scmp.lt.s32.totalorder %s20, 1
      %s335 = scalar_select %p334, %s20, 1
      %p336 = scmp.lt.s32.totalorder %s333, 31
      %s337 = scalar_select %p336, %s333, 31
      %s338 = smul.addr %s335, 32
      %s339 = sadd.s32 %s337, %s338
      %s340 = smul.addr %s339, 4
      %s341 = scalar_lea.vmem %s5, %s340
      %s342 = smul.u32 8, %s21
      %p343 = scmp.lt.s32.totalorder %s20, 1
      %s344 = scalar_select %p343, %s20, 1
      %p345 = scmp.lt.s32.totalorder %s342, 15
      %s346 = scalar_select %p345, %s342, 15
      %s347 = smul.addr %s346, 2
      %s348 = smul.addr %s344, 32
      %s349 = sadd.s32 %s347, %s348
      %s350 = smul.addr %s349, 8
      %s351 = scalar_lea.vmem %s0, %s350
      %s352 = smul.u32 8, %s21
      %s353 = smul.u32 %s21, 4
      %s354 = ssub.s32 %s353, 1
      %p355 = scmp.gt.s32.totalorder %s354, 0
      %s356 = scalar_select %p355, %s354, 0
      %s357 = smul.u32 2, %s356
      %p358 = scmp.lt.s32.totalorder %s20, 1
      %s359 = scalar_select %p358, %s20, 1
      %p360 = scmp.lt.s32.totalorder %s357, 15
      %s361 = scalar_select %p360, %s357, 15
      %s362 = smul.addr %s361, 2
      %s363 = smul.addr %s359, 32
      %s364 = sadd.s32 %s362, %s363
      %s365 = smul.addr %s364, 8
      %s366 = scalar_lea.vmem %s1, %s365
      %s367 = smul.u32 %s21, 4
      %s368 = ssub.s32 %s367, 1
      %p369 = scmp.gt.s32.totalorder %s368, 0
      %s370 = scalar_select %p369, %s368, 0
      %s371 = smul.u32 2, %s370
      %s372 = sadd.s32 %s21, 1
      %s373 = smul.u32 %s372, 4
      %p374 = scmp.lt.s32.totalorder %s373, 7
      %s375 = scalar_select %p374, %s373, 7
      %s376 = smul.u32 2, %s375
      %p377 = scmp.lt.s32.totalorder %s20, 1
      %s378 = scalar_select %p377, %s20, 1
      %p379 = scmp.lt.s32.totalorder %s376, 15
      %s380 = scalar_select %p379, %s376, 15
      %s381 = smul.addr %s380, 2
      %s382 = smul.addr %s378, 32
      %s383 = sadd.s32 %s381, %s382
      %s384 = smul.addr %s383, 8
      %s385 = scalar_lea.vmem %s2, %s384
      %s386 = sadd.s32 %s21, 1
      %s387 = smul.u32 %s386, 4
      %p388 = scmp.lt.s32.totalorder %s387, 7
      %s389 = scalar_select %p388, %s387, 7
      %s390 = smul.u32 2, %s389
      %s391 = smul.u32 16, %s21
      %p392 = scmp.lt.s32.totalorder %s20, 1
      %s393 = scalar_select %p392, %s20, 1
      %p394 = scmp.lt.s32.totalorder %s391, 31
      %s395 = scalar_select %p394, %s391, 31
      %s396 = smul.addr %s393, 32
      %s397 = sadd.s32 %s395, %s396
      %s398 = smul.addr %s397, 4
      %s399 = scalar_lea.vmem %s5, %s398
      %s400 = smul.u32 16, %s21
      %vm402 = vcmask 24576
      %vm403 = vsmask.f32 256
      %vm404 = vmand %vm402, %vm403
      %v405 = vld [vmem:[#allocation2] sm:$0x1]
      %v406 = vsel %vm404, 0, %v405
      %407 = vst [vmem:[#allocation2] sm:$0x1] %v406
      %v408 = vld [vmem:[#allocation2 + $0xc] sm:$0x1]
      %v409 = vsel %vm404, 0, %v408
      %410 = vst [vmem:[#allocation2 + $0xc] sm:$0x1] %v409
      %v411 = vld [vmem:[#allocation2 + $0x18] sm:$0x1]
      %v412 = vsel %vm404, 0, %v411
      %413 = vst [vmem:[#allocation2 + $0x18] sm:$0x1] %v412
      %v414 = vld [vmem:[#allocation2 + $0x24] sm:$0x1]
      %v415 = vsel %vm404, 0, %v414
      %416 = vst [vmem:[#allocation2 + $0x24] sm:$0x1] %v415
      %v417 = vld [vmem:[#allocation2 + $0x30] sm:$0x1]
      %v418 = vsel %vm404, 0, %v417
      %419 = vst [vmem:[#allocation2 + $0x30] sm:$0x1] %v418
      %v420 = vld [vmem:[#allocation2 + $0x3c] sm:$0x1]
      %v421 = vsel %vm404, 0, %v420
      %422 = vst [vmem:[#allocation2 + $0x3c] sm:$0x1] %v421
      %v423 = vld [vmem:[#allocation2 + $0x48] sm:$0x1]
      %v424 = vsel %vm404, 0, %v423
      %425 = vst [vmem:[#allocation2 + $0x48] sm:$0x1] %v424
      %v426 = vld [vmem:[#allocation2 + $0x54] sm:$0x1]
      %v427 = vsel %vm404, 0, %v426
      %428 = vst [vmem:[#allocation2 + $0x54] sm:$0x1] %v427
      %v429 = vld [vmem:[#allocation2 + $0x60] sm:$0x1]
      %v430 = vsel %vm404, 0, %v429
      %431 = vst [vmem:[#allocation2 + $0x60] sm:$0x1] %v430
      %v432 = vld [vmem:[#allocation2 + $0x6c] sm:$0x1]
      %v433 = vsel %vm404, 0, %v432
      %434 = vst [vmem:[#allocation2 + $0x6c] sm:$0x1] %v433
      %v435 = vld [vmem:[#allocation2 + $0x78] sm:$0x1]
      %v436 = vsel %vm404, 0, %v435
      %437 = vst [vmem:[#allocation2 + $0x78] sm:$0x1] %v436
      %v438 = vld [vmem:[#allocation2 + $0x84] sm:$0x1]
      %v439 = vsel %vm404, 0, %v438
      %440 = vst [vmem:[#allocation2 + $0x84] sm:$0x1] %v439
      %vm441 = vsmask.f32 7938
      %vm442 = vmand %vm402, %vm441
      %v443 = vld [vmem:[#allocation2 + $0x8] sm:$0x1]
      %v444 = vsel %vm442, 0, %v443
      %445 = vst [vmem:[#allocation2 + $0x8] sm:$0x1] %v444
      %v446 = vld [vmem:[#allocation2 + $0x14] sm:$0x1]
      %v447 = vsel %vm442, 0, %v446
      %448 = vst [vmem:[#allocation2 + $0x14] sm:$0x1] %v447
      %v449 = vld [vmem:[#allocation2 + $0x20] sm:$0x1]
      %v450 = vsel %vm442, 0, %v449
      %451 = vst [vmem:[#allocation2 + $0x20] sm:$0x1] %v450
      %v452 = vld [vmem:[#allocation2 + $0x2c] sm:$0x1]
      %v453 = vsel %vm442, 0, %v452
      %454 = vst [vmem:[#allocation2 + $0x2c] sm:$0x1] %v453
      %v455 = vld [vmem:[#allocation2 + $0x38] sm:$0x1]
      %v456 = vsel %vm442, 0, %v455
      %457 = vst [vmem:[#allocation2 + $0x38] sm:$0x1] %v456
      %v458 = vld [vmem:[#allocation2 + $0x44] sm:$0x1]
      %v459 = vsel %vm442, 0, %v458
      %460 = vst [vmem:[#allocation2 + $0x44] sm:$0x1] %v459
      %v461 = vld [vmem:[#allocation2 + $0x50] sm:$0x1]
      %v462 = vsel %vm442, 0, %v461
      %463 = vst [vmem:[#allocation2 + $0x50] sm:$0x1] %v462
      %v464 = vld [vmem:[#allocation2 + $0x5c] sm:$0x1]
      %v465 = vsel %vm442, 0, %v464
      %466 = vst [vmem:[#allocation2 + $0x5c] sm:$0x1] %v465
      %v467 = vld [vmem:[#allocation2 + $0x68] sm:$0x1]
      %v468 = vsel %vm442, 0, %v467
      %469 = vst [vmem:[#allocation2 + $0x68] sm:$0x1] %v468
      %v470 = vld [vmem:[#allocation2 + $0x74] sm:$0x1]
      %v471 = vsel %vm442, 0, %v470
      %472 = vst [vmem:[#allocation2 + $0x74] sm:$0x1] %v471
      %v473 = vld [vmem:[#allocation2 + $0x80] sm:$0x1]
      %v474 = vsel %vm442, 0, %v473
      %475 = vst [vmem:[#allocation2 + $0x80] sm:$0x1] %v474
      %v476 = vld [vmem:[#allocation2 + $0x8c] sm:$0x1]
      %v477 = vsel %vm442, 0, %v476
      %478 = vst [vmem:[#allocation2 + $0x8c] sm:$0x1] %v477
      %p479 = scmp.eq.s32.totalorder %s21, 0
      // Predicated region
      $region41: #{tpu_custom_call.1} parent=39 // pred_check
        %p480 = pneg %p479
      $region42: #{tpu_custom_call.1} parent=39 // pred_check_branch
        %482 = sbr.rel (%p480) target = $region44
      $region43: #{tpu_custom_call.1} parent=39 // pred_region
        %vm483 = vcmask 27648
        %484 = vst.msk [vmem:[#allocation2] sm:$0xf] %vm483, 0
        %485 = vst.msk [vmem:[#allocation2 + $0x4] sm:$0xf] %vm483, 0
        %vm486 = vcmask 24576
        %487 = vst.msk [vmem:[#allocation2 + $0x8] sm:$0x1] %vm486, 0
        %488 = vst.msk [vmem:[#allocation2 + $0xc] sm:$0xf] %vm483, 0
        %489 = vst.msk [vmem:[#allocation2 + $0x10] sm:$0xf] %vm483, 0
        %490 = vst.msk [vmem:[#allocation2 + $0x14] sm:$0x1] %vm486, 0
      $region44: #{tpu_custom_call.1} parent=39 // pred_fallthru
        _
      %p491 = scmp.gt.s32.totalorder %s21, 0
      // Predicated region
      $region45: #{tpu_custom_call.1} parent=39 // pred_check
        %p492 = pneg %p491
      $region46: #{tpu_custom_call.1} parent=39 // pred_check_branch
        %494 = sbr.rel (%p492) target = $region48
      $region47: #{tpu_custom_call.1} parent=39 // pred_region
        %v495 = vld [vmem:[%s366] sm:$0xff]
        %v496 = vld [vmem:[%s366 + $0x8] sm:$0xff]
        %v497 = vld [vmem:[%s366 + $0x10] sm:$0xff]
        %v498 = vld [vmem:[%s366 + $0x18] sm:$0xff]
        %v499 = vpack.c.bf16 %v496, %v495
        %v500 = vpack.c.bf16 %v498, %v497
        %v503 = vunpack.c.l.b16 %v499
        %v504 = vunpack.c.h.b16 %v499
        %v505 = vunpack.c.l.b16 %v500
        %v506 = vunpack.c.h.b16 %v500
        %v507 = vpack.c.b16 %v503, %v503
        %v508 = vpack.c.b16 %v504, %v504
        %v509 = vpack.c.b16 %v505, %v505
        %v510 = vpack.c.b16 %v506, %v506
        %vm511 = vsmask.f32 4368
        %vm512 = vmor %vm403, %vm511
        %v514 = vshrl.u32 %v507, 16
        %v516 = vrot.slane %v514, 7
        %v517 = vshll.u32 %v507, 16
        %v519 = vor.u32 %v516, %v517
        %v520 = vrot.slane %v516, 4
        %v522 = vshrl.u32 %v508, 16
        %v524 = vrot.slane %v522, 7
        %v525 = vshll.u32 %v508, 16
        %v527 = vor.u32 %v524, %v525
        %v528 = vsel %vm512, %v520, %v527
        %v529 = vrot.slane %v524, 4
        %v531 = vshrl.u32 %v509, 16
        %v533 = vrot.slane %v531, 7
        %v534 = vshll.u32 %v509, 16
        %v536 = vor.u32 %v533, %v534
        %v537 = vrot.slane %v533, 4
        %v539 = vshrl.u32 %v510, 16
        %v541 = vrot.slane %v539, 7
        %v542 = vshll.u32 %v510, 16
        %v544 = vor.u32 %v541, %v542
        %v545 = vsel %vm512, %v537, %v544
        %v546 = vrot.slane %v541, 4
        %vm553 = vcmask 27648
        %vm554 = vmand %vm553, %vm441
        %v555 = vld [vmem:[#allocation2] sm:$0xf]
        %v556 = vsel %vm554, %v519, %v555
        %557 = vst [vmem:[#allocation2] sm:$0xf] %v556
        %vm558 = vcmask 27648
        %559 = vst.msk [vmem:[#allocation2 + $0x4] sm:$0xf] %vm558, %v528
        %v560 = vld [vmem:[#allocation2 + $0x8] sm:$0x1]
        %v561 = vsel %vm404, %v529, %v560
        %562 = vst [vmem:[#allocation2 + $0x8] sm:$0x1] %v561
        %v563 = vld [vmem:[#allocation2 + $0xc] sm:$0xf]
        %v564 = vsel %vm554, %v536, %v563
        %565 = vst [vmem:[#allocation2 + $0xc] sm:$0xf] %v564
        %566 = vst.msk [vmem:[#allocation2 + $0x10] sm:$0xf] %vm558, %v545
        %v567 = vld [vmem:[#allocation2 + $0x14] sm:$0x1]
        %v568 = vsel %vm404, %v546, %v567
        %569 = vst [vmem:[#allocation2 + $0x14] sm:$0x1] %v568
      $region48: #{tpu_custom_call.1} parent=39 // pred_fallthru
        _
      %p570 = scmp.eq.s32.totalorder %s21, 1
      // Predicated region
      $region49: #{tpu_custom_call.1} parent=39 // pred_check
        %p571 = pneg %p570
      $region50: #{tpu_custom_call.1} parent=39 // pred_check_branch
        %573 = sbr.rel (%p571) target = $region52
      $region51: #{tpu_custom_call.1} parent=39 // pred_region
        %s574 = scalar_lea.vmem [#allocation2], 120
        %vm575 = vcmask 27648
        %576 = vst.msk [vmem:[%s574] sm:$0xf] %vm575, 0
        %577 = vst.msk [vmem:[%s574 + $0x4] sm:$0xf] %vm575, 0
        %vm578 = vcmask 24576
        %579 = vst.msk [vmem:[%s574 + $0x8] sm:$0x1] %vm578, 0
        %580 = vst.msk [vmem:[%s574 + $0xc] sm:$0xf] %vm575, 0
        %581 = vst.msk [vmem:[%s574 + $0x10] sm:$0xf] %vm575, 0
        %582 = vst.msk [vmem:[%s574 + $0x14] sm:$0x1] %vm578, 0
      $region52: #{tpu_custom_call.1} parent=39 // pred_fallthru
        _
      %p583 = scmp.lt.s32.totalorder %s21, 1
      // Predicated region
      $region53: #{tpu_custom_call.1} parent=39 // pred_check
        %p584 = pneg %p583
      $region54: #{tpu_custom_call.1} parent=39 // pred_check_branch
        %586 = sbr.rel (%p584) target = $region56
      $region55: #{tpu_custom_call.1} parent=39 // pred_region
        %v587 = vld [vmem:[%s385] sm:$0xff]
        %v588 = vld [vmem:[%s385 + $0x8] sm:$0xff]
        %v589 = vld [vmem:[%s385 + $0x10] sm:$0xff]
        %v590 = vld [vmem:[%s385 + $0x18] sm:$0xff]
        %v591 = vpack.c.bf16 %v588, %v587
        %v592 = vpack.c.bf16 %v590, %v589
        %v595 = vunpack.c.l.b16 %v591
        %v596 = vunpack.c.h.b16 %v591
        %v597 = vunpack.c.l.b16 %v592
        %v598 = vunpack.c.h.b16 %v592
        %v599 = vpack.c.b16 %v595, %v595
        %v600 = vpack.c.b16 %v596, %v596
        %v601 = vpack.c.b16 %v597, %v597
        %v602 = vpack.c.b16 %v598, %v598
        %vm603 = vsmask.f32 4368
        %vm604 = vmor %vm403, %vm603
        %v606 = vshrl.u32 %v599, 16
        %v608 = vrot.slane %v606, 7
        %v609 = vshll.u32 %v599, 16
        %v611 = vor.u32 %v608, %v609
        %v612 = vrot.slane %v608, 4
        %v614 = vshrl.u32 %v600, 16
        %v616 = vrot.slane %v614, 7
        %v617 = vshll.u32 %v600, 16
        %v619 = vor.u32 %v616, %v617
        %v620 = vsel %vm604, %v612, %v619
        %v621 = vrot.slane %v616, 4
        %v623 = vshrl.u32 %v601, 16
        %v625 = vrot.slane %v623, 7
        %v626 = vshll.u32 %v601, 16
        %v628 = vor.u32 %v625, %v626
        %v629 = vrot.slane %v625, 4
        %v631 = vshrl.u32 %v602, 16
        %v633 = vrot.slane %v631, 7
        %v634 = vshll.u32 %v602, 16
        %v636 = vor.u32 %v633, %v634
        %v637 = vsel %vm604, %v629, %v636
        %v638 = vrot.slane %v633, 4
        %s645 = scalar_lea.vmem [#allocation2], 120
        %vm646 = vcmask 27648
        %vm647 = vmand %vm646, %vm441
        %v648 = vld [vmem:[%s645] sm:$0xf]
        %v649 = vsel %vm647, %v611, %v648
        %650 = vst [vmem:[%s645] sm:$0xf] %v649
        %vm651 = vcmask 27648
        %652 = vst.msk [vmem:[%s645 + $0x4] sm:$0xf] %vm651, %v620
        %v653 = vld [vmem:[%s645 + $0x8] sm:$0x1]
        %v654 = vsel %vm404, %v621, %v653
        %655 = vst [vmem:[%s645 + $0x8] sm:$0x1] %v654
        %v656 = vld [vmem:[%s645 + $0xc] sm:$0xf]
        %v657 = vsel %vm647, %v628, %v656
        %658 = vst [vmem:[%s645 + $0xc] sm:$0xf] %v657
        %659 = vst.msk [vmem:[%s645 + $0x10] sm:$0xf] %vm651, %v637
        %v660 = vld [vmem:[%s645 + $0x14] sm:$0x1]
        %v661 = vsel %vm404, %v638, %v660
        %662 = vst [vmem:[%s645 + $0x14] sm:$0x1] %v661
      $region56: #{tpu_custom_call.1} parent=39 // pred_fallthru
        _
      %v663 = vld [vmem:[%s351] sm:$0xff]
      %v664 = vld [vmem:[%s351 + $0x8] sm:$0xff]
      %v665 = vld [vmem:[%s351 + $0x10] sm:$0xff]
      %v666 = vld [vmem:[%s351 + $0x18] sm:$0xff]
      %v667 = vld [vmem:[%s351 + $0x20] sm:$0xff]
      %v668 = vld [vmem:[%s351 + $0x28] sm:$0xff]
      %v669 = vld [vmem:[%s351 + $0x30] sm:$0xff]
      %v670 = vld [vmem:[%s351 + $0x38] sm:$0xff]
      %v671 = vld [vmem:[%s351 + $0x40] sm:$0xff]
      %v672 = vld [vmem:[%s351 + $0x48] sm:$0xff]
      %v673 = vld [vmem:[%s351 + $0x50] sm:$0xff]
      %v674 = vld [vmem:[%s351 + $0x58] sm:$0xff]
      %v675 = vld [vmem:[%s351 + $0x60] sm:$0xff]
      %v676 = vld [vmem:[%s351 + $0x68] sm:$0xff]
      %v677 = vld [vmem:[%s351 + $0x70] sm:$0xff]
      %v678 = vld [vmem:[%s351 + $0x78] sm:$0xff]
      %v679 = vpack.c.bf16 %v664, %v663
      %v680 = vpack.c.bf16 %v666, %v665
      %v681 = vpack.c.bf16 %v668, %v667
      %v682 = vpack.c.bf16 %v670, %v669
      %v683 = vpack.c.bf16 %v672, %v671
      %v684 = vpack.c.bf16 %v674, %v673
      %v685 = vpack.c.bf16 %v676, %v675
      %v686 = vpack.c.bf16 %v678, %v677
      %v695 = vunpack.c.l.b16 %v679
      %v696 = vunpack.c.h.b16 %v679
      %v697 = vunpack.c.l.b16 %v680
      %v698 = vunpack.c.h.b16 %v680
      %v699 = vunpack.c.l.b16 %v681
      %v700 = vunpack.c.h.b16 %v681
      %v701 = vunpack.c.l.b16 %v682
      %v702 = vunpack.c.h.b16 %v682
      %v703 = vunpack.c.l.b16 %v683
      %v704 = vunpack.c.h.b16 %v683
      %v705 = vunpack.c.l.b16 %v684
      %v706 = vunpack.c.h.b16 %v684
      %v707 = vunpack.c.l.b16 %v685
      %v708 = vunpack.c.h.b16 %v685
      %v709 = vunpack.c.l.b16 %v686
      %v710 = vunpack.c.h.b16 %v686
      %v711 = vpack.c.b16 %v695, %v695
      %v712 = vpack.c.b16 %v696, %v696
      %v713 = vpack.c.b16 %v697, %v697
      %v714 = vpack.c.b16 %v698, %v698
      %v715 = vpack.c.b16 %v699, %v699
      %v716 = vpack.c.b16 %v700, %v700
      %v717 = vpack.c.b16 %v701, %v701
      %v718 = vpack.c.b16 %v702, %v702
      %v719 = vpack.c.b16 %v703, %v703
      %v720 = vpack.c.b16 %v704, %v704
      %v721 = vpack.c.b16 %v705, %v705
      %v722 = vpack.c.b16 %v706, %v706
      %v723 = vpack.c.b16 %v707, %v707
      %v724 = vpack.c.b16 %v708, %v708
      %v725 = vpack.c.b16 %v709, %v709
      %v726 = vpack.c.b16 %v710, %v710
      %vm727 = vsmask.f32 4368
      %vm728 = vmor %vm403, %vm727
      %v730 = vshrl.u32 %v711, 16
      %v732 = vrot.slane %v730, 7
      %v733 = vshll.u32 %v711, 16
      %v735 = vor.u32 %v732, %v733
      %v736 = vrot.slane %v732, 4
      %v738 = vshrl.u32 %v712, 16
      %v740 = vrot.slane %v738, 7
      %v741 = vshll.u32 %v712, 16
      %v743 = vor.u32 %v740, %v741
      %v744 = vsel %vm728, %v736, %v743
      %v745 = vrot.slane %v740, 4
      %v747 = vshrl.u32 %v713, 16
      %v749 = vrot.slane %v747, 7
      %v750 = vshll.u32 %v713, 16
      %v752 = vor.u32 %v749, %v750
      %v753 = vrot.slane %v749, 4
      %v755 = vshrl.u32 %v714, 16
      %v757 = vrot.slane %v755, 7
      %v758 = vshll.u32 %v714, 16
      %v760 = vor.u32 %v757, %v758
      %v761 = vsel %vm728, %v753, %v760
      %v762 = vrot.slane %v757, 4
      %v764 = vshrl.u32 %v715, 16
      %v766 = vrot.slane %v764, 7
      %v767 = vshll.u32 %v715, 16
      %v769 = vor.u32 %v766, %v767
      %v770 = vrot.slane %v766, 4
      %v772 = vshrl.u32 %v716, 16
      %v774 = vrot.slane %v772, 7
      %v775 = vshll.u32 %v716, 16
      %v777 = vor.u32 %v774, %v775
      %v778 = vsel %vm728, %v770, %v777
      %v779 = vrot.slane %v774, 4
      %v781 = vshrl.u32 %v717, 16
      %v783 = vrot.slane %v781, 7
      %v784 = vshll.u32 %v717, 16
      %v786 = vor.u32 %v783, %v784
      %v787 = vrot.slane %v783, 4
      %v789 = vshrl.u32 %v718, 16
      %v791 = vrot.slane %v789, 7
      %v792 = vshll.u32 %v718, 16
      %v794 = vor.u32 %v791, %v792
      %v795 = vsel %vm728, %v787, %v794
      %v796 = vrot.slane %v791, 4
      %v798 = vshrl.u32 %v719, 16
      %v800 = vrot.slane %v798, 7
      %v801 = vshll.u32 %v719, 16
      %v803 = vor.u32 %v800, %v801
      %v804 = vrot.slane %v800, 4
      %v806 = vshrl.u32 %v720, 16
      %v808 = vrot.slane %v806, 7
      %v809 = vshll.u32 %v720, 16
      %v811 = vor.u32 %v808, %v809
      %v812 = vsel %vm728, %v804, %v811
      %v813 = vrot.slane %v808, 4
      %v815 = vshrl.u32 %v721, 16
      %v817 = vrot.slane %v815, 7
      %v818 = vshll.u32 %v721, 16
      %v820 = vor.u32 %v817, %v818
      %v821 = vrot.slane %v817, 4
      %v823 = vshrl.u32 %v722, 16
      %v825 = vrot.slane %v823, 7
      %v826 = vshll.u32 %v722, 16
      %v828 = vor.u32 %v825, %v826
      %v829 = vsel %vm728, %v821, %v828
      %v830 = vrot.slane %v825, 4
      %v832 = vshrl.u32 %v723, 16
      %v834 = vrot.slane %v832, 7
      %v835 = vshll.u32 %v723, 16
      %v837 = vor.u32 %v834, %v835
      %v838 = vrot.slane %v834, 4
      %v840 = vshrl.u32 %v724, 16
      %v842 = vrot.slane %v840, 7
      %v843 = vshll.u32 %v724, 16
      %v845 = vor.u32 %v842, %v843
      %v846 = vsel %vm728, %v838, %v845
      %v847 = vrot.slane %v842, 4
      %v849 = vshrl.u32 %v725, 16
      %v851 = vrot.slane %v849, 7
      %v852 = vshll.u32 %v725, 16
      %v854 = vor.u32 %v851, %v852
      %v855 = vrot.slane %v851, 4
      %v857 = vshrl.u32 %v726, 16
      %v859 = vrot.slane %v857, 7
      %v860 = vshll.u32 %v726, 16
      %v862 = vor.u32 %v859, %v860
      %v863 = vsel %vm728, %v855, %v862
      %v864 = vrot.slane %v859, 4
      %s889 = scalar_lea.vmem [#allocation2], 24
      %vm890 = vcmask 27648
      %vm891 = vmand %vm890, %vm441
      %v892 = vld [vmem:[%s889] sm:$0xf]
      %v893 = vsel %vm891, %v735, %v892
      %894 = vst [vmem:[%s889] sm:$0xf] %v893
      %vm895 = vcmask 27648
      %896 = vst.msk [vmem:[%s889 + $0x4] sm:$0xf] %vm895, %v744
      %v897 = vld [vmem:[%s889 + $0x8] sm:$0x1]
      %v898 = vsel %vm404, %v745, %v897
      %899 = vst [vmem:[%s889 + $0x8] sm:$0x1] %v898
      %v900 = vld [vmem:[%s889 + $0xc] sm:$0xf]
      %v901 = vsel %vm891, %v752, %v900
      %902 = vst [vmem:[%s889 + $0xc] sm:$0xf] %v901
      %903 = vst.msk [vmem:[%s889 + $0x10] sm:$0xf] %vm895, %v761
      %v904 = vld [vmem:[%s889 + $0x14] sm:$0x1]
      %v905 = vsel %vm404, %v762, %v904
      %906 = vst [vmem:[%s889 + $0x14] sm:$0x1] %v905
      %v907 = vld [vmem:[%s889 + $0x18] sm:$0xf]
      %v908 = vsel %vm891, %v769, %v907
      %909 = vst [vmem:[%s889 + $0x18] sm:$0xf] %v908
      %910 = vst.msk [vmem:[%s889 + $0x1c] sm:$0xf] %vm895, %v778
      %v911 = vld [vmem:[%s889 + $0x20] sm:$0x1]
      %v912 = vsel %vm404, %v779, %v911
      %913 = vst [vmem:[%s889 + $0x20] sm:$0x1] %v912
      %v914 = vld [vmem:[%s889 + $0x24] sm:$0xf]
      %v915 = vsel %vm891, %v786, %v914
      %916 = vst [vmem:[%s889 + $0x24] sm:$0xf] %v915
      %917 = vst.msk [vmem:[%s889 + $0x28] sm:$0xf] %vm895, %v795
      %v918 = vld [vmem:[%s889 + $0x2c] sm:$0x1]
      %v919 = vsel %vm404, %v796, %v918
      %920 = vst [vmem:[%s889 + $0x2c] sm:$0x1] %v919
      %v921 = vld [vmem:[%s889 + $0x30] sm:$0xf]
      %v922 = vsel %vm891, %v803, %v921
      %923 = vst [vmem:[%s889 + $0x30] sm:$0xf] %v922
      %924 = vst.msk [vmem:[%s889 + $0x34] sm:$0xf] %vm895, %v812
      %v925 = vld [vmem:[%s889 + $0x38] sm:$0x1]
      %v926 = vsel %vm404, %v813, %v925
      %927 = vst [vmem:[%s889 + $0x38] sm:$0x1] %v926
      %v928 = vld [vmem:[%s889 + $0x3c] sm:$0xf]
      %v929 = vsel %vm891, %v820, %v928
      %930 = vst [vmem:[%s889 + $0x3c] sm:$0xf] %v929
      %931 = vst.msk [vmem:[%s889 + $0x40] sm:$0xf] %vm895, %v829
      %v932 = vld [vmem:[%s889 + $0x44] sm:$0x1]
      %v933 = vsel %vm404, %v830, %v932
      %934 = vst [vmem:[%s889 + $0x44] sm:$0x1] %v933
      %v935 = vld [vmem:[%s889 + $0x48] sm:$0xf]
      %v936 = vsel %vm891, %v837, %v935
      %937 = vst [vmem:[%s889 + $0x48] sm:$0xf] %v936
      %938 = vst.msk [vmem:[%s889 + $0x4c] sm:$0xf] %vm895, %v846
      %v939 = vld [vmem:[%s889 + $0x50] sm:$0x1]
      %v940 = vsel %vm404, %v847, %v939
      %941 = vst [vmem:[%s889 + $0x50] sm:$0x1] %v940
      %v942 = vld [vmem:[%s889 + $0x54] sm:$0xf]
      %v943 = vsel %vm891, %v854, %v942
      %944 = vst [vmem:[%s889 + $0x54] sm:$0xf] %v943
      %945 = vst.msk [vmem:[%s889 + $0x58] sm:$0xf] %vm895, %v863
      %v946 = vld [vmem:[%s889 + $0x5c] sm:$0x1]
      %v947 = vsel %vm404, %v864, %v946
      %948 = vst [vmem:[%s889 + $0x5c] sm:$0x1] %v947
      %v949 = vld [vmem:[#allocation2] sm:$0xf]
      %v950 = vld [vmem:[#allocation2 + $0x4] sm:$0xf]
      %v951 = vld [vmem:[#allocation2 + $0xc] sm:$0xf]
      %v952 = vld [vmem:[#allocation2 + $0x10] sm:$0xf]
      %v953 = vld [vmem:[#allocation2 + $0x18] sm:$0xf]
      %v954 = vld [vmem:[#allocation2 + $0x1c] sm:$0xf]
      %v955 = vld [vmem:[#allocation2 + $0x24] sm:$0xf]
      %v956 = vld [vmem:[#allocation2 + $0x28] sm:$0xf]
      %v957 = vld [vmem:[#allocation2 + $0x30] sm:$0xf]
      %v958 = vld [vmem:[#allocation2 + $0x34] sm:$0xf]
      %v959 = vld [vmem:[#allocation2 + $0x3c] sm:$0xf]
      %v960 = vld [vmem:[#allocation2 + $0x40] sm:$0xf]
      %v961 = vld [vmem:[#allocation2 + $0x48] sm:$0xf]
      %v962 = vld [vmem:[#allocation2 + $0x4c] sm:$0xf]
      %v963 = vld [vmem:[#allocation2 + $0x54] sm:$0xf]
      %v964 = vld [vmem:[#allocation2 + $0x58] sm:$0xf]
      %v965 = vld [vmem:[#allocation2 + $0x60] sm:$0xf]
      %v966 = vld [vmem:[#allocation2 + $0x64] sm:$0xf]
      %v967 = vld [vmem:[#allocation2 + $0x6c] sm:$0xf]
      %v968 = vld [vmem:[#allocation2 + $0x70] sm:$0xf]
      %v969 = vld [vmem:[%s3] sm:$0x3]
      %v970 = vld [vmem:[#allocation2 + $0x8] sm:$0x1]
      %v971 = vld [vmem:[#allocation2 + $0x14] sm:$0x1]
      %v972 = vld [vmem:[#allocation2 + $0x20] sm:$0x1]
      %v973 = vld [vmem:[#allocation2 + $0x2c] sm:$0x1]
      %v974 = vld [vmem:[#allocation2 + $0x38] sm:$0x1]
      %v975 = vld [vmem:[#allocation2 + $0x44] sm:$0x1]
      %v976 = vld [vmem:[#allocation2 + $0x50] sm:$0x1]
      %v977 = vld [vmem:[#allocation2 + $0x5c] sm:$0x1]
      %v978 = vld [vmem:[#allocation2 + $0x68] sm:$0x1]
      %v979 = vld [vmem:[#allocation2 + $0x74] sm:$0x1]
      %vm980 = vsmask.f32 3328
      %vm981 = vsmask.f32 7440
      %vm982 = vmor %vm980, %vm981
      %v984 = vshrl.u32 %v949, 16
      %v986 = vrot.slane %v984, 4
      %v987 = vshll.u32 %v949, 16
      %v989 = vrot.slane %v987, 5
      %v990 = vor.u32 %v986, %v989
      %v991 = vrot.slane %v990, 4
      %v993 = vshll.u32 %v950, 16
      %v995 = vrot.slane %v993, 5
      %v996 = vsel %vm982, %v991, %v995
      %v997 = vshrl.u32 %v950, 16
      %v999 = vrot.slane %v997, 4
      %v1000 = vor.u32 %v999, %v995
      %v1001 = vrot.slane %v1000, 4
      %v1003 = vshll.u32 %v970, 16
      %v1005 = vrot.slane %v1003, 5
      %v1006 = vsel %vm982, %v1001, %v1005
      %v1008 = vshrl.u32 %v951, 16
      %v1010 = vrot.slane %v1008, 4
      %v1011 = vshll.u32 %v951, 16
      %v1013 = vrot.slane %v1011, 5
      %v1014 = vor.u32 %v1010, %v1013
      %v1015 = vrot.slane %v1014, 4
      %v1017 = vshll.u32 %v952, 16
      %v1019 = vrot.slane %v1017, 5
      %v1020 = vsel %vm982, %v1015, %v1019
      %v1021 = vshrl.u32 %v952, 16
      %v1023 = vrot.slane %v1021, 4
      %v1024 = vor.u32 %v1023, %v1019
      %v1025 = vrot.slane %v1024, 4
      %v1027 = vshll.u32 %v971, 16
      %v1029 = vrot.slane %v1027, 5
      %v1030 = vsel %vm982, %v1025, %v1029
      %v1032 = vshrl.u32 %v953, 16
      %v1034 = vrot.slane %v1032, 4
      %v1035 = vshll.u32 %v953, 16
      %v1037 = vrot.slane %v1035, 5
      %v1038 = vor.u32 %v1034, %v1037
      %v1039 = vrot.slane %v1038, 4
      %v1041 = vshll.u32 %v954, 16
      %v1043 = vrot.slane %v1041, 5
      %v1044 = vsel %vm982, %v1039, %v1043
      %v1045 = vshrl.u32 %v954, 16
      %v1047 = vrot.slane %v1045, 4
      %v1048 = vor.u32 %v1047, %v1043
      %v1049 = vrot.slane %v1048, 4
      %v1051 = vshll.u32 %v972, 16
      %v1053 = vrot.slane %v1051, 5
      %v1054 = vsel %vm982, %v1049, %v1053
      %v1056 = vshrl.u32 %v955, 16
      %v1058 = vrot.slane %v1056, 4
      %v1059 = vshll.u32 %v955, 16
      %v1061 = vrot.slane %v1059, 5
      %v1062 = vor.u32 %v1058, %v1061
      %v1063 = vrot.slane %v1062, 4
      %v1065 = vshll.u32 %v956, 16
      %v1067 = vrot.slane %v1065, 5
      %v1068 = vsel %vm982, %v1063, %v1067
      %v1069 = vshrl.u32 %v956, 16
      %v1071 = vrot.slane %v1069, 4
      %v1072 = vor.u32 %v1071, %v1067
      %v1073 = vrot.slane %v1072, 4
      %v1075 = vshll.u32 %v973, 16
      %v1077 = vrot.slane %v1075, 5
      %v1078 = vsel %vm982, %v1073, %v1077
      %v1080 = vshrl.u32 %v957, 16
      %v1082 = vrot.slane %v1080, 4
      %v1083 = vshll.u32 %v957, 16
      %v1085 = vrot.slane %v1083, 5
      %v1086 = vor.u32 %v1082, %v1085
      %v1087 = vrot.slane %v1086, 4
      %v1089 = vshll.u32 %v958, 16
      %v1091 = vrot.slane %v1089, 5
      %v1092 = vsel %vm982, %v1087, %v1091
      %v1093 = vshrl.u32 %v958, 16
      %v1095 = vrot.slane %v1093, 4
      %v1096 = vor.u32 %v1095, %v1091
      %v1097 = vrot.slane %v1096, 4
      %v1099 = vshll.u32 %v974, 16
      %v1101 = vrot.slane %v1099, 5
      %v1102 = vsel %vm982, %v1097, %v1101
      %v1104 = vshrl.u32 %v959, 16
      %v1106 = vrot.slane %v1104, 4
      %v1107 = vshll.u32 %v959, 16
      %v1109 = vrot.slane %v1107, 5
      %v1110 = vor.u32 %v1106, %v1109
      %v1111 = vrot.slane %v1110, 4
      %v1113 = vshll.u32 %v960, 16
      %v1115 = vrot.slane %v1113, 5
      %v1116 = vsel %vm982, %v1111, %v1115
      %v1117 = vshrl.u32 %v960, 16
      %v1119 = vrot.slane %v1117, 4
      %v1120 = vor.u32 %v1119, %v1115
      %v1121 = vrot.slane %v1120, 4
      %v1123 = vshll.u32 %v975, 16
      %v1125 = vrot.slane %v1123, 5
      %v1126 = vsel %vm982, %v1121, %v1125
      %v1128 = vshrl.u32 %v961, 16
      %v1130 = vrot.slane %v1128, 4
      %v1131 = vshll.u32 %v961, 16
      %v1133 = vrot.slane %v1131, 5
      %v1134 = vor.u32 %v1130, %v1133
      %v1135 = vrot.slane %v1134, 4
      %v1137 = vshll.u32 %v962, 16
      %v1139 = vrot.slane %v1137, 5
      %v1140 = vsel %vm982, %v1135, %v1139
      %v1141 = vshrl.u32 %v962, 16
      %v1143 = vrot.slane %v1141, 4
      %v1144 = vor.u32 %v1143, %v1139
      %v1145 = vrot.slane %v1144, 4
      %v1147 = vshll.u32 %v976, 16
      %v1149 = vrot.slane %v1147, 5
      %v1150 = vsel %vm982, %v1145, %v1149
      %v1152 = vshrl.u32 %v963, 16
      %v1154 = vrot.slane %v1152, 4
      %v1155 = vshll.u32 %v963, 16
      %v1157 = vrot.slane %v1155, 5
      %v1158 = vor.u32 %v1154, %v1157
      %v1159 = vrot.slane %v1158, 4
      %v1161 = vshll.u32 %v964, 16
      %v1163 = vrot.slane %v1161, 5
      %v1164 = vsel %vm982, %v1159, %v1163
      %v1165 = vshrl.u32 %v964, 16
      %v1167 = vrot.slane %v1165, 4
      %v1168 = vor.u32 %v1167, %v1163
      %v1169 = vrot.slane %v1168, 4
      %v1171 = vshll.u32 %v977, 16
      %v1173 = vrot.slane %v1171, 5
      %v1174 = vsel %vm982, %v1169, %v1173
      %v1176 = vshrl.u32 %v965, 16
      %v1178 = vrot.slane %v1176, 4
      %v1179 = vshll.u32 %v965, 16
      %v1181 = vrot.slane %v1179, 5
      %v1182 = vor.u32 %v1178, %v1181
      %v1183 = vrot.slane %v1182, 4
      %v1185 = vshll.u32 %v966, 16
      %v1187 = vrot.slane %v1185, 5
      %v1188 = vsel %vm982, %v1183, %v1187
      %v1189 = vshrl.u32 %v966, 16
      %v1191 = vrot.slane %v1189, 4
      %v1192 = vor.u32 %v1191, %v1187
      %v1193 = vrot.slane %v1192, 4
      %v1195 = vshll.u32 %v978, 16
      %v1197 = vrot.slane %v1195, 5
      %v1198 = vsel %vm982, %v1193, %v1197
      %v1200 = vshrl.u32 %v967, 16
      %v1202 = vrot.slane %v1200, 4
      %v1203 = vshll.u32 %v967, 16
      %v1205 = vrot.slane %v1203, 5
      %v1206 = vor.u32 %v1202, %v1205
      %v1207 = vrot.slane %v1206, 4
      %v1209 = vshll.u32 %v968, 16
      %v1211 = vrot.slane %v1209, 5
      %v1212 = vsel %vm982, %v1207, %v1211
      %v1213 = vshrl.u32 %v968, 16
      %v1215 = vrot.slane %v1213, 4
      %v1216 = vor.u32 %v1215, %v1211
      %v1217 = vrot.slane %v1216, 4
      %v1219 = vshll.u32 %v979, 16
      %v1221 = vrot.slane %v1219, 5
      %v1222 = vsel %vm982, %v1217, %v1221
      %s1223 = scalar_lea.vmem %s3, 2
      %v1224 = vld [vmem:[%s1223] sm:$0x3]
      %v1225 = vunpack.c.l.b16 %v996
      %v1226 = vunpack.c.l.b16 %v1006
      %v1227 = vunpack.c.l.b16 %v1020
      %v1228 = vunpack.c.l.b16 %v1030
      %v1229 = vunpack.c.l.b16 %v1044
      %v1230 = vunpack.c.l.b16 %v1054
      %v1231 = vunpack.c.l.b16 %v1068
      %v1232 = vunpack.c.l.b16 %v1078
      %v1233 = vunpack.c.l.b16 %v1092
      %v1234 = vunpack.c.l.b16 %v1102
      %v1235 = vunpack.c.l.b16 %v1116
      %v1236 = vunpack.c.l.b16 %v1126
      %v1237 = vunpack.c.l.b16 %v1140
      %v1238 = vunpack.c.l.b16 %v1150
      %v1239 = vunpack.c.l.b16 %v1164
      %v1240 = vunpack.c.l.b16 %v1174
      %v1241 = vunpack.c.l.b16 %v1188
      %v1242 = vunpack.c.l.b16 %v1198
      %v1243 = vunpack.c.l.b16 %v1212
      %v1244 = vunpack.c.l.b16 %v1222
      %v1245 = vpack.c.b16 %v1226, %v1225
      %v1246 = vpack.c.b16 %v1228, %v1227
      %v1247 = vpack.c.b16 %v1230, %v1229
      %v1248 = vpack.c.b16 %v1232, %v1231
      %v1249 = vpack.c.b16 %v1234, %v1233
      %v1250 = vpack.c.b16 %v1236, %v1235
      %v1251 = vpack.c.b16 %v1238, %v1237
      %v1252 = vpack.c.b16 %v1240, %v1239
      %v1253 = vpack.c.b16 %v1242, %v1241
      %v1254 = vpack.c.b16 %v1244, %v1243
      %vm1255 = vcmask 31744
      %v1257 = vsel %vm1255, %v1245, 0
      %v1260 = vsel %vm1255, %v1246, 0
      %v1263 = vsel %vm1255, %v1247, 0
      %v1266 = vsel %vm1255, %v1248, 0
      %v1269 = vsel %vm1255, %v1249, 0
      %v1272 = vsel %vm1255, %v1250, 0
      %v1275 = vsel %vm1255, %v1251, 0
      %v1278 = vsel %vm1255, %v1252, 0
      %v1281 = vsel %vm1255, %v1253, 0
      %v1284 = vsel %vm1255, %v1254, 0
      %vm1286 = vcmask 1041408
      %v1288 = vsel %vm1286, %v1224, 0
      %1290 = vmatprep.subr.bf16.mxu0 0
      %1291 = vmatpush1.bf16.msra.mxu0 %v1288
      %1292 = vmatprep.subr.bf16.mxu0 0
      %1293 = vmatpush1.bf16.msra.mxu0 0
      %1294 = vmatprep.subr.bf16.mxu0 0
      %1295 = vmatpush1.bf16.msra.mxu0 0
      %1296 = vmatprep.subr.bf16.mxu0 0
      %1297 = vmatpush1.bf16.msra.mxu0 0
      %1298 = vmatprep.subr.bf16.mxu0 0
      %1299 = vmatpush1.bf16.msra.mxu0 0
      %1300 = vmatprep.subr.bf16.mxu0 0
      %1301 = vmatpush1.bf16.msra.mxu0 0
      %1302 = vmatprep.subr.bf16.mxu0 0
      %1303 = vmatpush1.bf16.msra.mxu0 0
      %1304 = vmatprep.subr.bf16.mxu0 0
      %1305 = vmatpush1.bf16.msra.mxu0 0
      %1306 = vmatprep.subr.bf16.mxu0 0
      %1307 = vmatpush1.bf16.msra.mxu0 0
      %1308 = vmatprep.subr.bf16.mxu0 0
      %1309 = vmatpush1.bf16.msra.mxu0 0
      %1310 = vmatprep.subr.bf16.mxu0 0
      %1311 = vmatpush1.bf16.msra.mxu0 0
      %1312 = vmatprep.subr.bf16.mxu0 0
      %1313 = vmatpush1.bf16.msra.mxu0 0
      %1314 = vmatprep.subr.bf16.mxu0 0
      %1315 = vmatpush1.bf16.msra.mxu0 0
      %1316 = vmatprep.subr.bf16.mxu0 0
      %1317 = vmatpush1.bf16.msra.mxu0 0
      %1318 = vmatprep.subr.bf16.mxu0 0
      %1319 = vmatpush1.bf16.msra.mxu0 0
      %1320 = vmatprep.subr.bf16.mxu0 0
      %1321 = vmatpush1.bf16.msra.mxu0 0
      %1322 = vmatprep.mubr.bf16.mxu0 0
      %1323 = vmatmul.mubr.bf16.gmra.mrb[0].mxu0 %v1257
      %v1324 = vpop.f32.mrb[0].mxu0
      %v1325 = vadd.f32 0.0, %v1324
      %v1326 = vpop.f32.mrb[0].mxu0
      %v1327 = vpop.f32.mrb[0].mxu0
      %v1328 = vadd.f32 0.0, %v1327
      %v1329 = vpop.f32.mrb[0].mxu0
      %1330 = vmatprep.mubr.bf16.mxu0 0
      %1331 = vmatmul.mubr.bf16.gmra.mrb[0].mxu0 %v1260
      %v1332 = vpop.f32.mrb[0].mxu0
      %v1333 = vadd.f32 0.0, %v1332
      %v1334 = vpop.f32.mrb[0].mxu0
      %v1335 = vpop.f32.mrb[0].mxu0
      %v1336 = vadd.f32 0.0, %v1335
      %v1337 = vpop.f32.mrb[0].mxu0
      %1338 = vmatprep.mubr.bf16.mxu0 0
      %1339 = vmatmul.mubr.bf16.gmra.mrb[0].mxu0 %v1263
      %v1340 = vpop.f32.mrb[0].mxu0
      %v1341 = vadd.f32 0.0, %v1340
      %v1342 = vpop.f32.mrb[0].mxu0
      %v1343 = vpop.f32.mrb[0].mxu0
      %v1344 = vadd.f32 0.0, %v1343
      %v1345 = vpop.f32.mrb[0].mxu0
      %1346 = vmatprep.mubr.bf16.mxu0 0
      %1347 = vmatmul.mubr.bf16.gmra.mrb[0].mxu0 %v1266
      %v1348 = vpop.f32.mrb[0].mxu0
      %v1349 = vadd.f32 0.0, %v1348
      %v1350 = vpop.f32.mrb[0].mxu0
      %v1351 = vpop.f32.mrb[0].mxu0
      %v1352 = vadd.f32 0.0, %v1351
      %v1353 = vpop.f32.mrb[0].mxu0
      %1354 = vmatprep.mubr.bf16.mxu0 0
      %1355 = vmatmul.mubr.bf16.gmra.mrb[0].mxu0 %v1269
      %v1356 = vpop.f32.mrb[0].mxu0
      %v1357 = vadd.f32 0.0, %v1356
      %v1358 = vpop.f32.mrb[0].mxu0
      %v1359 = vpop.f32.mrb[0].mxu0
      %v1360 = vadd.f32 0.0, %v1359
      %v1361 = vpop.f32.mrb[0].mxu0
      %1362 = vmatprep.mubr.bf16.mxu0 0
      %1363 = vmatmul.mubr.bf16.gmra.mrb[0].mxu0 %v1272
      %v1364 = vpop.f32.mrb[0].mxu0
      %v1365 = vadd.f32 0.0, %v1364
      %v1366 = vpop.f32.mrb[0].mxu0
      %v1367 = vpop.f32.mrb[0].mxu0
      %v1368 = vadd.f32 0.0, %v1367
      %v1369 = vpop.f32.mrb[0].mxu0
      %1370 = vmatprep.mubr.bf16.mxu0 0
      %1371 = vmatmul.mubr.bf16.gmra.mrb[0].mxu0 %v1275
      %v1372 = vpop.f32.mrb[0].mxu0
      %v1373 = vadd.f32 0.0, %v1372
      %v1374 = vpop.f32.mrb[0].mxu0
      %v1375 = vpop.f32.mrb[0].mxu0
      %v1376 = vadd.f32 0.0, %v1375
      %v1377 = vpop.f32.mrb[0].mxu0
      %1378 = vmatprep.mubr.bf16.mxu0 0
      %1379 = vmatmul.mubr.bf16.gmra.mrb[0].mxu0 %v1278
      %v1380 = vpop.f32.mrb[0].mxu0
      %v1381 = vadd.f32 0.0, %v1380
      %v1382 = vpop.f32.mrb[0].mxu0
      %v1383 = vpop.f32.mrb[0].mxu0
      %v1384 = vadd.f32 0.0, %v1383
      %v1385 = vpop.f32.mrb[0].mxu0
      %1386 = vmatprep.mubr.bf16.mxu0 0
      %1387 = vmatmul.mubr.bf16.gmra.mrb[0].mxu0 %v1281
      %v1388 = vpop.f32.mrb[0].mxu0
      %v1389 = vadd.f32 0.0, %v1388
      %v1390 = vpop.f32.mrb[0].mxu0
      %v1391 = vpop.f32.mrb[0].mxu0
      %v1392 = vadd.f32 0.0, %v1391
      %v1393 = vpop.f32.mrb[0].mxu0
      %1394 = vmatprep.mubr.bf16.mxu0 0
      %1395 = vmatmul.mubr.bf16.gmra.mrb[0].mxu0 %v1284
      %v1396 = vpop.f32.mrb[0].mxu0
      %v1397 = vadd.f32 0.0, %v1396
      %v1398 = vpop.f32.mrb[0].mxu0
      %v1399 = vpop.f32.mrb[0].mxu0
      %v1400 = vadd.f32 0.0, %v1399
      %v1401 = vpop.f32.mrb[0].mxu0
      %1402 = vdwg.mxu0
      %v1423 = vunpack.c.l.b16 %v949
      %v1424 = vunpack.c.l.b16 %v950
      %v1425 = vunpack.c.l.b16 %v951
      %v1426 = vunpack.c.l.b16 %v952
      %v1427 = vunpack.c.l.b16 %v953
      %v1428 = vunpack.c.l.b16 %v954
      %v1429 = vunpack.c.l.b16 %v955
      %v1430 = vunpack.c.l.b16 %v956
      %v1431 = vunpack.c.l.b16 %v957
      %v1432 = vunpack.c.l.b16 %v958
      %v1433 = vunpack.c.l.b16 %v959
      %v1434 = vunpack.c.l.b16 %v960
      %v1435 = vunpack.c.l.b16 %v961
      %v1436 = vunpack.c.l.b16 %v962
      %v1437 = vunpack.c.l.b16 %v963
      %v1438 = vunpack.c.l.b16 %v964
      %v1439 = vunpack.c.l.b16 %v965
      %v1440 = vunpack.c.l.b16 %v966
      %v1441 = vunpack.c.l.b16 %v967
      %v1442 = vunpack.c.l.b16 %v968
      %v1443 = vpack.c.b16 %v1424, %v1423
      %v1444 = vpack.c.b16 %v1426, %v1425
      %v1445 = vpack.c.b16 %v1428, %v1427
      %v1446 = vpack.c.b16 %v1430, %v1429
      %v1447 = vpack.c.b16 %v1432, %v1431
      %v1448 = vpack.c.b16 %v1434, %v1433
      %v1449 = vpack.c.b16 %v1436, %v1435
      %v1450 = vpack.c.b16 %v1438, %v1437
      %v1451 = vpack.c.b16 %v1440, %v1439
      %v1452 = vpack.c.b16 %v1442, %v1441
      %v1454 = vsel %vm1255, %v1443, 0
      %v1457 = vsel %vm1255, %v1444, 0
      %v1460 = vsel %vm1255, %v1445, 0
      %v1463 = vsel %vm1255, %v1446, 0
      %v1466 = vsel %vm1255, %v1447, 0
      %v1469 = vsel %vm1255, %v1448, 0
      %v1472 = vsel %vm1255, %v1449, 0
      %v1475 = vsel %vm1255, %v1450, 0
      %v1478 = vsel %vm1255, %v1451, 0
      %v1481 = vsel %vm1255, %v1452, 0
      %v1484 = vsel %vm1286, %v969, 0
      %1486 = vmatprep.subr.bf16.mxu0 0
      %1487 = vmatpush1.bf16.msra.mxu0 %v1484
      %1488 = vmatprep.subr.bf16.mxu0 0
      %1489 = vmatpush1.bf16.msra.mxu0 0
      %1490 = vmatprep.subr.bf16.mxu0 0
      %1491 = vmatpush1.bf16.msra.mxu0 0
      %1492 = vmatprep.subr.bf16.mxu0 0
      %1493 = vmatpush1.bf16.msra.mxu0 0
      %1494 = vmatprep.subr.bf16.mxu0 0
      %1495 = vmatpush1.bf16.msra.mxu0 0
      %1496 = vmatprep.subr.bf16.mxu0 0
      %1497 = vmatpush1.bf16.msra.mxu0 0
      %1498 = vmatprep.subr.bf16.mxu0 0
      %1499 = vmatpush1.bf16.msra.mxu0 0
      %1500 = vmatprep.subr.bf16.mxu0 0
      %1501 = vmatpush1.bf16.msra.mxu0 0
      %1502 = vmatprep.subr.bf16.mxu0 0
      %1503 = vmatpush1.bf16.msra.mxu0 0
      %1504 = vmatprep.subr.bf16.mxu0 0
      %1505 = vmatpush1.bf16.msra.mxu0 0
      %1506 = vmatprep.subr.bf16.mxu0 0
      %1507 = vmatpush1.bf16.msra.mxu0 0
      %1508 = vmatprep.subr.bf16.mxu0 0
      %1509 = vmatpush1.bf16.msra.mxu0 0
      %1510 = vmatprep.subr.bf16.mxu0 0
      %1511 = vmatpush1.bf16.msra.mxu0 0
      %1512 = vmatprep.subr.bf16.mxu0 0
      %1513 = vmatpush1.bf16.msra.mxu0 0
      %1514 = vmatprep.subr.bf16.mxu0 0
      %1515 = vmatpush1.bf16.msra.mxu0 0
      %1516 = vmatprep.subr.bf16.mxu0 0
      %1517 = vmatpush1.bf16.msra.mxu0 0
      %1518 = vmatprep.mubr.bf16.mxu0 0
      %1519 = vmatmul.mubr.bf16.gmra.mrb[0].mxu0 %v1454
      %v1520 = vpop.f32.mrb[0].mxu0
      %v1521 = vadd.f32 %v1325, %v1520
      %v1522 = vpop.f32.mrb[0].mxu0
      %v1523 = vpop.f32.mrb[0].mxu0
      %v1524 = vadd.f32 %v1328, %v1523
      %v1525 = vpop.f32.mrb[0].mxu0
      %1526 = vmatprep.mubr.bf16.mxu0 0
      %1527 = vmatmul.mubr.bf16.gmra.mrb[0].mxu0 %v1457
      %v1528 = vpop.f32.mrb[0].mxu0
      %v1529 = vadd.f32 %v1333, %v1528
      %v1530 = vpop.f32.mrb[0].mxu0
      %v1531 = vpop.f32.mrb[0].mxu0
      %v1532 = vadd.f32 %v1336, %v1531
      %v1533 = vpop.f32.mrb[0].mxu0
      %1534 = vmatprep.mubr.bf16.mxu0 0
      %1535 = vmatmul.mubr.bf16.gmra.mrb[0].mxu0 %v1460
      %v1536 = vpop.f32.mrb[0].mxu0
      %v1537 = vadd.f32 %v1341, %v1536
      %v1538 = vpop.f32.mrb[0].mxu0
      %v1539 = vpop.f32.mrb[0].mxu0
      %v1540 = vadd.f32 %v1344, %v1539
      %v1541 = vpop.f32.mrb[0].mxu0
      %1542 = vmatprep.mubr.bf16.mxu0 0
      %1543 = vmatmul.mubr.bf16.gmra.mrb[0].mxu0 %v1463
      %v1544 = vpop.f32.mrb[0].mxu0
      %v1545 = vadd.f32 %v1349, %v1544
      %v1546 = vpop.f32.mrb[0].mxu0
      %v1547 = vpop.f32.mrb[0].mxu0
      %v1548 = vadd.f32 %v1352, %v1547
      %v1549 = vpop.f32.mrb[0].mxu0
      %1550 = vmatprep.mubr.bf16.mxu0 0
      %1551 = vmatmul.mubr.bf16.gmra.mrb[0].mxu0 %v1466
      %v1552 = vpop.f32.mrb[0].mxu0
      %v1553 = vadd.f32 %v1357, %v1552
      %v1554 = vpop.f32.mrb[0].mxu0
      %v1555 = vpop.f32.mrb[0].mxu0
      %v1556 = vadd.f32 %v1360, %v1555
      %v1557 = vpop.f32.mrb[0].mxu0
      %1558 = vmatprep.mubr.bf16.mxu0 0
      %1559 = vmatmul.mubr.bf16.gmra.mrb[0].mxu0 %v1469
      %v1560 = vpop.f32.mrb[0].mxu0
      %v1561 = vadd.f32 %v1365, %v1560
      %v1562 = vpop.f32.mrb[0].mxu0
      %v1563 = vpop.f32.mrb[0].mxu0
      %v1564 = vadd.f32 %v1368, %v1563
      %v1565 = vpop.f32.mrb[0].mxu0
      %1566 = vmatprep.mubr.bf16.mxu0 0
      %1567 = vmatmul.mubr.bf16.gmra.mrb[0].mxu0 %v1472
      %v1568 = vpop.f32.mrb[0].mxu0
      %v1569 = vadd.f32 %v1373, %v1568
      %v1570 = vpop.f32.mrb[0].mxu0
      %v1571 = vpop.f32.mrb[0].mxu0
      %v1572 = vadd.f32 %v1376, %v1571
      %v1573 = vpop.f32.mrb[0].mxu0
      %1574 = vmatprep.mubr.bf16.mxu0 0
      %1575 = vmatmul.mubr.bf16.gmra.mrb[0].mxu0 %v1475
      %v1576 = vpop.f32.mrb[0].mxu0
      %v1577 = vadd.f32 %v1381, %v1576
      %v1578 = vpop.f32.mrb[0].mxu0
      %v1579 = vpop.f32.mrb[0].mxu0
      %v1580 = vadd.f32 %v1384, %v1579
      %v1581 = vpop.f32.mrb[0].mxu0
      %1582 = vmatprep.mubr.bf16.mxu0 0
      %1583 = vmatmul.mubr.bf16.gmra.mrb[0].mxu0 %v1478
      %v1584 = vpop.f32.mrb[0].mxu0
      %v1585 = vadd.f32 %v1389, %v1584
      %v1586 = vpop.f32.mrb[0].mxu0
      %v1587 = vpop.f32.mrb[0].mxu0
      %v1588 = vadd.f32 %v1392, %v1587
      %v1589 = vpop.f32.mrb[0].mxu0
      %1590 = vmatprep.mubr.bf16.mxu0 0
      %1591 = vmatmul.mubr.bf16.gmra.mrb[0].mxu0 %v1481
      %v1592 = vpop.f32.mrb[0].mxu0
      %v1593 = vadd.f32 %v1397, %v1592
      %v1594 = vpop.f32.mrb[0].mxu0
      %v1595 = vpop.f32.mrb[0].mxu0
      %v1596 = vadd.f32 %v1400, %v1595
      %v1597 = vpop.f32.mrb[0].mxu0
      %1598 = vdwg.mxu0
      %v1599 = vld [vmem:[#allocation2] sm:$0xe]
      %v1600 = vld [vmem:[#allocation2 + $0xc] sm:$0xe]
      %v1601 = vld [vmem:[#allocation2 + $0x18] sm:$0xe]
      %v1602 = vld [vmem:[#allocation2 + $0x24] sm:$0xe]
      %v1603 = vld [vmem:[#allocation2 + $0x30] sm:$0xe]
      %v1604 = vld [vmem:[#allocation2 + $0x3c] sm:$0xe]
      %v1605 = vld [vmem:[#allocation2 + $0x48] sm:$0xe]
      %v1606 = vld [vmem:[#allocation2 + $0x54] sm:$0xe]
      %v1607 = vld [vmem:[#allocation2 + $0x60] sm:$0xe]
      %v1608 = vld [vmem:[#allocation2 + $0x6c] sm:$0xe]
      %vm1629 = vcmask 1042432
      %vm1630 = vcmask 1046532
      %vm1631 = vmor %vm1629, %vm1630
      %v1632 = vrot.slane %v1599, 5
      %v1633 = vrot.slane %v1632, 4
      %v1634 = vrot.slane %v950, 5
      %v1635 = vsel %vm1631, %v1633, %v1634
      %v1636 = vrot.slane %v1634, 4
      %v1637 = vrot.slane %v970, 5
      %v1638 = vsel %vm1631, %v1636, %v1637
      %v1639 = vrot.slane %v1600, 5
      %v1640 = vrot.slane %v1639, 4
      %v1641 = vrot.slane %v952, 5
      %v1642 = vsel %vm1631, %v1640, %v1641
      %v1643 = vrot.slane %v1641, 4
      %v1644 = vrot.slane %v971, 5
      %v1645 = vsel %vm1631, %v1643, %v1644
      %v1646 = vrot.slane %v1601, 5
      %v1647 = vrot.slane %v1646, 4
      %v1648 = vrot.slane %v954, 5
      %v1649 = vsel %vm1631, %v1647, %v1648
      %v1650 = vrot.slane %v1648, 4
      %v1651 = vrot.slane %v972, 5
      %v1652 = vsel %vm1631, %v1650, %v1651
      %v1653 = vrot.slane %v1602, 5
      %v1654 = vrot.slane %v1653, 4
      %v1655 = vrot.slane %v956, 5
      %v1656 = vsel %vm1631, %v1654, %v1655
      %v1657 = vrot.slane %v1655, 4
      %v1658 = vrot.slane %v973, 5
      %v1659 = vsel %vm1631, %v1657, %v1658
      %v1660 = vrot.slane %v1603, 5
      %v1661 = vrot.slane %v1660, 4
      %v1662 = vrot.slane %v958, 5
      %v1663 = vsel %vm1631, %v1661, %v1662
      %v1664 = vrot.slane %v1662, 4
      %v1665 = vrot.slane %v974, 5
      %v1666 = vsel %vm1631, %v1664, %v1665
      %v1667 = vrot.slane %v1604, 5
      %v1668 = vrot.slane %v1667, 4
      %v1669 = vrot.slane %v960, 5
      %v1670 = vsel %vm1631, %v1668, %v1669
      %v1671 = vrot.slane %v1669, 4
      %v1672 = vrot.slane %v975, 5
      %v1673 = vsel %vm1631, %v1671, %v1672
      %v1674 = vrot.slane %v1605, 5
      %v1675 = vrot.slane %v1674, 4
      %v1676 = vrot.slane %v962, 5
      %v1677 = vsel %vm1631, %v1675, %v1676
      %v1678 = vrot.slane %v1676, 4
      %v1679 = vrot.slane %v976, 5
      %v1680 = vsel %vm1631, %v1678, %v1679
      %v1681 = vrot.slane %v1606, 5
      %v1682 = vrot.slane %v1681, 4
      %v1683 = vrot.slane %v964, 5
      %v1684 = vsel %vm1631, %v1682, %v1683
      %v1685 = vrot.slane %v1683, 4
      %v1686 = vrot.slane %v977, 5
      %v1687 = vsel %vm1631, %v1685, %v1686
      %v1688 = vrot.slane %v1607, 5
      %v1689 = vrot.slane %v1688, 4
      %v1690 = vrot.slane %v966, 5
      %v1691 = vsel %vm1631, %v1689, %v1690
      %v1692 = vrot.slane %v1690, 4
      %v1693 = vrot.slane %v978, 5
      %v1694 = vsel %vm1631, %v1692, %v1693
      %v1695 = vrot.slane %v1608, 5
      %v1696 = vrot.slane %v1695, 4
      %v1697 = vrot.slane %v968, 5
      %v1698 = vsel %vm1631, %v1696, %v1697
      %v1699 = vrot.slane %v1697, 4
      %v1700 = vrot.slane %v979, 5
      %v1701 = vsel %vm1631, %v1699, %v1700
      %s1702 = scalar_lea.vmem %s3, 4
      %v1703 = vld [vmem:[%s1702] sm:$0x3]
      %v1704 = vunpack.c.l.b16 %v1635
      %v1705 = vunpack.c.l.b16 %v1638
      %v1706 = vunpack.c.l.b16 %v1642
      %v1707 = vunpack.c.l.b16 %v1645
      %v1708 = vunpack.c.l.b16 %v1649
      %v1709 = vunpack.c.l.b16 %v1652
      %v1710 = vunpack.c.l.b16 %v1656
      %v1711 = vunpack.c.l.b16 %v1659
      %v1712 = vunpack.c.l.b16 %v1663
      %v1713 = vunpack.c.l.b16 %v1666
      %v1714 = vunpack.c.l.b16 %v1670
      %v1715 = vunpack.c.l.b16 %v1673
      %v1716 = vunpack.c.l.b16 %v1677
      %v1717 = vunpack.c.l.b16 %v1680
      %v1718 = vunpack.c.l.b16 %v1684
      %v1719 = vunpack.c.l.b16 %v1687
      %v1720 = vunpack.c.l.b16 %v1691
      %v1721 = vunpack.c.l.b16 %v1694
      %v1722 = vunpack.c.l.b16 %v1698
      %v1723 = vunpack.c.l.b16 %v1701
      %v1724 = vpack.c.b16 %v1705, %v1704
      %v1725 = vpack.c.b16 %v1707, %v1706
      %v1726 = vpack.c.b16 %v1709, %v1708
      %v1727 = vpack.c.b16 %v1711, %v1710
      %v1728 = vpack.c.b16 %v1713, %v1712
      %v1729 = vpack.c.b16 %v1715, %v1714
      %v1730 = vpack.c.b16 %v1717, %v1716
      %v1731 = vpack.c.b16 %v1719, %v1718
      %v1732 = vpack.c.b16 %v1721, %v1720
      %v1733 = vpack.c.b16 %v1723, %v1722
      %v1735 = vsel %vm1255, %v1724, 0
      %v1738 = vsel %vm1255, %v1725, 0
      %v1741 = vsel %vm1255, %v1726, 0
      %v1744 = vsel %vm1255, %v1727, 0
      %v1747 = vsel %vm1255, %v1728, 0
      %v1750 = vsel %vm1255, %v1729, 0
      %v1753 = vsel %vm1255, %v1730, 0
      %v1756 = vsel %vm1255, %v1731, 0
      %v1759 = vsel %vm1255, %v1732, 0
      %v1762 = vsel %vm1255, %v1733, 0
      %v1765 = vsel %vm1286, %v1703, 0
      %1767 = vmatprep.subr.bf16.mxu0 0
      %1768 = vmatpush1.bf16.msra.mxu0 %v1765
      %1769 = vmatprep.subr.bf16.mxu0 0
      %1770 = vmatpush1.bf16.msra.mxu0 0
      %1771 = vmatprep.subr.bf16.mxu0 0
      %1772 = vmatpush1.bf16.msra.mxu0 0
      %1773 = vmatprep.subr.bf16.mxu0 0
      %1774 = vmatpush1.bf16.msra.mxu0 0
      %1775 = vmatprep.subr.bf16.mxu0 0
      %1776 = vmatpush1.bf16.msra.mxu0 0
      %1777 = vmatprep.subr.bf16.mxu0 0
      %1778 = vmatpush1.bf16.msra.mxu0 0
      %1779 = vmatprep.subr.bf16.mxu0 0
      %1780 = vmatpush1.bf16.msra.mxu0 0
      %1781 = vmatprep.subr.bf16.mxu0 0
      %1782 = vmatpush1.bf16.msra.mxu0 0
      %1783 = vmatprep.subr.bf16.mxu0 0
      %1784 = vmatpush1.bf16.msra.mxu0 0
      %1785 = vmatprep.subr.bf16.mxu0 0
      %1786 = vmatpush1.bf16.msra.mxu0 0
      %1787 = vmatprep.subr.bf16.mxu0 0
      %1788 = vmatpush1.bf16.msra.mxu0 0
      %1789 = vmatprep.subr.bf16.mxu0 0
      %1790 = vmatpush1.bf16.msra.mxu0 0
      %1791 = vmatprep.subr.bf16.mxu0 0
      %1792 = vmatpush1.bf16.msra.mxu0 0
      %1793 = vmatprep.subr.bf16.mxu0 0
      %1794 = vmatpush1.bf16.msra.mxu0 0
      %1795 = vmatprep.subr.bf16.mxu0 0
      %1796 = vmatpush1.bf16.msra.mxu0 0
      %1797 = vmatprep.subr.bf16.mxu0 0
      %1798 = vmatpush1.bf16.msra.mxu0 0
      %1799 = vmatprep.mubr.bf16.mxu0 0
      %1800 = vmatmul.mubr.bf16.gmra.mrb[0].mxu0 %v1735
      %v1801 = vpop.f32.mrb[0].mxu0
      %v1802 = vadd.f32 0.0, %v1801
      %v1803 = vpop.f32.mrb[0].mxu0
      %v1804 = vpop.f32.mrb[0].mxu0
      %v1805 = vadd.f32 0.0, %v1804
      %v1806 = vpop.f32.mrb[0].mxu0
      %1807 = vmatprep.mubr.bf16.mxu0 0
      %1808 = vmatmul.mubr.bf16.gmra.mrb[0].mxu0 %v1738
      %v1809 = vpop.f32.mrb[0].mxu0
      %v1810 = vadd.f32 0.0, %v1809
      %v1811 = vpop.f32.mrb[0].mxu0
      %v1812 = vpop.f32.mrb[0].mxu0
      %v1813 = vadd.f32 0.0, %v1812
      %v1814 = vpop.f32.mrb[0].mxu0
      %1815 = vmatprep.mubr.bf16.mxu0 0
      %1816 = vmatmul.mubr.bf16.gmra.mrb[0].mxu0 %v1741
      %v1817 = vpop.f32.mrb[0].mxu0
      %v1818 = vadd.f32 0.0, %v1817
      %v1819 = vpop.f32.mrb[0].mxu0
      %v1820 = vpop.f32.mrb[0].mxu0
      %v1821 = vadd.f32 0.0, %v1820
      %v1822 = vpop.f32.mrb[0].mxu0
      %1823 = vmatprep.mubr.bf16.mxu0 0
      %1824 = vmatmul.mubr.bf16.gmra.mrb[0].mxu0 %v1744
      %v1825 = vpop.f32.mrb[0].mxu0
      %v1826 = vadd.f32 0.0, %v1825
      %v1827 = vpop.f32.mrb[0].mxu0
      %v1828 = vpop.f32.mrb[0].mxu0
      %v1829 = vadd.f32 0.0, %v1828
      %v1830 = vpop.f32.mrb[0].mxu0
      %1831 = vmatprep.mubr.bf16.mxu0 0
      %1832 = vmatmul.mubr.bf16.gmra.mrb[0].mxu0 %v1747
      %v1833 = vpop.f32.mrb[0].mxu0
      %v1834 = vadd.f32 0.0, %v1833
      %v1835 = vpop.f32.mrb[0].mxu0
      %v1836 = vpop.f32.mrb[0].mxu0
      %v1837 = vadd.f32 0.0, %v1836
      %v1838 = vpop.f32.mrb[0].mxu0
      %1839 = vmatprep.mubr.bf16.mxu0 0
      %1840 = vmatmul.mubr.bf16.gmra.mrb[0].mxu0 %v1750
      %v1841 = vpop.f32.mrb[0].mxu0
      %v1842 = vadd.f32 0.0, %v1841
      %v1843 = vpop.f32.mrb[0].mxu0
      %v1844 = vpop.f32.mrb[0].mxu0
      %v1845 = vadd.f32 0.0, %v1844
      %v1846 = vpop.f32.mrb[0].mxu0
      %1847 = vmatprep.mubr.bf16.mxu0 0
      %1848 = vmatmul.mubr.bf16.gmra.mrb[0].mxu0 %v1753
      %v1849 = vpop.f32.mrb[0].mxu0
      %v1850 = vadd.f32 0.0, %v1849
      %v1851 = vpop.f32.mrb[0].mxu0
      %v1852 = vpop.f32.mrb[0].mxu0
      %v1853 = vadd.f32 0.0, %v1852
      %v1854 = vpop.f32.mrb[0].mxu0
      %1855 = vmatprep.mubr.bf16.mxu0 0
      %1856 = vmatmul.mubr.bf16.gmra.mrb[0].mxu0 %v1756
      %v1857 = vpop.f32.mrb[0].mxu0
      %v1858 = vadd.f32 0.0, %v1857
      %v1859 = vpop.f32.mrb[0].mxu0
      %v1860 = vpop.f32.mrb[0].mxu0
      %v1861 = vadd.f32 0.0, %v1860
      %v1862 = vpop.f32.mrb[0].mxu0
      %1863 = vmatprep.mubr.bf16.mxu0 0
      %1864 = vmatmul.mubr.bf16.gmra.mrb[0].mxu0 %v1759
      %v1865 = vpop.f32.mrb[0].mxu0
      %v1866 = vadd.f32 0.0, %v1865
      %v1867 = vpop.f32.mrb[0].mxu0
      %v1868 = vpop.f32.mrb[0].mxu0
      %v1869 = vadd.f32 0.0, %v1868
      %v1870 = vpop.f32.mrb[0].mxu0
      %1871 = vmatprep.mubr.bf16.mxu0 0
      %1872 = vmatmul.mubr.bf16.gmra.mrb[0].mxu0 %v1762
      %v1873 = vpop.f32.mrb[0].mxu0
      %v1874 = vadd.f32 0.0, %v1873
      %v1875 = vpop.f32.mrb[0].mxu0
      %v1876 = vpop.f32.mrb[0].mxu0
      %v1877 = vadd.f32 0.0, %v1876
      %v1878 = vpop.f32.mrb[0].mxu0
      %1879 = vdwg.mxu0
      %v1880 = vadd.f32 %v1521, %v1802
      %v1881 = vadd.f32 %v1524, %v1805
      %v1882 = vadd.f32 %v1529, %v1810
      %v1883 = vadd.f32 %v1532, %v1813
      %v1884 = vadd.f32 %v1537, %v1818
      %v1885 = vadd.f32 %v1540, %v1821
      %v1886 = vadd.f32 %v1545, %v1826
      %v1887 = vadd.f32 %v1548, %v1829
      %v1888 = vadd.f32 %v1553, %v1834
      %v1889 = vadd.f32 %v1556, %v1837
      %v1890 = vadd.f32 %v1561, %v1842
      %v1891 = vadd.f32 %v1564, %v1845
      %v1892 = vadd.f32 %v1569, %v1850
      %v1893 = vadd.f32 %v1572, %v1853
      %v1894 = vadd.f32 %v1577, %v1858
      %v1895 = vadd.f32 %v1580, %v1861
      %v1896 = vadd.f32 %v1585, %v1866
      %v1897 = vadd.f32 %v1588, %v1869
      %v1898 = vadd.f32 %v1593, %v1874
      %v1899 = vadd.f32 %v1596, %v1877
      %s1900 = scalar_lea.vmem [#allocation2], 12
      %v1901 = vld [vmem:[%s1900] sm:$0xf]
      %v1902 = vld [vmem:[%s1900 + $0x4] sm:$0xf]
      %v1903 = vld [vmem:[%s1900 + $0xc] sm:$0xf]
      %v1904 = vld [vmem:[%s1900 + $0x10] sm:$0xf]
      %v1905 = vld [vmem:[%s1900 + $0x18] sm:$0xf]
      %v1906 = vld [vmem:[%s1900 + $0x1c] sm:$0xf]
      %v1907 = vld [vmem:[%s1900 + $0x24] sm:$0xf]
      %v1908 = vld [vmem:[%s1900 + $0x28] sm:$0xf]
      %v1909 = vld [vmem:[%s1900 + $0x30] sm:$0xf]
      %v1910 = vld [vmem:[%s1900 + $0x34] sm:$0xf]
      %v1911 = vld [vmem:[%s1900 + $0x3c] sm:$0xf]
      %v1912 = vld [vmem:[%s1900 + $0x40] sm:$0xf]
      %v1913 = vld [vmem:[%s1900 + $0x48] sm:$0xf]
      %v1914 = vld [vmem:[%s1900 + $0x4c] sm:$0xf]
      %v1915 = vld [vmem:[%s1900 + $0x54] sm:$0xf]
      %v1916 = vld [vmem:[%s1900 + $0x58] sm:$0xf]
      %v1917 = vld [vmem:[%s1900 + $0x60] sm:$0xf]
      %v1918 = vld [vmem:[%s1900 + $0x64] sm:$0xf]
      %v1919 = vld [vmem:[%s1900 + $0x6c] sm:$0xf]
      %v1920 = vld [vmem:[%s1900 + $0x70] sm:$0xf]
      %s1921 = scalar_lea.vmem %s3, 6
      %v1922 = vld [vmem:[%s1921] sm:$0x3]
      %v1943 = vunpack.c.l.b16 %v1901
      %v1944 = vunpack.c.l.b16 %v1902
      %v1945 = vunpack.c.l.b16 %v1903
      %v1946 = vunpack.c.l.b16 %v1904
      %v1947 = vunpack.c.l.b16 %v1905
      %v1948 = vunpack.c.l.b16 %v1906
      %v1949 = vunpack.c.l.b16 %v1907
      %v1950 = vunpack.c.l.b16 %v1908
      %v1951 = vunpack.c.l.b16 %v1909
      %v1952 = vunpack.c.l.b16 %v1910
      %v1953 = vunpack.c.l.b16 %v1911
      %v1954 = vunpack.c.l.b16 %v1912
      %v1955 = vunpack.c.l.b16 %v1913
      %v1956 = vunpack.c.l.b16 %v1914
      %v1957 = vunpack.c.l.b16 %v1915
      %v1958 = vunpack.c.l.b16 %v1916
      %v1959 = vunpack.c.l.b16 %v1917
      %v1960 = vunpack.c.l.b16 %v1918
      %v1961 = vunpack.c.l.b16 %v1919
      %v1962 = vunpack.c.l.b16 %v1920
      %v1963 = vpack.c.b16 %v1944, %v1943
      %v1964 = vpack.c.b16 %v1946, %v1945
      %v1965 = vpack.c.b16 %v1948, %v1947
      %v1966 = vpack.c.b16 %v1950, %v1949
      %v1967 = vpack.c.b16 %v1952, %v1951
      %v1968 = vpack.c.b16 %v1954, %v1953
      %v1969 = vpack.c.b16 %v1956, %v1955
      %v1970 = vpack.c.b16 %v1958, %v1957
      %v1971 = vpack.c.b16 %v1960, %v1959
      %v1972 = vpack.c.b16 %v1962, %v1961
      %v1974 = vsel %vm1255, %v1963, 0
      %v1977 = vsel %vm1255, %v1964, 0
      %v1980 = vsel %vm1255, %v1965, 0
      %v1983 = vsel %vm1255, %v1966, 0
      %v1986 = vsel %vm1255, %v1967, 0
      %v1989 = vsel %vm1255, %v1968, 0
      %v1992 = vsel %vm1255, %v1969, 0
      %v1995 = vsel %vm1255, %v1970, 0
      %v1998 = vsel %vm1255, %v1971, 0
      %v2001 = vsel %vm1255, %v1972, 0
      %v2004 = vsel %vm1286, %v1922, 0
      %2006 = vmatprep.subr.bf16.mxu0 0
      %2007 = vmatpush1.bf16.msra.mxu0 %v2004
      %2008 = vmatprep.subr.bf16.mxu0 0
      %2009 = vmatpush1.bf16.msra.mxu0 0
      %2010 = vmatprep.subr.bf16.mxu0 0
      %2011 = vmatpush1.bf16.msra.mxu0 0
      %2012 = vmatprep.subr.bf16.mxu0 0
      %2013 = vmatpush1.bf16.msra.mxu0 0
      %2014 = vmatprep.subr.bf16.mxu0 0
      %2015 = vmatpush1.bf16.msra.mxu0 0
      %2016 = vmatprep.subr.bf16.mxu0 0
      %2017 = vmatpush1.bf16.msra.mxu0 0
      %2018 = vmatprep.subr.bf16.mxu0 0
      %2019 = vmatpush1.bf16.msra.mxu0 0
      %2020 = vmatprep.subr.bf16.mxu0 0
      %2021 = vmatpush1.bf16.msra.mxu0 0
      %2022 = vmatprep.subr.bf16.mxu0 0
      %2023 = vmatpush1.bf16.msra.mxu0 0
      %2024 = vmatprep.subr.bf16.mxu0 0
      %2025 = vmatpush1.bf16.msra.mxu0 0
      %2026 = vmatprep.subr.bf16.mxu0 0
      %2027 = vmatpush1.bf16.msra.mxu0 0
      %2028 = vmatprep.subr.bf16.mxu0 0
      %2029 = vmatpush1.bf16.msra.mxu0 0
      %2030 = vmatprep.subr.bf16.mxu0 0
      %2031 = vmatpush1.bf16.msra.mxu0 0
      %2032 = vmatprep.subr.bf16.mxu0 0
      %2033 = vmatpush1.bf16.msra.mxu0 0
      %2034 = vmatprep.subr.bf16.mxu0 0
      %2035 = vmatpush1.bf16.msra.mxu0 0
      %2036 = vmatprep.subr.bf16.mxu0 0
      %2037 = vmatpush1.bf16.msra.mxu0 0
      %2038 = vmatprep.mubr.bf16.mxu0 0
      %2039 = vmatmul.mubr.bf16.gmra.mrb[0].mxu0 %v1974
      %v2040 = vpop.f32.mrb[0].mxu0
      %v2041 = vadd.f32 0.0, %v2040
      %v2042 = vpop.f32.mrb[0].mxu0
      %v2043 = vpop.f32.mrb[0].mxu0
      %v2044 = vadd.f32 0.0, %v2043
      %v2045 = vpop.f32.mrb[0].mxu0
      %2046 = vmatprep.mubr.bf16.mxu0 0
      %2047 = vmatmul.mubr.bf16.gmra.mrb[0].mxu0 %v1977
      %v2048 = vpop.f32.mrb[0].mxu0
      %v2049 = vadd.f32 0.0, %v2048
      %v2050 = vpop.f32.mrb[0].mxu0
      %v2051 = vpop.f32.mrb[0].mxu0
      %v2052 = vadd.f32 0.0, %v2051
      %v2053 = vpop.f32.mrb[0].mxu0
      %2054 = vmatprep.mubr.bf16.mxu0 0
      %2055 = vmatmul.mubr.bf16.gmra.mrb[0].mxu0 %v1980
      %v2056 = vpop.f32.mrb[0].mxu0
      %v2057 = vadd.f32 0.0, %v2056
      %v2058 = vpop.f32.mrb[0].mxu0
      %v2059 = vpop.f32.mrb[0].mxu0
      %v2060 = vadd.f32 0.0, %v2059
      %v2061 = vpop.f32.mrb[0].mxu0
      %2062 = vmatprep.mubr.bf16.mxu0 0
      %2063 = vmatmul.mubr.bf16.gmra.mrb[0].mxu0 %v1983
      %v2064 = vpop.f32.mrb[0].mxu0
      %v2065 = vadd.f32 0.0, %v2064
      %v2066 = vpop.f32.mrb[0].mxu0
      %v2067 = vpop.f32.mrb[0].mxu0
      %v2068 = vadd.f32 0.0, %v2067
      %v2069 = vpop.f32.mrb[0].mxu0
      %2070 = vmatprep.mubr.bf16.mxu0 0
      %2071 = vmatmul.mubr.bf16.gmra.mrb[0].mxu0 %v1986
      %v2072 = vpop.f32.mrb[0].mxu0
      %v2073 = vadd.f32 0.0, %v2072
      %v2074 = vpop.f32.mrb[0].mxu0
      %v2075 = vpop.f32.mrb[0].mxu0
      %v2076 = vadd.f32 0.0, %v2075
      %v2077 = vpop.f32.mrb[0].mxu0
      %2078 = vmatprep.mubr.bf16.mxu0 0
      %2079 = vmatmul.mubr.bf16.gmra.mrb[0].mxu0 %v1989
      %v2080 = vpop.f32.mrb[0].mxu0
      %v2081 = vadd.f32 0.0, %v2080
      %v2082 = vpop.f32.mrb[0].mxu0
      %v2083 = vpop.f32.mrb[0].mxu0
      %v2084 = vadd.f32 0.0, %v2083
      %v2085 = vpop.f32.mrb[0].mxu0
      %2086 = vmatprep.mubr.bf16.mxu0 0
      %2087 = vmatmul.mubr.bf16.gmra.mrb[0].mxu0 %v1992
      %v2088 = vpop.f32.mrb[0].mxu0
      %v2089 = vadd.f32 0.0, %v2088
      %v2090 = vpop.f32.mrb[0].mxu0
      %v2091 = vpop.f32.mrb[0].mxu0
      %v2092 = vadd.f32 0.0, %v2091
      %v2093 = vpop.f32.mrb[0].mxu0
      %2094 = vmatprep.mubr.bf16.mxu0 0
      %2095 = vmatmul.mubr.bf16.gmra.mrb[0].mxu0 %v1995
      %v2096 = vpop.f32.mrb[0].mxu0
      %v2097 = vadd.f32 0.0, %v2096
      %v2098 = vpop.f32.mrb[0].mxu0
      %v2099 = vpop.f32.mrb[0].mxu0
      %v2100 = vadd.f32 0.0, %v2099
      %v2101 = vpop.f32.mrb[0].mxu0
      %2102 = vmatprep.mubr.bf16.mxu0 0
      %2103 = vmatmul.mubr.bf16.gmra.mrb[0].mxu0 %v1998
      %v2104 = vpop.f32.mrb[0].mxu0
      %v2105 = vadd.f32 0.0, %v2104
      %v2106 = vpop.f32.mrb[0].mxu0
      %v2107 = vpop.f32.mrb[0].mxu0
      %v2108 = vadd.f32 0.0, %v2107
      %v2109 = vpop.f32.mrb[0].mxu0
      %2110 = vmatprep.mubr.bf16.mxu0 0
      %2111 = vmatmul.mubr.bf16.gmra.mrb[0].mxu0 %v2001
      %v2112 = vpop.f32.mrb[0].mxu0
      %v2113 = vadd.f32 0.0, %v2112
      %v2114 = vpop.f32.mrb[0].mxu0
      %v2115 = vpop.f32.mrb[0].mxu0
      %v2116 = vadd.f32 0.0, %v2115
      %v2117 = vpop.f32.mrb[0].mxu0
      %2118 = vdwg.mxu0
      %v2119 = vadd.f32 %v1880, %v2041
      %v2120 = vadd.f32 %v1881, %v2044
      %v2121 = vadd.f32 %v1882, %v2049
      %v2122 = vadd.f32 %v1883, %v2052
      %v2123 = vadd.f32 %v1884, %v2057
      %v2124 = vadd.f32 %v1885, %v2060
      %v2125 = vadd.f32 %v1886, %v2065
      %v2126 = vadd.f32 %v1887, %v2068
      %v2127 = vadd.f32 %v1888, %v2073
      %v2128 = vadd.f32 %v1889, %v2076
      %v2129 = vadd.f32 %v1890, %v2081
      %v2130 = vadd.f32 %v1891, %v2084
      %v2131 = vadd.f32 %v1892, %v2089
      %v2132 = vadd.f32 %v1893, %v2092
      %v2133 = vadd.f32 %v1894, %v2097
      %v2134 = vadd.f32 %v1895, %v2100
      %v2135 = vadd.f32 %v1896, %v2105
      %v2136 = vadd.f32 %v1897, %v2108
      %v2137 = vadd.f32 %v1898, %v2113
      %v2138 = vadd.f32 %v1899, %v2116
      %v2139 = vld [vmem:[%s1900] sm:$0xf]
      %v2140 = vld [vmem:[%s1900 + $0x4] sm:$0xf]
      %v2141 = vld [vmem:[%s1900 + $0x8] sm:$0x1]
      %v2142 = vld [vmem:[%s1900 + $0xc] sm:$0xf]
      %v2143 = vld [vmem:[%s1900 + $0x10] sm:$0xf]
      %v2144 = vld [vmem:[%s1900 + $0x14] sm:$0x1]
      %v2145 = vld [vmem:[%s1900 + $0x18] sm:$0xf]
      %v2146 = vld [vmem:[%s1900 + $0x1c] sm:$0xf]
      %v2147 = vld [vmem:[%s1900 + $0x20] sm:$0x1]
      %v2148 = vld [vmem:[%s1900 + $0x24] sm:$0xf]
      %v2149 = vld [vmem:[%s1900 + $0x28] sm:$0xf]
      %v2150 = vld [vmem:[%s1900 + $0x2c] sm:$0x1]
      %v2151 = vld [vmem:[%s1900 + $0x30] sm:$0xf]
      %v2152 = vld [vmem:[%s1900 + $0x34] sm:$0xf]
      %v2153 = vld [vmem:[%s1900 + $0x38] sm:$0x1]
      %v2154 = vld [vmem:[%s1900 + $0x3c] sm:$0xf]
      %v2155 = vld [vmem:[%s1900 + $0x40] sm:$0xf]
      %v2156 = vld [vmem:[%s1900 + $0x44] sm:$0x1]
      %v2157 = vld [vmem:[%s1900 + $0x48] sm:$0xf]
      %v2158 = vld [vmem:[%s1900 + $0x4c] sm:$0xf]
      %v2159 = vld [vmem:[%s1900 + $0x50] sm:$0x1]
      %v2160 = vld [vmem:[%s1900 + $0x54] sm:$0xf]
      %v2161 = vld [vmem:[%s1900 + $0x58] sm:$0xf]
      %v2162 = vld [vmem:[%s1900 + $0x5c] sm:$0x1]
      %v2163 = vld [vmem:[%s1900 + $0x60] sm:$0xf]
      %v2164 = vld [vmem:[%s1900 + $0x64] sm:$0xf]
      %v2165 = vld [vmem:[%s1900 + $0x68] sm:$0x1]
      %v2166 = vld [vmem:[%s1900 + $0x6c] sm:$0xf]
      %v2167 = vld [vmem:[%s1900 + $0x70] sm:$0xf]
      %v2168 = vld [vmem:[%s1900 + $0x74] sm:$0x1]
      %v2170 = vshrl.u32 %v2139, 16
      %v2172 = vrot.slane %v2170, 4
      %v2173 = vshll.u32 %v2139, 16
      %v2175 = vrot.slane %v2173, 5
      %v2176 = vor.u32 %v2172, %v2175
      %v2177 = vrot.slane %v2176, 4
      %v2179 = vshll.u32 %v2140, 16
      %v2181 = vrot.slane %v2179, 5
      %v2182 = vsel %vm982, %v2177, %v2181
      %v2183 = vshrl.u32 %v2140, 16
      %v2185 = vrot.slane %v2183, 4
      %v2186 = vor.u32 %v2185, %v2181
      %v2187 = vrot.slane %v2186, 4
      %v2189 = vshll.u32 %v2141, 16
      %v2191 = vrot.slane %v2189, 5
      %v2192 = vsel %vm982, %v2187, %v2191
      %v2194 = vshrl.u32 %v2142, 16
      %v2196 = vrot.slane %v2194, 4
      %v2197 = vshll.u32 %v2142, 16
      %v2199 = vrot.slane %v2197, 5
      %v2200 = vor.u32 %v2196, %v2199
      %v2201 = vrot.slane %v2200, 4
      %v2203 = vshll.u32 %v2143, 16
      %v2205 = vrot.slane %v2203, 5
      %v2206 = vsel %vm982, %v2201, %v2205
      %v2207 = vshrl.u32 %v2143, 16
      %v2209 = vrot.slane %v2207, 4
      %v2210 = vor.u32 %v2209, %v2205
      %v2211 = vrot.slane %v2210, 4
      %v2213 = vshll.u32 %v2144, 16
      %v2215 = vrot.slane %v2213, 5
      %v2216 = vsel %vm982, %v2211, %v2215
      %v2218 = vshrl.u32 %v2145, 16
      %v2220 = vrot.slane %v2218, 4
      %v2221 = vshll.u32 %v2145, 16
      %v2223 = vrot.slane %v2221, 5
      %v2224 = vor.u32 %v2220, %v2223
      %v2225 = vrot.slane %v2224, 4
      %v2227 = vshll.u32 %v2146, 16
      %v2229 = vrot.slane %v2227, 5
      %v2230 = vsel %vm982, %v2225, %v2229
      %v2231 = vshrl.u32 %v2146, 16
      %v2233 = vrot.slane %v2231, 4
      %v2234 = vor.u32 %v2233, %v2229
      %v2235 = vrot.slane %v2234, 4
      %v2237 = vshll.u32 %v2147, 16
      %v2239 = vrot.slane %v2237, 5
      %v2240 = vsel %vm982, %v2235, %v2239
      %v2242 = vshrl.u32 %v2148, 16
      %v2244 = vrot.slane %v2242, 4
      %v2245 = vshll.u32 %v2148, 16
      %v2247 = vrot.slane %v2245, 5
      %v2248 = vor.u32 %v2244, %v2247
      %v2249 = vrot.slane %v2248, 4
      %v2251 = vshll.u32 %v2149, 16
      %v2253 = vrot.slane %v2251, 5
      %v2254 = vsel %vm982, %v2249, %v2253
      %v2255 = vshrl.u32 %v2149, 16
      %v2257 = vrot.slane %v2255, 4
      %v2258 = vor.u32 %v2257, %v2253
      %v2259 = vrot.slane %v2258, 4
      %v2261 = vshll.u32 %v2150, 16
      %v2263 = vrot.slane %v2261, 5
      %v2264 = vsel %vm982, %v2259, %v2263
      %v2266 = vshrl.u32 %v2151, 16
      %v2268 = vrot.slane %v2266, 4
      %v2269 = vshll.u32 %v2151, 16
      %v2271 = vrot.slane %v2269, 5
      %v2272 = vor.u32 %v2268, %v2271
      %v2273 = vrot.slane %v2272, 4
      %v2275 = vshll.u32 %v2152, 16
      %v2277 = vrot.slane %v2275, 5
      %v2278 = vsel %vm982, %v2273, %v2277
      %v2279 = vshrl.u32 %v2152, 16
      %v2281 = vrot.slane %v2279, 4
      %v2282 = vor.u32 %v2281, %v2277
      %v2283 = vrot.slane %v2282, 4
      %v2285 = vshll.u32 %v2153, 16
      %v2287 = vrot.slane %v2285, 5
      %v2288 = vsel %vm982, %v2283, %v2287
      %v2290 = vshrl.u32 %v2154, 16
      %v2292 = vrot.slane %v2290, 4
      %v2293 = vshll.u32 %v2154, 16
      %v2295 = vrot.slane %v2293, 5
      %v2296 = vor.u32 %v2292, %v2295
      %v2297 = vrot.slane %v2296, 4
      %v2299 = vshll.u32 %v2155, 16
      %v2301 = vrot.slane %v2299, 5
      %v2302 = vsel %vm982, %v2297, %v2301
      %v2303 = vshrl.u32 %v2155, 16
      %v2305 = vrot.slane %v2303, 4
      %v2306 = vor.u32 %v2305, %v2301
      %v2307 = vrot.slane %v2306, 4
      %v2309 = vshll.u32 %v2156, 16
      %v2311 = vrot.slane %v2309, 5
      %v2312 = vsel %vm982, %v2307, %v2311
      %v2314 = vshrl.u32 %v2157, 16
      %v2316 = vrot.slane %v2314, 4
      %v2317 = vshll.u32 %v2157, 16
      %v2319 = vrot.slane %v2317, 5
      %v2320 = vor.u32 %v2316, %v2319
      %v2321 = vrot.slane %v2320, 4
      %v2323 = vshll.u32 %v2158, 16
      %v2325 = vrot.slane %v2323, 5
      %v2326 = vsel %vm982, %v2321, %v2325
      %v2327 = vshrl.u32 %v2158, 16
      %v2329 = vrot.slane %v2327, 4
      %v2330 = vor.u32 %v2329, %v2325
      %v2331 = vrot.slane %v2330, 4
      %v2333 = vshll.u32 %v2159, 16
      %v2335 = vrot.slane %v2333, 5
      %v2336 = vsel %vm982, %v2331, %v2335
      %v2338 = vshrl.u32 %v2160, 16
      %v2340 = vrot.slane %v2338, 4
      %v2341 = vshll.u32 %v2160, 16
      %v2343 = vrot.slane %v2341, 5
      %v2344 = vor.u32 %v2340, %v2343
      %v2345 = vrot.slane %v2344, 4
      %v2347 = vshll.u32 %v2161, 16
      %v2349 = vrot.slane %v2347, 5
      %v2350 = vsel %vm982, %v2345, %v2349
      %v2351 = vshrl.u32 %v2161, 16
      %v2353 = vrot.slane %v2351, 4
      %v2354 = vor.u32 %v2353, %v2349
      %v2355 = vrot.slane %v2354, 4
      %v2357 = vshll.u32 %v2162, 16
      %v2359 = vrot.slane %v2357, 5
      %v2360 = vsel %vm982, %v2355, %v2359
      %v2362 = vshrl.u32 %v2163, 16
      %v2364 = vrot.slane %v2362, 4
      %v2365 = vshll.u32 %v2163, 16
      %v2367 = vrot.slane %v2365, 5
      %v2368 = vor.u32 %v2364, %v2367
      %v2369 = vrot.slane %v2368, 4
      %v2371 = vshll.u32 %v2164, 16
      %v2373 = vrot.slane %v2371, 5
      %v2374 = vsel %vm982, %v2369, %v2373
      %v2375 = vshrl.u32 %v2164, 16
      %v2377 = vrot.slane %v2375, 4
      %v2378 = vor.u32 %v2377, %v2373
      %v2379 = vrot.slane %v2378, 4
      %v2381 = vshll.u32 %v2165, 16
      %v2383 = vrot.slane %v2381, 5
      %v2384 = vsel %vm982, %v2379, %v2383
      %v2386 = vshrl.u32 %v2166, 16
      %v2388 = vrot.slane %v2386, 4
      %v2389 = vshll.u32 %v2166, 16
      %v2391 = vrot.slane %v2389, 5
      %v2392 = vor.u32 %v2388, %v2391
      %v2393 = vrot.slane %v2392, 4
      %v2395 = vshll.u32 %v2167, 16
      %v2397 = vrot.slane %v2395, 5
      %v2398 = vsel %vm982, %v2393, %v2397
      %v2399 = vshrl.u32 %v2167, 16
      %v2401 = vrot.slane %v2399, 4
      %v2402 = vor.u32 %v2401, %v2397
      %v2403 = vrot.slane %v2402, 4
      %v2405 = vshll.u32 %v2168, 16
      %v2407 = vrot.slane %v2405, 5
      %v2408 = vsel %vm982, %v2403, %v2407
      %s2409 = scalar_lea.vmem %s3, 8
      %v2410 = vld [vmem:[%s2409] sm:$0x3]
      %v2411 = vunpack.c.l.b16 %v2182
      %v2412 = vunpack.c.l.b16 %v2192
      %v2413 = vunpack.c.l.b16 %v2206
      %v2414 = vunpack.c.l.b16 %v2216
      %v2415 = vunpack.c.l.b16 %v2230
      %v2416 = vunpack.c.l.b16 %v2240
      %v2417 = vunpack.c.l.b16 %v2254
      %v2418 = vunpack.c.l.b16 %v2264
      %v2419 = vunpack.c.l.b16 %v2278
      %v2420 = vunpack.c.l.b16 %v2288
      %v2421 = vunpack.c.l.b16 %v2302
      %v2422 = vunpack.c.l.b16 %v2312
      %v2423 = vunpack.c.l.b16 %v2326
      %v2424 = vunpack.c.l.b16 %v2336
      %v2425 = vunpack.c.l.b16 %v2350
      %v2426 = vunpack.c.l.b16 %v2360
      %v2427 = vunpack.c.l.b16 %v2374
      %v2428 = vunpack.c.l.b16 %v2384
      %v2429 = vunpack.c.l.b16 %v2398
      %v2430 = vunpack.c.l.b16 %v2408
      %v2431 = vpack.c.b16 %v2412, %v2411
      %v2432 = vpack.c.b16 %v2414, %v2413
      %v2433 = vpack.c.b16 %v2416, %v2415
      %v2434 = vpack.c.b16 %v2418, %v2417
      %v2435 = vpack.c.b16 %v2420, %v2419
      %v2436 = vpack.c.b16 %v2422, %v2421
      %v2437 = vpack.c.b16 %v2424, %v2423
      %v2438 = vpack.c.b16 %v2426, %v2425
      %v2439 = vpack.c.b16 %v2428, %v2427
      %v2440 = vpack.c.b16 %v2430, %v2429
      %v2442 = vsel %vm1255, %v2431, 0
      %v2445 = vsel %vm1255, %v2432, 0
      %v2448 = vsel %vm1255, %v2433, 0
      %v2451 = vsel %vm1255, %v2434, 0
      %v2454 = vsel %vm1255, %v2435, 0
      %v2457 = vsel %vm1255, %v2436, 0
      %v2460 = vsel %vm1255, %v2437, 0
      %v2463 = vsel %vm1255, %v2438, 0
      %v2466 = vsel %vm1255, %v2439, 0
      %v2469 = vsel %vm1255, %v2440, 0
      %v2472 = vsel %vm1286, %v2410, 0
      %2474 = vmatprep.subr.bf16.mxu0 0
      %2475 = vmatpush1.bf16.msra.mxu0 %v2472
      %2476 = vmatprep.subr.bf16.mxu0 0
      %2477 = vmatpush1.bf16.msra.mxu0 0
      %2478 = vmatprep.subr.bf16.mxu0 0
      %2479 = vmatpush1.bf16.msra.mxu0 0
      %2480 = vmatprep.subr.bf16.mxu0 0
      %2481 = vmatpush1.bf16.msra.mxu0 0
      %2482 = vmatprep.subr.bf16.mxu0 0
      %2483 = vmatpush1.bf16.msra.mxu0 0
      %2484 = vmatprep.subr.bf16.mxu0 0
      %2485 = vmatpush1.bf16.msra.mxu0 0
      %2486 = vmatprep.subr.bf16.mxu0 0
      %2487 = vmatpush1.bf16.msra.mxu0 0
      %2488 = vmatprep.subr.bf16.mxu0 0
      %2489 = vmatpush1.bf16.msra.mxu0 0
      %2490 = vmatprep.subr.bf16.mxu0 0
      %2491 = vmatpush1.bf16.msra.mxu0 0
      %2492 = vmatprep.subr.bf16.mxu0 0
      %2493 = vmatpush1.bf16.msra.mxu0 0
      %2494 = vmatprep.subr.bf16.mxu0 0
      %2495 = vmatpush1.bf16.msra.mxu0 0
      %2496 = vmatprep.subr.bf16.mxu0 0
      %2497 = vmatpush1.bf16.msra.mxu0 0
      %2498 = vmatprep.subr.bf16.mxu0 0
      %2499 = vmatpush1.bf16.msra.mxu0 0
      %2500 = vmatprep.subr.bf16.mxu0 0
      %2501 = vmatpush1.bf16.msra.mxu0 0
      %2502 = vmatprep.subr.bf16.mxu0 0
      %2503 = vmatpush1.bf16.msra.mxu0 0
      %2504 = vmatprep.subr.bf16.mxu0 0
      %2505 = vmatpush1.bf16.msra.mxu0 0
      %2506 = vmatprep.mubr.bf16.mxu0 0
      %2507 = vmatmul.mubr.bf16.gmra.mrb[0].mxu0 %v2442
      %v2508 = vpop.f32.mrb[0].mxu0
      %v2509 = vadd.f32 0.0, %v2508
      %v2510 = vpop.f32.mrb[0].mxu0
      %v2511 = vpop.f32.mrb[0].mxu0
      %v2512 = vadd.f32 0.0, %v2511
      %v2513 = vpop.f32.mrb[0].mxu0
      %2514 = vmatprep.mubr.bf16.mxu0 0
      %2515 = vmatmul.mubr.bf16.gmra.mrb[0].mxu0 %v2445
      %v2516 = vpop.f32.mrb[0].mxu0
      %v2517 = vadd.f32 0.0, %v2516
      %v2518 = vpop.f32.mrb[0].mxu0
      %v2519 = vpop.f32.mrb[0].mxu0
      %v2520 = vadd.f32 0.0, %v2519
      %v2521 = vpop.f32.mrb[0].mxu0
      %2522 = vmatprep.mubr.bf16.mxu0 0
      %2523 = vmatmul.mubr.bf16.gmra.mrb[0].mxu0 %v2448
      %v2524 = vpop.f32.mrb[0].mxu0
      %v2525 = vadd.f32 0.0, %v2524
      %v2526 = vpop.f32.mrb[0].mxu0
      %v2527 = vpop.f32.mrb[0].mxu0
      %v2528 = vadd.f32 0.0, %v2527
      %v2529 = vpop.f32.mrb[0].mxu0
      %2530 = vmatprep.mubr.bf16.mxu0 0
      %2531 = vmatmul.mubr.bf16.gmra.mrb[0].mxu0 %v2451
      %v2532 = vpop.f32.mrb[0].mxu0
      %v2533 = vadd.f32 0.0, %v2532
      %v2534 = vpop.f32.mrb[0].mxu0
      %v2535 = vpop.f32.mrb[0].mxu0
      %v2536 = vadd.f32 0.0, %v2535
      %v2537 = vpop.f32.mrb[0].mxu0
      %2538 = vmatprep.mubr.bf16.mxu0 0
      %2539 = vmatmul.mubr.bf16.gmra.mrb[0].mxu0 %v2454
      %v2540 = vpop.f32.mrb[0].mxu0
      %v2541 = vadd.f32 0.0, %v2540
      %v2542 = vpop.f32.mrb[0].mxu0
      %v2543 = vpop.f32.mrb[0].mxu0
      %v2544 = vadd.f32 0.0, %v2543
      %v2545 = vpop.f32.mrb[0].mxu0
      %2546 = vmatprep.mubr.bf16.mxu0 0
      %2547 = vmatmul.mubr.bf16.gmra.mrb[0].mxu0 %v2457
      %v2548 = vpop.f32.mrb[0].mxu0
      %v2549 = vadd.f32 0.0, %v2548
      %v2550 = vpop.f32.mrb[0].mxu0
      %v2551 = vpop.f32.mrb[0].mxu0
      %v2552 = vadd.f32 0.0, %v2551
      %v2553 = vpop.f32.mrb[0].mxu0
      %2554 = vmatprep.mubr.bf16.mxu0 0
      %2555 = vmatmul.mubr.bf16.gmra.mrb[0].mxu0 %v2460
      %v2556 = vpop.f32.mrb[0].mxu0
      %v2557 = vadd.f32 0.0, %v2556
      %v2558 = vpop.f32.mrb[0].mxu0
      %v2559 = vpop.f32.mrb[0].mxu0
      %v2560 = vadd.f32 0.0, %v2559
      %v2561 = vpop.f32.mrb[0].mxu0
      %2562 = vmatprep.mubr.bf16.mxu0 0
      %2563 = vmatmul.mubr.bf16.gmra.mrb[0].mxu0 %v2463
      %v2564 = vpop.f32.mrb[0].mxu0
      %v2565 = vadd.f32 0.0, %v2564
      %v2566 = vpop.f32.mrb[0].mxu0
      %v2567 = vpop.f32.mrb[0].mxu0
      %v2568 = vadd.f32 0.0, %v2567
      %v2569 = vpop.f32.mrb[0].mxu0
      %2570 = vmatprep.mubr.bf16.mxu0 0
      %2571 = vmatmul.mubr.bf16.gmra.mrb[0].mxu0 %v2466
      %v2572 = vpop.f32.mrb[0].mxu0
      %v2573 = vadd.f32 0.0, %v2572
      %v2574 = vpop.f32.mrb[0].mxu0
      %v2575 = vpop.f32.mrb[0].mxu0
      %v2576 = vadd.f32 0.0, %v2575
      %v2577 = vpop.f32.mrb[0].mxu0
      %2578 = vmatprep.mubr.bf16.mxu0 0
      %2579 = vmatmul.mubr.bf16.gmra.mrb[0].mxu0 %v2469
      %v2580 = vpop.f32.mrb[0].mxu0
      %v2581 = vadd.f32 0.0, %v2580
      %v2582 = vpop.f32.mrb[0].mxu0
      %v2583 = vpop.f32.mrb[0].mxu0
      %v2584 = vadd.f32 0.0, %v2583
      %v2585 = vpop.f32.mrb[0].mxu0
      %2586 = vdwg.mxu0
      %v2587 = vadd.f32 %v2119, %v2509
      %v2588 = vadd.f32 %v2120, %v2512
      %v2589 = vadd.f32 %v2121, %v2517
      %v2590 = vadd.f32 %v2122, %v2520
      %v2591 = vadd.f32 %v2123, %v2525
      %v2592 = vadd.f32 %v2124, %v2528
      %v2593 = vadd.f32 %v2125, %v2533
      %v2594 = vadd.f32 %v2126, %v2536
      %v2595 = vadd.f32 %v2127, %v2541
      %v2596 = vadd.f32 %v2128, %v2544
      %v2597 = vadd.f32 %v2129, %v2549
      %v2598 = vadd.f32 %v2130, %v2552
      %v2599 = vadd.f32 %v2131, %v2557
      %v2600 = vadd.f32 %v2132, %v2560
      %v2601 = vadd.f32 %v2133, %v2565
      %v2602 = vadd.f32 %v2134, %v2568
      %v2603 = vadd.f32 %v2135, %v2573
      %v2604 = vadd.f32 %v2136, %v2576
      %v2605 = vadd.f32 %v2137, %v2581
      %v2606 = vadd.f32 %v2138, %v2584
      %v2607 = vld [vmem:[%s1900] sm:$0xe]
      %v2608 = vld [vmem:[%s1900 + $0xc] sm:$0xe]
      %v2609 = vld [vmem:[%s1900 + $0x18] sm:$0xe]
      %v2610 = vld [vmem:[%s1900 + $0x24] sm:$0xe]
      %v2611 = vld [vmem:[%s1900 + $0x30] sm:$0xe]
      %v2612 = vld [vmem:[%s1900 + $0x3c] sm:$0xe]
      %v2613 = vld [vmem:[%s1900 + $0x48] sm:$0xe]
      %v2614 = vld [vmem:[%s1900 + $0x54] sm:$0xe]
      %v2615 = vld [vmem:[%s1900 + $0x60] sm:$0xe]
      %v2616 = vld [vmem:[%s1900 + $0x6c] sm:$0xe]
      %v2647 = vrot.slane %v2607, 5
      %v2648 = vrot.slane %v2647, 4
      %v2649 = vrot.slane %v2140, 5
      %v2650 = vsel %vm1631, %v2648, %v2649
      %v2651 = vrot.slane %v2649, 4
      %v2652 = vrot.slane %v2141, 5
      %v2653 = vsel %vm1631, %v2651, %v2652
      %v2654 = vrot.slane %v2608, 5
      %v2655 = vrot.slane %v2654, 4
      %v2656 = vrot.slane %v2143, 5
      %v2657 = vsel %vm1631, %v2655, %v2656
      %v2658 = vrot.slane %v2656, 4
      %v2659 = vrot.slane %v2144, 5
      %v2660 = vsel %vm1631, %v2658, %v2659
      %v2661 = vrot.slane %v2609, 5
      %v2662 = vrot.slane %v2661, 4
      %v2663 = vrot.slane %v2146, 5
      %v2664 = vsel %vm1631, %v2662, %v2663
      %v2665 = vrot.slane %v2663, 4
      %v2666 = vrot.slane %v2147, 5
      %v2667 = vsel %vm1631, %v2665, %v2666
      %v2668 = vrot.slane %v2610, 5
      %v2669 = vrot.slane %v2668, 4
      %v2670 = vrot.slane %v2149, 5
      %v2671 = vsel %vm1631, %v2669, %v2670
      %v2672 = vrot.slane %v2670, 4
      %v2673 = vrot.slane %v2150, 5
      %v2674 = vsel %vm1631, %v2672, %v2673
      %v2675 = vrot.slane %v2611, 5
      %v2676 = vrot.slane %v2675, 4
      %v2677 = vrot.slane %v2152, 5
      %v2678 = vsel %vm1631, %v2676, %v2677
      %v2679 = vrot.slane %v2677, 4
      %v2680 = vrot.slane %v2153, 5
      %v2681 = vsel %vm1631, %v2679, %v2680
      %v2682 = vrot.slane %v2612, 5
      %v2683 = vrot.slane %v2682, 4
      %v2684 = vrot.slane %v2155, 5
      %v2685 = vsel %vm1631, %v2683, %v2684
      %v2686 = vrot.slane %v2684, 4
      %v2687 = vrot.slane %v2156, 5
      %v2688 = vsel %vm1631, %v2686, %v2687
      %v2689 = vrot.slane %v2613, 5
      %v2690 = vrot.slane %v2689, 4
      %v2691 = vrot.slane %v2158, 5
      %v2692 = vsel %vm1631, %v2690, %v2691
      %v2693 = vrot.slane %v2691, 4
      %v2694 = vrot.slane %v2159, 5
      %v2695 = vsel %vm1631, %v2693, %v2694
      %v2696 = vrot.slane %v2614, 5
      %v2697 = vrot.slane %v2696, 4
      %v2698 = vrot.slane %v2161, 5
      %v2699 = vsel %vm1631, %v2697, %v2698
      %v2700 = vrot.slane %v2698, 4
      %v2701 = vrot.slane %v2162, 5
      %v2702 = vsel %vm1631, %v2700, %v2701
      %v2703 = vrot.slane %v2615, 5
      %v2704 = vrot.slane %v2703, 4
      %v2705 = vrot.slane %v2164, 5
      %v2706 = vsel %vm1631, %v2704, %v2705
      %v2707 = vrot.slane %v2705, 4
      %v2708 = vrot.slane %v2165, 5
      %v2709 = vsel %vm1631, %v2707, %v2708
      %v2710 = vrot.slane %v2616, 5
      %v2711 = vrot.slane %v2710, 4
      %v2712 = vrot.slane %v2167, 5
      %v2713 = vsel %vm1631, %v2711, %v2712
      %v2714 = vrot.slane %v2712, 4
      %v2715 = vrot.slane %v2168, 5
      %v2716 = vsel %vm1631, %v2714, %v2715
      %s2717 = scalar_lea.vmem %s3, 10
      %v2718 = vld [vmem:[%s2717] sm:$0x3]
      %v2719 = vunpack.c.l.b16 %v2650
      %v2720 = vunpack.c.l.b16 %v2653
      %v2721 = vunpack.c.l.b16 %v2657
      %v2722 = vunpack.c.l.b16 %v2660
      %v2723 = vunpack.c.l.b16 %v2664
      %v2724 = vunpack.c.l.b16 %v2667
      %v2725 = vunpack.c.l.b16 %v2671
      %v2726 = vunpack.c.l.b16 %v2674
      %v2727 = vunpack.c.l.b16 %v2678
      %v2728 = vunpack.c.l.b16 %v2681
      %v2729 = vunpack.c.l.b16 %v2685
      %v2730 = vunpack.c.l.b16 %v2688
      %v2731 = vunpack.c.l.b16 %v2692
      %v2732 = vunpack.c.l.b16 %v2695
      %v2733 = vunpack.c.l.b16 %v2699
      %v2734 = vunpack.c.l.b16 %v2702
      %v2735 = vunpack.c.l.b16 %v2706
      %v2736 = vunpack.c.l.b16 %v2709
      %v2737 = vunpack.c.l.b16 %v2713
      %v2738 = vunpack.c.l.b16 %v2716
      %v2739 = vpack.c.b16 %v2720, %v2719
      %v2740 = vpack.c.b16 %v2722, %v2721
      %v2741 = vpack.c.b16 %v2724, %v2723
      %v2742 = vpack.c.b16 %v2726, %v2725
      %v2743 = vpack.c.b16 %v2728, %v2727
      %v2744 = vpack.c.b16 %v2730, %v2729
      %v2745 = vpack.c.b16 %v2732, %v2731
      %v2746 = vpack.c.b16 %v2734, %v2733
      %v2747 = vpack.c.b16 %v2736, %v2735
      %v2748 = vpack.c.b16 %v2738, %v2737
      %v2750 = vsel %vm1255, %v2739, 0
      %v2753 = vsel %vm1255, %v2740, 0
      %v2756 = vsel %vm1255, %v2741, 0
      %v2759 = vsel %vm1255, %v2742, 0
      %v2762 = vsel %vm1255, %v2743, 0
      %v2765 = vsel %vm1255, %v2744, 0
      %v2768 = vsel %vm1255, %v2745, 0
      %v2771 = vsel %vm1255, %v2746, 0
      %v2774 = vsel %vm1255, %v2747, 0
      %v2777 = vsel %vm1255, %v2748, 0
      %v2780 = vsel %vm1286, %v2718, 0
      %2782 = vmatprep.subr.bf16.mxu0 0
      %2783 = vmatpush1.bf16.msra.mxu0 %v2780
      %2784 = vmatprep.subr.bf16.mxu0 0
      %2785 = vmatpush1.bf16.msra.mxu0 0
      %2786 = vmatprep.subr.bf16.mxu0 0
      %2787 = vmatpush1.bf16.msra.mxu0 0
      %2788 = vmatprep.subr.bf16.mxu0 0
      %2789 = vmatpush1.bf16.msra.mxu0 0
      %2790 = vmatprep.subr.bf16.mxu0 0
      %2791 = vmatpush1.bf16.msra.mxu0 0
      %2792 = vmatprep.subr.bf16.mxu0 0
      %2793 = vmatpush1.bf16.msra.mxu0 0
      %2794 = vmatprep.subr.bf16.mxu0 0
      %2795 = vmatpush1.bf16.msra.mxu0 0
      %2796 = vmatprep.subr.bf16.mxu0 0
      %2797 = vmatpush1.bf16.msra.mxu0 0
      %2798 = vmatprep.subr.bf16.mxu0 0
      %2799 = vmatpush1.bf16.msra.mxu0 0
      %2800 = vmatprep.subr.bf16.mxu0 0
      %2801 = vmatpush1.bf16.msra.mxu0 0
      %2802 = vmatprep.subr.bf16.mxu0 0
      %2803 = vmatpush1.bf16.msra.mxu0 0
      %2804 = vmatprep.subr.bf16.mxu0 0
      %2805 = vmatpush1.bf16.msra.mxu0 0
      %2806 = vmatprep.subr.bf16.mxu0 0
      %2807 = vmatpush1.bf16.msra.mxu0 0
      %2808 = vmatprep.subr.bf16.mxu0 0
      %2809 = vmatpush1.bf16.msra.mxu0 0
      %2810 = vmatprep.subr.bf16.mxu0 0
      %2811 = vmatpush1.bf16.msra.mxu0 0
      %2812 = vmatprep.subr.bf16.mxu0 0
      %2813 = vmatpush1.bf16.msra.mxu0 0
      %2814 = vmatprep.mubr.bf16.mxu0 0
      %2815 = vmatmul.mubr.bf16.gmra.mrb[0].mxu0 %v2750
      %v2816 = vpop.f32.mrb[0].mxu0
      %v2817 = vadd.f32 0.0, %v2816
      %v2818 = vpop.f32.mrb[0].mxu0
      %v2819 = vpop.f32.mrb[0].mxu0
      %v2820 = vadd.f32 0.0, %v2819
      %v2821 = vpop.f32.mrb[0].mxu0
      %2822 = vmatprep.mubr.bf16.mxu0 0
      %2823 = vmatmul.mubr.bf16.gmra.mrb[0].mxu0 %v2753
      %v2824 = vpop.f32.mrb[0].mxu0
      %v2825 = vadd.f32 0.0, %v2824
      %v2826 = vpop.f32.mrb[0].mxu0
      %v2827 = vpop.f32.mrb[0].mxu0
      %v2828 = vadd.f32 0.0, %v2827
      %v2829 = vpop.f32.mrb[0].mxu0
      %2830 = vmatprep.mubr.bf16.mxu0 0
      %2831 = vmatmul.mubr.bf16.gmra.mrb[0].mxu0 %v2756
      %v2832 = vpop.f32.mrb[0].mxu0
      %v2833 = vadd.f32 0.0, %v2832
      %v2834 = vpop.f32.mrb[0].mxu0
      %v2835 = vpop.f32.mrb[0].mxu0
      %v2836 = vadd.f32 0.0, %v2835
      %v2837 = vpop.f32.mrb[0].mxu0
      %2838 = vmatprep.mubr.bf16.mxu0 0
      %2839 = vmatmul.mubr.bf16.gmra.mrb[0].mxu0 %v2759
      %v2840 = vpop.f32.mrb[0].mxu0
      %v2841 = vadd.f32 0.0, %v2840
      %v2842 = vpop.f32.mrb[0].mxu0
      %v2843 = vpop.f32.mrb[0].mxu0
      %v2844 = vadd.f32 0.0, %v2843
      %v2845 = vpop.f32.mrb[0].mxu0
      %2846 = vmatprep.mubr.bf16.mxu0 0
      %2847 = vmatmul.mubr.bf16.gmra.mrb[0].mxu0 %v2762
      %v2848 = vpop.f32.mrb[0].mxu0
      %v2849 = vadd.f32 0.0, %v2848
      %v2850 = vpop.f32.mrb[0].mxu0
      %v2851 = vpop.f32.mrb[0].mxu0
      %v2852 = vadd.f32 0.0, %v2851
      %v2853 = vpop.f32.mrb[0].mxu0
      %2854 = vmatprep.mubr.bf16.mxu0 0
      %2855 = vmatmul.mubr.bf16.gmra.mrb[0].mxu0 %v2765
      %v2856 = vpop.f32.mrb[0].mxu0
      %v2857 = vadd.f32 0.0, %v2856
      %v2858 = vpop.f32.mrb[0].mxu0
      %v2859 = vpop.f32.mrb[0].mxu0
      %v2860 = vadd.f32 0.0, %v2859
      %v2861 = vpop.f32.mrb[0].mxu0
      %2862 = vmatprep.mubr.bf16.mxu0 0
      %2863 = vmatmul.mubr.bf16.gmra.mrb[0].mxu0 %v2768
      %v2864 = vpop.f32.mrb[0].mxu0
      %v2865 = vadd.f32 0.0, %v2864
      %v2866 = vpop.f32.mrb[0].mxu0
      %v2867 = vpop.f32.mrb[0].mxu0
      %v2868 = vadd.f32 0.0, %v2867
      %v2869 = vpop.f32.mrb[0].mxu0
      %2870 = vmatprep.mubr.bf16.mxu0 0
      %2871 = vmatmul.mubr.bf16.gmra.mrb[0].mxu0 %v2771
      %v2872 = vpop.f32.mrb[0].mxu0
      %v2873 = vadd.f32 0.0, %v2872
      %v2874 = vpop.f32.mrb[0].mxu0
      %v2875 = vpop.f32.mrb[0].mxu0
      %v2876 = vadd.f32 0.0, %v2875
      %v2877 = vpop.f32.mrb[0].mxu0
      %2878 = vmatprep.mubr.bf16.mxu0 0
      %2879 = vmatmul.mubr.bf16.gmra.mrb[0].mxu0 %v2774
      %v2880 = vpop.f32.mrb[0].mxu0
      %v2881 = vadd.f32 0.0, %v2880
      %v2882 = vpop.f32.mrb[0].mxu0
      %v2883 = vpop.f32.mrb[0].mxu0
      %v2884 = vadd.f32 0.0, %v2883
      %v2885 = vpop.f32.mrb[0].mxu0
      %2886 = vmatprep.mubr.bf16.mxu0 0
      %2887 = vmatmul.mubr.bf16.gmra.mrb[0].mxu0 %v2777
      %v2888 = vpop.f32.mrb[0].mxu0
      %v2889 = vadd.f32 0.0, %v2888
      %v2890 = vpop.f32.mrb[0].mxu0
      %v2891 = vpop.f32.mrb[0].mxu0
      %v2892 = vadd.f32 0.0, %v2891
      %v2893 = vpop.f32.mrb[0].mxu0
      %2894 = vdwg.mxu0
      %v2895 = vadd.f32 %v2587, %v2817
      %v2896 = vadd.f32 %v2588, %v2820
      %v2897 = vadd.f32 %v2589, %v2825
      %v2898 = vadd.f32 %v2590, %v2828
      %v2899 = vadd.f32 %v2591, %v2833
      %v2900 = vadd.f32 %v2592, %v2836
      %v2901 = vadd.f32 %v2593, %v2841
      %v2902 = vadd.f32 %v2594, %v2844
      %v2903 = vadd.f32 %v2595, %v2849
      %v2904 = vadd.f32 %v2596, %v2852
      %v2905 = vadd.f32 %v2597, %v2857
      %v2906 = vadd.f32 %v2598, %v2860
      %v2907 = vadd.f32 %v2599, %v2865
      %v2908 = vadd.f32 %v2600, %v2868
      %v2909 = vadd.f32 %v2601, %v2873
      %v2910 = vadd.f32 %v2602, %v2876
      %v2911 = vadd.f32 %v2603, %v2881
      %v2912 = vadd.f32 %v2604, %v2884
      %v2913 = vadd.f32 %v2605, %v2889
      %v2914 = vadd.f32 %v2606, %v2892
      %v2915 = vld [vmem:[%s889] sm:$0xf]
      %v2916 = vld [vmem:[%s889 + $0x4] sm:$0xf]
      %v2917 = vld [vmem:[%s889 + $0xc] sm:$0xf]
      %v2918 = vld [vmem:[%s889 + $0x10] sm:$0xf]
      %v2919 = vld [vmem:[%s889 + $0x18] sm:$0xf]
      %v2920 = vld [vmem:[%s889 + $0x1c] sm:$0xf]
      %v2921 = vld [vmem:[%s889 + $0x24] sm:$0xf]
      %v2922 = vld [vmem:[%s889 + $0x28] sm:$0xf]
      %v2923 = vld [vmem:[%s889 + $0x30] sm:$0xf]
      %v2924 = vld [vmem:[%s889 + $0x34] sm:$0xf]
      %v2925 = vld [vmem:[%s889 + $0x3c] sm:$0xf]
      %v2926 = vld [vmem:[%s889 + $0x40] sm:$0xf]
      %v2927 = vld [vmem:[%s889 + $0x48] sm:$0xf]
      %v2928 = vld [vmem:[%s889 + $0x4c] sm:$0xf]
      %v2929 = vld [vmem:[%s889 + $0x54] sm:$0xf]
      %v2930 = vld [vmem:[%s889 + $0x58] sm:$0xf]
      %v2931 = vld [vmem:[%s889 + $0x60] sm:$0xf]
      %v2932 = vld [vmem:[%s889 + $0x64] sm:$0xf]
      %v2933 = vld [vmem:[%s889 + $0x6c] sm:$0xf]
      %v2934 = vld [vmem:[%s889 + $0x70] sm:$0xf]
      %s2935 = scalar_lea.vmem %s3, 12
      %v2936 = vld [vmem:[%s2935] sm:$0x3]
      %v2957 = vunpack.c.l.b16 %v2915
      %v2958 = vunpack.c.l.b16 %v2916
      %v2959 = vunpack.c.l.b16 %v2917
      %v2960 = vunpack.c.l.b16 %v2918
      %v2961 = vunpack.c.l.b16 %v2919
      %v2962 = vunpack.c.l.b16 %v2920
      %v2963 = vunpack.c.l.b16 %v2921
      %v2964 = vunpack.c.l.b16 %v2922
      %v2965 = vunpack.c.l.b16 %v2923
      %v2966 = vunpack.c.l.b16 %v2924
      %v2967 = vunpack.c.l.b16 %v2925
      %v2968 = vunpack.c.l.b16 %v2926
      %v2969 = vunpack.c.l.b16 %v2927
      %v2970 = vunpack.c.l.b16 %v2928
      %v2971 = vunpack.c.l.b16 %v2929
      %v2972 = vunpack.c.l.b16 %v2930
      %v2973 = vunpack.c.l.b16 %v2931
      %v2974 = vunpack.c.l.b16 %v2932
      %v2975 = vunpack.c.l.b16 %v2933
      %v2976 = vunpack.c.l.b16 %v2934
      %v2977 = vpack.c.b16 %v2958, %v2957
      %v2978 = vpack.c.b16 %v2960, %v2959
      %v2979 = vpack.c.b16 %v2962, %v2961
      %v2980 = vpack.c.b16 %v2964, %v2963
      %v2981 = vpack.c.b16 %v2966, %v2965
      %v2982 = vpack.c.b16 %v2968, %v2967
      %v2983 = vpack.c.b16 %v2970, %v2969
      %v2984 = vpack.c.b16 %v2972, %v2971
      %v2985 = vpack.c.b16 %v2974, %v2973
      %v2986 = vpack.c.b16 %v2976, %v2975
      %v2988 = vsel %vm1255, %v2977, 0
      %v2991 = vsel %vm1255, %v2978, 0
      %v2994 = vsel %vm1255, %v2979, 0
      %v2997 = vsel %vm1255, %v2980, 0
      %v3000 = vsel %vm1255, %v2981, 0
      %v3003 = vsel %vm1255, %v2982, 0
      %v3006 = vsel %vm1255, %v2983, 0
      %v3009 = vsel %vm1255, %v2984, 0
      %v3012 = vsel %vm1255, %v2985, 0
      %v3015 = vsel %vm1255, %v2986, 0
      %v3018 = vsel %vm1286, %v2936, 0
      %3020 = vmatprep.subr.bf16.mxu0 0
      %3021 = vmatpush1.bf16.msra.mxu0 %v3018
      %3022 = vmatprep.subr.bf16.mxu0 0
      %3023 = vmatpush1.bf16.msra.mxu0 0
      %3024 = vmatprep.subr.bf16.mxu0 0
      %3025 = vmatpush1.bf16.msra.mxu0 0
      %3026 = vmatprep.subr.bf16.mxu0 0
      %3027 = vmatpush1.bf16.msra.mxu0 0
      %3028 = vmatprep.subr.bf16.mxu0 0
      %3029 = vmatpush1.bf16.msra.mxu0 0
      %3030 = vmatprep.subr.bf16.mxu0 0
      %3031 = vmatpush1.bf16.msra.mxu0 0
      %3032 = vmatprep.subr.bf16.mxu0 0
      %3033 = vmatpush1.bf16.msra.mxu0 0
      %3034 = vmatprep.subr.bf16.mxu0 0
      %3035 = vmatpush1.bf16.msra.mxu0 0
      %3036 = vmatprep.subr.bf16.mxu0 0
      %3037 = vmatpush1.bf16.msra.mxu0 0
      %3038 = vmatprep.subr.bf16.mxu0 0
      %3039 = vmatpush1.bf16.msra.mxu0 0
      %3040 = vmatprep.subr.bf16.mxu0 0
      %3041 = vmatpush1.bf16.msra.mxu0 0
      %3042 = vmatprep.subr.bf16.mxu0 0
      %3043 = vmatpush1.bf16.msra.mxu0 0
      %3044 = vmatprep.subr.bf16.mxu0 0
      %3045 = vmatpush1.bf16.msra.mxu0 0
      %3046 = vmatprep.subr.bf16.mxu0 0
      %3047 = vmatpush1.bf16.msra.mxu0 0
      %3048 = vmatprep.subr.bf16.mxu0 0
      %3049 = vmatpush1.bf16.msra.mxu0 0
      %3050 = vmatprep.subr.bf16.mxu0 0
      %3051 = vmatpush1.bf16.msra.mxu0 0
      %3052 = vmatprep.mubr.bf16.mxu0 0
      %3053 = vmatmul.mubr.bf16.gmra.mrb[0].mxu0 %v2988
      %v3054 = vpop.f32.mrb[0].mxu0
      %v3055 = vadd.f32 0.0, %v3054
      %v3056 = vpop.f32.mrb[0].mxu0
      %v3057 = vpop.f32.mrb[0].mxu0
      %v3058 = vadd.f32 0.0, %v3057
      %v3059 = vpop.f32.mrb[0].mxu0
      %3060 = vmatprep.mubr.bf16.mxu0 0
      %3061 = vmatmul.mubr.bf16.gmra.mrb[0].mxu0 %v2991
      %v3062 = vpop.f32.mrb[0].mxu0
      %v3063 = vadd.f32 0.0, %v3062
      %v3064 = vpop.f32.mrb[0].mxu0
      %v3065 = vpop.f32.mrb[0].mxu0
      %v3066 = vadd.f32 0.0, %v3065
      %v3067 = vpop.f32.mrb[0].mxu0
      %3068 = vmatprep.mubr.bf16.mxu0 0
      %3069 = vmatmul.mubr.bf16.gmra.mrb[0].mxu0 %v2994
      %v3070 = vpop.f32.mrb[0].mxu0
      %v3071 = vadd.f32 0.0, %v3070
      %v3072 = vpop.f32.mrb[0].mxu0
      %v3073 = vpop.f32.mrb[0].mxu0
      %v3074 = vadd.f32 0.0, %v3073
      %v3075 = vpop.f32.mrb[0].mxu0
      %3076 = vmatprep.mubr.bf16.mxu0 0
      %3077 = vmatmul.mubr.bf16.gmra.mrb[0].mxu0 %v2997
      %v3078 = vpop.f32.mrb[0].mxu0
      %v3079 = vadd.f32 0.0, %v3078
      %v3080 = vpop.f32.mrb[0].mxu0
      %v3081 = vpop.f32.mrb[0].mxu0
      %v3082 = vadd.f32 0.0, %v3081
      %v3083 = vpop.f32.mrb[0].mxu0
      %3084 = vmatprep.mubr.bf16.mxu0 0
      %3085 = vmatmul.mubr.bf16.gmra.mrb[0].mxu0 %v3000
      %v3086 = vpop.f32.mrb[0].mxu0
      %v3087 = vadd.f32 0.0, %v3086
      %v3088 = vpop.f32.mrb[0].mxu0
      %v3089 = vpop.f32.mrb[0].mxu0
      %v3090 = vadd.f32 0.0, %v3089
      %v3091 = vpop.f32.mrb[0].mxu0
      %3092 = vmatprep.mubr.bf16.mxu0 0
      %3093 = vmatmul.mubr.bf16.gmra.mrb[0].mxu0 %v3003
      %v3094 = vpop.f32.mrb[0].mxu0
      %v3095 = vadd.f32 0.0, %v3094
      %v3096 = vpop.f32.mrb[0].mxu0
      %v3097 = vpop.f32.mrb[0].mxu0
      %v3098 = vadd.f32 0.0, %v3097
      %v3099 = vpop.f32.mrb[0].mxu0
      %3100 = vmatprep.mubr.bf16.mxu0 0
      %3101 = vmatmul.mubr.bf16.gmra.mrb[0].mxu0 %v3006
      %v3102 = vpop.f32.mrb[0].mxu0
      %v3103 = vadd.f32 0.0, %v3102
      %v3104 = vpop.f32.mrb[0].mxu0
      %v3105 = vpop.f32.mrb[0].mxu0
      %v3106 = vadd.f32 0.0, %v3105
      %v3107 = vpop.f32.mrb[0].mxu0
      %3108 = vmatprep.mubr.bf16.mxu0 0
      %3109 = vmatmul.mubr.bf16.gmra.mrb[0].mxu0 %v3009
      %v3110 = vpop.f32.mrb[0].mxu0
      %v3111 = vadd.f32 0.0, %v3110
      %v3112 = vpop.f32.mrb[0].mxu0
      %v3113 = vpop.f32.mrb[0].mxu0
      %v3114 = vadd.f32 0.0, %v3113
      %v3115 = vpop.f32.mrb[0].mxu0
      %3116 = vmatprep.mubr.bf16.mxu0 0
      %3117 = vmatmul.mubr.bf16.gmra.mrb[0].mxu0 %v3012
      %v3118 = vpop.f32.mrb[0].mxu0
      %v3119 = vadd.f32 0.0, %v3118
      %v3120 = vpop.f32.mrb[0].mxu0
      %v3121 = vpop.f32.mrb[0].mxu0
      %v3122 = vadd.f32 0.0, %v3121
      %v3123 = vpop.f32.mrb[0].mxu0
      %3124 = vmatprep.mubr.bf16.mxu0 0
      %3125 = vmatmul.mubr.bf16.gmra.mrb[0].mxu0 %v3015
      %v3126 = vpop.f32.mrb[0].mxu0
      %v3127 = vadd.f32 0.0, %v3126
      %v3128 = vpop.f32.mrb[0].mxu0
      %v3129 = vpop.f32.mrb[0].mxu0
      %v3130 = vadd.f32 0.0, %v3129
      %v3131 = vpop.f32.mrb[0].mxu0
      %3132 = vdwg.mxu0
      %v3133 = vadd.f32 %v2895, %v3055
      %v3134 = vadd.f32 %v2896, %v3058
      %v3135 = vadd.f32 %v2897, %v3063
      %v3136 = vadd.f32 %v2898, %v3066
      %v3137 = vadd.f32 %v2899, %v3071
      %v3138 = vadd.f32 %v2900, %v3074
      %v3139 = vadd.f32 %v2901, %v3079
      %v3140 = vadd.f32 %v2902, %v3082
      %v3141 = vadd.f32 %v2903, %v3087
      %v3142 = vadd.f32 %v2904, %v3090
      %v3143 = vadd.f32 %v2905, %v3095
      %v3144 = vadd.f32 %v2906, %v3098
      %v3145 = vadd.f32 %v2907, %v3103
      %v3146 = vadd.f32 %v2908, %v3106
      %v3147 = vadd.f32 %v2909, %v3111
      %v3148 = vadd.f32 %v2910, %v3114
      %v3149 = vadd.f32 %v2911, %v3119
      %v3150 = vadd.f32 %v2912, %v3122
      %v3151 = vadd.f32 %v2913, %v3127
      %v3152 = vadd.f32 %v2914, %v3130
      %v3153 = vld [vmem:[%s889] sm:$0xf]
      %v3154 = vld [vmem:[%s889 + $0x4] sm:$0xf]
      %v3155 = vld [vmem:[%s889 + $0x8] sm:$0x1]
      %v3156 = vld [vmem:[%s889 + $0xc] sm:$0xf]
      %v3157 = vld [vmem:[%s889 + $0x10] sm:$0xf]
      %v3158 = vld [vmem:[%s889 + $0x14] sm:$0x1]
      %v3159 = vld [vmem:[%s889 + $0x18] sm:$0xf]
      %v3160 = vld [vmem:[%s889 + $0x1c] sm:$0xf]
      %v3161 = vld [vmem:[%s889 + $0x20] sm:$0x1]
      %v3162 = vld [vmem:[%s889 + $0x24] sm:$0xf]
      %v3163 = vld [vmem:[%s889 + $0x28] sm:$0xf]
      %v3164 = vld [vmem:[%s889 + $0x2c] sm:$0x1]
      %v3165 = vld [vmem:[%s889 + $0x30] sm:$0xf]
      %v3166 = vld [vmem:[%s889 + $0x34] sm:$0xf]
      %v3167 = vld [vmem:[%s889 + $0x38] sm:$0x1]
      %v3168 = vld [vmem:[%s889 + $0x3c] sm:$0xf]
      %v3169 = vld [vmem:[%s889 + $0x40] sm:$0xf]
      %v3170 = vld [vmem:[%s889 + $0x44] sm:$0x1]
      %v3171 = vld [vmem:[%s889 + $0x48] sm:$0xf]
      %v3172 = vld [vmem:[%s889 + $0x4c] sm:$0xf]
      %v3173 = vld [vmem:[%s889 + $0x50] sm:$0x1]
      %v3174 = vld [vmem:[%s889 + $0x54] sm:$0xf]
      %v3175 = vld [vmem:[%s889 + $0x58] sm:$0xf]
      %v3176 = vld [vmem:[%s889 + $0x5c] sm:$0x1]
      %v3177 = vld [vmem:[%s889 + $0x60] sm:$0xf]
      %v3178 = vld [vmem:[%s889 + $0x64] sm:$0xf]
      %v3179 = vld [vmem:[%s889 + $0x68] sm:$0x1]
      %v3180 = vld [vmem:[%s889 + $0x6c] sm:$0xf]
      %v3181 = vld [vmem:[%s889 + $0x70] sm:$0xf]
      %v3182 = vld [vmem:[%s889 + $0x74] sm:$0x1]
      %v3184 = vshrl.u32 %v3153, 16
      %v3186 = vrot.slane %v3184, 4
      %v3187 = vshll.u32 %v3153, 16
      %v3189 = vrot.slane %v3187, 5
      %v3190 = vor.u32 %v3186, %v3189
      %v3191 = vrot.slane %v3190, 4
      %v3193 = vshll.u32 %v3154, 16
      %v3195 = vrot.slane %v3193, 5
      %v3196 = vsel %vm982, %v3191, %v3195
      %v3197 = vshrl.u32 %v3154, 16
      %v3199 = vrot.slane %v3197, 4
      %v3200 = vor.u32 %v3199, %v3195
      %v3201 = vrot.slane %v3200, 4
      %v3203 = vshll.u32 %v3155, 16
      %v3205 = vrot.slane %v3203, 5
      %v3206 = vsel %vm982, %v3201, %v3205
      %v3208 = vshrl.u32 %v3156, 16
      %v3210 = vrot.slane %v3208, 4
      %v3211 = vshll.u32 %v3156, 16
      %v3213 = vrot.slane %v3211, 5
      %v3214 = vor.u32 %v3210, %v3213
      %v3215 = vrot.slane %v3214, 4
      %v3217 = vshll.u32 %v3157, 16
      %v3219 = vrot.slane %v3217, 5
      %v3220 = vsel %vm982, %v3215, %v3219
      %v3221 = vshrl.u32 %v3157, 16
      %v3223 = vrot.slane %v3221, 4
      %v3224 = vor.u32 %v3223, %v3219
      %v3225 = vrot.slane %v3224, 4
      %v3227 = vshll.u32 %v3158, 16
      %v3229 = vrot.slane %v3227, 5
      %v3230 = vsel %vm982, %v3225, %v3229
      %v3232 = vshrl.u32 %v3159, 16
      %v3234 = vrot.slane %v3232, 4
      %v3235 = vshll.u32 %v3159, 16
      %v3237 = vrot.slane %v3235, 5
      %v3238 = vor.u32 %v3234, %v3237
      %v3239 = vrot.slane %v3238, 4
      %v3241 = vshll.u32 %v3160, 16
      %v3243 = vrot.slane %v3241, 5
      %v3244 = vsel %vm982, %v3239, %v3243
      %v3245 = vshrl.u32 %v3160, 16
      %v3247 = vrot.slane %v3245, 4
      %v3248 = vor.u32 %v3247, %v3243
      %v3249 = vrot.slane %v3248, 4
      %v3251 = vshll.u32 %v3161, 16
      %v3253 = vrot.slane %v3251, 5
      %v3254 = vsel %vm982, %v3249, %v3253
      %v3256 = vshrl.u32 %v3162, 16
      %v3258 = vrot.slane %v3256, 4
      %v3259 = vshll.u32 %v3162, 16
      %v3261 = vrot.slane %v3259, 5
      %v3262 = vor.u32 %v3258, %v3261
      %v3263 = vrot.slane %v3262, 4
      %v3265 = vshll.u32 %v3163, 16
      %v3267 = vrot.slane %v3265, 5
      %v3268 = vsel %vm982, %v3263, %v3267
      %v3269 = vshrl.u32 %v3163, 16
      %v3271 = vrot.slane %v3269, 4
      %v3272 = vor.u32 %v3271, %v3267
      %v3273 = vrot.slane %v3272, 4
      %v3275 = vshll.u32 %v3164, 16
      %v3277 = vrot.slane %v3275, 5
      %v3278 = vsel %vm982, %v3273, %v3277
      %v3280 = vshrl.u32 %v3165, 16
      %v3282 = vrot.slane %v3280, 4
      %v3283 = vshll.u32 %v3165, 16
      %v3285 = vrot.slane %v3283, 5
      %v3286 = vor.u32 %v3282, %v3285
      %v3287 = vrot.slane %v3286, 4
      %v3289 = vshll.u32 %v3166, 16
      %v3291 = vrot.slane %v3289, 5
      %v3292 = vsel %vm982, %v3287, %v3291
      %v3293 = vshrl.u32 %v3166, 16
      %v3295 = vrot.slane %v3293, 4
      %v3296 = vor.u32 %v3295, %v3291
      %v3297 = vrot.slane %v3296, 4
      %v3299 = vshll.u32 %v3167, 16
      %v3301 = vrot.slane %v3299, 5
      %v3302 = vsel %vm982, %v3297, %v3301
      %v3304 = vshrl.u32 %v3168, 16
      %v3306 = vrot.slane %v3304, 4
      %v3307 = vshll.u32 %v3168, 16
      %v3309 = vrot.slane %v3307, 5
      %v3310 = vor.u32 %v3306, %v3309
      %v3311 = vrot.slane %v3310, 4
      %v3313 = vshll.u32 %v3169, 16
      %v3315 = vrot.slane %v3313, 5
      %v3316 = vsel %vm982, %v3311, %v3315
      %v3317 = vshrl.u32 %v3169, 16
      %v3319 = vrot.slane %v3317, 4
      %v3320 = vor.u32 %v3319, %v3315
      %v3321 = vrot.slane %v3320, 4
      %v3323 = vshll.u32 %v3170, 16
      %v3325 = vrot.slane %v3323, 5
      %v3326 = vsel %vm982, %v3321, %v3325
      %v3328 = vshrl.u32 %v3171, 16
      %v3330 = vrot.slane %v3328, 4
      %v3331 = vshll.u32 %v3171, 16
      %v3333 = vrot.slane %v3331, 5
      %v3334 = vor.u32 %v3330, %v3333
      %v3335 = vrot.slane %v3334, 4
      %v3337 = vshll.u32 %v3172, 16
      %v3339 = vrot.slane %v3337, 5
      %v3340 = vsel %vm982, %v3335, %v3339
      %v3341 = vshrl.u32 %v3172, 16
      %v3343 = vrot.slane %v3341, 4
      %v3344 = vor.u32 %v3343, %v3339
      %v3345 = vrot.slane %v3344, 4
      %v3347 = vshll.u32 %v3173, 16
      %v3349 = vrot.slane %v3347, 5
      %v3350 = vsel %vm982, %v3345, %v3349
      %v3352 = vshrl.u32 %v3174, 16
      %v3354 = vrot.slane %v3352, 4
      %v3355 = vshll.u32 %v3174, 16
      %v3357 = vrot.slane %v3355, 5
      %v3358 = vor.u32 %v3354, %v3357
      %v3359 = vrot.slane %v3358, 4
      %v3361 = vshll.u32 %v3175, 16
      %v3363 = vrot.slane %v3361, 5
      %v3364 = vsel %vm982, %v3359, %v3363
      %v3365 = vshrl.u32 %v3175, 16
      %v3367 = vrot.slane %v3365, 4
      %v3368 = vor.u32 %v3367, %v3363
      %v3369 = vrot.slane %v3368, 4
      %v3371 = vshll.u32 %v3176, 16
      %v3373 = vrot.slane %v3371, 5
      %v3374 = vsel %vm982, %v3369, %v3373
      %v3376 = vshrl.u32 %v3177, 16
      %v3378 = vrot.slane %v3376, 4
      %v3379 = vshll.u32 %v3177, 16
      %v3381 = vrot.slane %v3379, 5
      %v3382 = vor.u32 %v3378, %v3381
      %v3383 = vrot.slane %v3382, 4
      %v3385 = vshll.u32 %v3178, 16
      %v3387 = vrot.slane %v3385, 5
      %v3388 = vsel %vm982, %v3383, %v3387
      %v3389 = vshrl.u32 %v3178, 16
      %v3391 = vrot.slane %v3389, 4
      %v3392 = vor.u32 %v3391, %v3387
      %v3393 = vrot.slane %v3392, 4
      %v3395 = vshll.u32 %v3179, 16
      %v3397 = vrot.slane %v3395, 5
      %v3398 = vsel %vm982, %v3393, %v3397
      %v3400 = vshrl.u32 %v3180, 16
      %v3402 = vrot.slane %v3400, 4
      %v3403 = vshll.u32 %v3180, 16
      %v3405 = vrot.slane %v3403, 5
      %v3406 = vor.u32 %v3402, %v3405
      %v3407 = vrot.slane %v3406, 4
      %v3409 = vshll.u32 %v3181, 16
      %v3411 = vrot.slane %v3409, 5
      %v3412 = vsel %vm982, %v3407, %v3411
      %v3413 = vshrl.u32 %v3181, 16
      %v3415 = vrot.slane %v3413, 4
      %v3416 = vor.u32 %v3415, %v3411
      %v3417 = vrot.slane %v3416, 4
      %v3419 = vshll.u32 %v3182, 16
      %v3421 = vrot.slane %v3419, 5
      %v3422 = vsel %vm982, %v3417, %v3421
      %s3423 = scalar_lea.vmem %s3, 14
      %v3424 = vld [vmem:[%s3423] sm:$0x3]
      %v3425 = vunpack.c.l.b16 %v3196
      %v3426 = vunpack.c.l.b16 %v3206
      %v3427 = vunpack.c.l.b16 %v3220
      %v3428 = vunpack.c.l.b16 %v3230
      %v3429 = vunpack.c.l.b16 %v3244
      %v3430 = vunpack.c.l.b16 %v3254
      %v3431 = vunpack.c.l.b16 %v3268
      %v3432 = vunpack.c.l.b16 %v3278
      %v3433 = vunpack.c.l.b16 %v3292
      %v3434 = vunpack.c.l.b16 %v3302
      %v3435 = vunpack.c.l.b16 %v3316
      %v3436 = vunpack.c.l.b16 %v3326
      %v3437 = vunpack.c.l.b16 %v3340
      %v3438 = vunpack.c.l.b16 %v3350
      %v3439 = vunpack.c.l.b16 %v3364
      %v3440 = vunpack.c.l.b16 %v3374
      %v3441 = vunpack.c.l.b16 %v3388
      %v3442 = vunpack.c.l.b16 %v3398
      %v3443 = vunpack.c.l.b16 %v3412
      %v3444 = vunpack.c.l.b16 %v3422
      %v3445 = vpack.c.b16 %v3426, %v3425
      %v3446 = vpack.c.b16 %v3428, %v3427
      %v3447 = vpack.c.b16 %v3430, %v3429
      %v3448 = vpack.c.b16 %v3432, %v3431
      %v3449 = vpack.c.b16 %v3434, %v3433
      %v3450 = vpack.c.b16 %v3436, %v3435
      %v3451 = vpack.c.b16 %v3438, %v3437
      %v3452 = vpack.c.b16 %v3440, %v3439
      %v3453 = vpack.c.b16 %v3442, %v3441
      %v3454 = vpack.c.b16 %v3444, %v3443
      %v3456 = vsel %vm1255, %v3445, 0
      %v3459 = vsel %vm1255, %v3446, 0
      %v3462 = vsel %vm1255, %v3447, 0
      %v3465 = vsel %vm1255, %v3448, 0
      %v3468 = vsel %vm1255, %v3449, 0
      %v3471 = vsel %vm1255, %v3450, 0
      %v3474 = vsel %vm1255, %v3451, 0
      %v3477 = vsel %vm1255, %v3452, 0
      %v3480 = vsel %vm1255, %v3453, 0
      %v3483 = vsel %vm1255, %v3454, 0
      %v3486 = vsel %vm1286, %v3424, 0
      %3488 = vmatprep.subr.bf16.mxu0 0
      %3489 = vmatpush1.bf16.msra.mxu0 %v3486
      %3490 = vmatprep.subr.bf16.mxu0 0
      %3491 = vmatpush1.bf16.msra.mxu0 0
      %3492 = vmatprep.subr.bf16.mxu0 0
      %3493 = vmatpush1.bf16.msra.mxu0 0
      %3494 = vmatprep.subr.bf16.mxu0 0
      %3495 = vmatpush1.bf16.msra.mxu0 0
      %3496 = vmatprep.subr.bf16.mxu0 0
      %3497 = vmatpush1.bf16.msra.mxu0 0
      %3498 = vmatprep.subr.bf16.mxu0 0
      %3499 = vmatpush1.bf16.msra.mxu0 0
      %3500 = vmatprep.subr.bf16.mxu0 0
      %3501 = vmatpush1.bf16.msra.mxu0 0
      %3502 = vmatprep.subr.bf16.mxu0 0
      %3503 = vmatpush1.bf16.msra.mxu0 0
      %3504 = vmatprep.subr.bf16.mxu0 0
      %3505 = vmatpush1.bf16.msra.mxu0 0
      %3506 = vmatprep.subr.bf16.mxu0 0
      %3507 = vmatpush1.bf16.msra.mxu0 0
      %3508 = vmatprep.subr.bf16.mxu0 0
      %3509 = vmatpush1.bf16.msra.mxu0 0
      %3510 = vmatprep.subr.bf16.mxu0 0
      %3511 = vmatpush1.bf16.msra.mxu0 0
      %3512 = vmatprep.subr.bf16.mxu0 0
      %3513 = vmatpush1.bf16.msra.mxu0 0
      %3514 = vmatprep.subr.bf16.mxu0 0
      %3515 = vmatpush1.bf16.msra.mxu0 0
      %3516 = vmatprep.subr.bf16.mxu0 0
      %3517 = vmatpush1.bf16.msra.mxu0 0
      %3518 = vmatprep.subr.bf16.mxu0 0
      %3519 = vmatpush1.bf16.msra.mxu0 0
      %3520 = vmatprep.mubr.bf16.mxu0 0
      %3521 = vmatmul.mubr.bf16.gmra.mrb[0].mxu0 %v3456
      %v3522 = vpop.f32.mrb[0].mxu0
      %v3523 = vadd.f32 0.0, %v3522
      %v3524 = vpop.f32.mrb[0].mxu0
      %v3525 = vpop.f32.mrb[0].mxu0
      %v3526 = vadd.f32 0.0, %v3525
      %v3527 = vpop.f32.mrb[0].mxu0
      %3528 = vmatprep.mubr.bf16.mxu0 0
      %3529 = vmatmul.mubr.bf16.gmra.mrb[0].mxu0 %v3459
      %v3530 = vpop.f32.mrb[0].mxu0
      %v3531 = vadd.f32 0.0, %v3530
      %v3532 = vpop.f32.mrb[0].mxu0
      %v3533 = vpop.f32.mrb[0].mxu0
      %v3534 = vadd.f32 0.0, %v3533
      %v3535 = vpop.f32.mrb[0].mxu0
      %3536 = vmatprep.mubr.bf16.mxu0 0
      %3537 = vmatmul.mubr.bf16.gmra.mrb[0].mxu0 %v3462
      %v3538 = vpop.f32.mrb[0].mxu0
      %v3539 = vadd.f32 0.0, %v3538
      %v3540 = vpop.f32.mrb[0].mxu0
      %v3541 = vpop.f32.mrb[0].mxu0
      %v3542 = vadd.f32 0.0, %v3541
      %v3543 = vpop.f32.mrb[0].mxu0
      %3544 = vmatprep.mubr.bf16.mxu0 0
      %3545 = vmatmul.mubr.bf16.gmra.mrb[0].mxu0 %v3465
      %v3546 = vpop.f32.mrb[0].mxu0
      %v3547 = vadd.f32 0.0, %v3546
      %v3548 = vpop.f32.mrb[0].mxu0
      %v3549 = vpop.f32.mrb[0].mxu0
      %v3550 = vadd.f32 0.0, %v3549
      %v3551 = vpop.f32.mrb[0].mxu0
      %3552 = vmatprep.mubr.bf16.mxu0 0
      %3553 = vmatmul.mubr.bf16.gmra.mrb[0].mxu0 %v3468
      %v3554 = vpop.f32.mrb[0].mxu0
      %v3555 = vadd.f32 0.0, %v3554
      %v3556 = vpop.f32.mrb[0].mxu0
      %v3557 = vpop.f32.mrb[0].mxu0
      %v3558 = vadd.f32 0.0, %v3557
      %v3559 = vpop.f32.mrb[0].mxu0
      %3560 = vmatprep.mubr.bf16.mxu0 0
      %3561 = vmatmul.mubr.bf16.gmra.mrb[0].mxu0 %v3471
      %v3562 = vpop.f32.mrb[0].mxu0
      %v3563 = vadd.f32 0.0, %v3562
      %v3564 = vpop.f32.mrb[0].mxu0
      %v3565 = vpop.f32.mrb[0].mxu0
      %v3566 = vadd.f32 0.0, %v3565
      %v3567 = vpop.f32.mrb[0].mxu0
      %3568 = vmatprep.mubr.bf16.mxu0 0
      %3569 = vmatmul.mubr.bf16.gmra.mrb[0].mxu0 %v3474
      %v3570 = vpop.f32.mrb[0].mxu0
      %v3571 = vadd.f32 0.0, %v3570
      %v3572 = vpop.f32.mrb[0].mxu0
      %v3573 = vpop.f32.mrb[0].mxu0
      %v3574 = vadd.f32 0.0, %v3573
      %v3575 = vpop.f32.mrb[0].mxu0
      %3576 = vmatprep.mubr.bf16.mxu0 0
      %3577 = vmatmul.mubr.bf16.gmra.mrb[0].mxu0 %v3477
      %v3578 = vpop.f32.mrb[0].mxu0
      %v3579 = vadd.f32 0.0, %v3578
      %v3580 = vpop.f32.mrb[0].mxu0
      %v3581 = vpop.f32.mrb[0].mxu0
      %v3582 = vadd.f32 0.0, %v3581
      %v3583 = vpop.f32.mrb[0].mxu0
      %3584 = vmatprep.mubr.bf16.mxu0 0
      %3585 = vmatmul.mubr.bf16.gmra.mrb[0].mxu0 %v3480
      %v3586 = vpop.f32.mrb[0].mxu0
      %v3587 = vadd.f32 0.0, %v3586
      %v3588 = vpop.f32.mrb[0].mxu0
      %v3589 = vpop.f32.mrb[0].mxu0
      %v3590 = vadd.f32 0.0, %v3589
      %v3591 = vpop.f32.mrb[0].mxu0
      %3592 = vmatprep.mubr.bf16.mxu0 0
      %3593 = vmatmul.mubr.bf16.gmra.mrb[0].mxu0 %v3483
      %v3594 = vpop.f32.mrb[0].mxu0
      %v3595 = vadd.f32 0.0, %v3594
      %v3596 = vpop.f32.mrb[0].mxu0
      %v3597 = vpop.f32.mrb[0].mxu0
      %v3598 = vadd.f32 0.0, %v3597
      %v3599 = vpop.f32.mrb[0].mxu0
      %3600 = vdwg.mxu0
      %v3601 = vadd.f32 %v3133, %v3523
      %v3602 = vadd.f32 %v3134, %v3526
      %v3603 = vadd.f32 %v3135, %v3531
      %v3604 = vadd.f32 %v3136, %v3534
      %v3605 = vadd.f32 %v3137, %v3539
      %v3606 = vadd.f32 %v3138, %v3542
      %v3607 = vadd.f32 %v3139, %v3547
      %v3608 = vadd.f32 %v3140, %v3550
      %v3609 = vadd.f32 %v3141, %v3555
      %v3610 = vadd.f32 %v3142, %v3558
      %v3611 = vadd.f32 %v3143, %v3563
      %v3612 = vadd.f32 %v3144, %v3566
      %v3613 = vadd.f32 %v3145, %v3571
      %v3614 = vadd.f32 %v3146, %v3574
      %v3615 = vadd.f32 %v3147, %v3579
      %v3616 = vadd.f32 %v3148, %v3582
      %v3617 = vadd.f32 %v3149, %v3587
      %v3618 = vadd.f32 %v3150, %v3590
      %v3619 = vadd.f32 %v3151, %v3595
      %v3620 = vadd.f32 %v3152, %v3598
      %v3621 = vld [vmem:[%s889] sm:$0xe]
      %v3622 = vld [vmem:[%s889 + $0xc] sm:$0xe]
      %v3623 = vld [vmem:[%s889 + $0x18] sm:$0xe]
      %v3624 = vld [vmem:[%s889 + $0x24] sm:$0xe]
      %v3625 = vld [vmem:[%s889 + $0x30] sm:$0xe]
      %v3626 = vld [vmem:[%s889 + $0x3c] sm:$0xe]
      %v3627 = vld [vmem:[%s889 + $0x48] sm:$0xe]
      %v3628 = vld [vmem:[%s889 + $0x54] sm:$0xe]
      %v3629 = vld [vmem:[%s889 + $0x60] sm:$0xe]
      %v3630 = vld [vmem:[%s889 + $0x6c] sm:$0xe]
      %v3661 = vrot.slane %v3621, 5
      %v3662 = vrot.slane %v3661, 4
      %v3663 = vrot.slane %v3154, 5
      %v3664 = vsel %vm1631, %v3662, %v3663
      %v3665 = vrot.slane %v3663, 4
      %v3666 = vrot.slane %v3155, 5
      %v3667 = vsel %vm1631, %v3665, %v3666
      %v3668 = vrot.slane %v3622, 5
      %v3669 = vrot.slane %v3668, 4
      %v3670 = vrot.slane %v3157, 5
      %v3671 = vsel %vm1631, %v3669, %v3670
      %v3672 = vrot.slane %v3670, 4
      %v3673 = vrot.slane %v3158, 5
      %v3674 = vsel %vm1631, %v3672, %v3673
      %v3675 = vrot.slane %v3623, 5
      %v3676 = vrot.slane %v3675, 4
      %v3677 = vrot.slane %v3160, 5
      %v3678 = vsel %vm1631, %v3676, %v3677
      %v3679 = vrot.slane %v3677, 4
      %v3680 = vrot.slane %v3161, 5
      %v3681 = vsel %vm1631, %v3679, %v3680
      %v3682 = vrot.slane %v3624, 5
      %v3683 = vrot.slane %v3682, 4
      %v3684 = vrot.slane %v3163, 5
      %v3685 = vsel %vm1631, %v3683, %v3684
      %v3686 = vrot.slane %v3684, 4
      %v3687 = vrot.slane %v3164, 5
      %v3688 = vsel %vm1631, %v3686, %v3687
      %v3689 = vrot.slane %v3625, 5
      %v3690 = vrot.slane %v3689, 4
      %v3691 = vrot.slane %v3166, 5
      %v3692 = vsel %vm1631, %v3690, %v3691
      %v3693 = vrot.slane %v3691, 4
      %v3694 = vrot.slane %v3167, 5
      %v3695 = vsel %vm1631, %v3693, %v3694
      %v3696 = vrot.slane %v3626, 5
      %v3697 = vrot.slane %v3696, 4
      %v3698 = vrot.slane %v3169, 5
      %v3699 = vsel %vm1631, %v3697, %v3698
      %v3700 = vrot.slane %v3698, 4
      %v3701 = vrot.slane %v3170, 5
      %v3702 = vsel %vm1631, %v3700, %v3701
      %v3703 = vrot.slane %v3627, 5
      %v3704 = vrot.slane %v3703, 4
      %v3705 = vrot.slane %v3172, 5
      %v3706 = vsel %vm1631, %v3704, %v3705
      %v3707 = vrot.slane %v3705, 4
      %v3708 = vrot.slane %v3173, 5
      %v3709 = vsel %vm1631, %v3707, %v3708
      %v3710 = vrot.slane %v3628, 5
      %v3711 = vrot.slane %v3710, 4
      %v3712 = vrot.slane %v3175, 5
      %v3713 = vsel %vm1631, %v3711, %v3712
      %v3714 = vrot.slane %v3712, 4
      %v3715 = vrot.slane %v3176, 5
      %v3716 = vsel %vm1631, %v3714, %v3715
      %v3717 = vrot.slane %v3629, 5
      %v3718 = vrot.slane %v3717, 4
      %v3719 = vrot.slane %v3178, 5
      %v3720 = vsel %vm1631, %v3718, %v3719
      %v3721 = vrot.slane %v3719, 4
      %v3722 = vrot.slane %v3179, 5
      %v3723 = vsel %vm1631, %v3721, %v3722
      %v3724 = vrot.slane %v3630, 5
      %v3725 = vrot.slane %v3724, 4
      %v3726 = vrot.slane %v3181, 5
      %v3727 = vsel %vm1631, %v3725, %v3726
      %v3728 = vrot.slane %v3726, 4
      %v3729 = vrot.slane %v3182, 5
      %v3730 = vsel %vm1631, %v3728, %v3729
      %s3731 = scalar_lea.vmem %s3, 16
      %v3732 = vld [vmem:[%s3731] sm:$0x3]
      %v3733 = vunpack.c.l.b16 %v3664
      %v3734 = vunpack.c.l.b16 %v3667
      %v3735 = vunpack.c.l.b16 %v3671
      %v3736 = vunpack.c.l.b16 %v3674
      %v3737 = vunpack.c.l.b16 %v3678
      %v3738 = vunpack.c.l.b16 %v3681
      %v3739 = vunpack.c.l.b16 %v3685
      %v3740 = vunpack.c.l.b16 %v3688
      %v3741 = vunpack.c.l.b16 %v3692
      %v3742 = vunpack.c.l.b16 %v3695
      %v3743 = vunpack.c.l.b16 %v3699
      %v3744 = vunpack.c.l.b16 %v3702
      %v3745 = vunpack.c.l.b16 %v3706
      %v3746 = vunpack.c.l.b16 %v3709
      %v3747 = vunpack.c.l.b16 %v3713
      %v3748 = vunpack.c.l.b16 %v3716
      %v3749 = vunpack.c.l.b16 %v3720
      %v3750 = vunpack.c.l.b16 %v3723
      %v3751 = vunpack.c.l.b16 %v3727
      %v3752 = vunpack.c.l.b16 %v3730
      %v3753 = vpack.c.b16 %v3734, %v3733
      %v3754 = vpack.c.b16 %v3736, %v3735
      %v3755 = vpack.c.b16 %v3738, %v3737
      %v3756 = vpack.c.b16 %v3740, %v3739
      %v3757 = vpack.c.b16 %v3742, %v3741
      %v3758 = vpack.c.b16 %v3744, %v3743
      %v3759 = vpack.c.b16 %v3746, %v3745
      %v3760 = vpack.c.b16 %v3748, %v3747
      %v3761 = vpack.c.b16 %v3750, %v3749
      %v3762 = vpack.c.b16 %v3752, %v3751
      %v3764 = vsel %vm1255, %v3753, 0
      %v3767 = vsel %vm1255, %v3754, 0
      %v3770 = vsel %vm1255, %v3755, 0
      %v3773 = vsel %vm1255, %v3756, 0
      %v3776 = vsel %vm1255, %v3757, 0
      %v3779 = vsel %vm1255, %v3758, 0
      %v3782 = vsel %vm1255, %v3759, 0
      %v3785 = vsel %vm1255, %v3760, 0
      %v3788 = vsel %vm1255, %v3761, 0
      %v3791 = vsel %vm1255, %v3762, 0
      %v3794 = vsel %vm1286, %v3732, 0
      %3796 = vmatprep.subr.bf16.mxu0 0
      %3797 = vmatpush1.bf16.msra.mxu0 %v3794
      %3798 = vmatprep.subr.bf16.mxu0 0
      %3799 = vmatpush1.bf16.msra.mxu0 0
      %3800 = vmatprep.subr.bf16.mxu0 0
      %3801 = vmatpush1.bf16.msra.mxu0 0
      %3802 = vmatprep.subr.bf16.mxu0 0
      %3803 = vmatpush1.bf16.msra.mxu0 0
      %3804 = vmatprep.subr.bf16.mxu0 0
      %3805 = vmatpush1.bf16.msra.mxu0 0
      %3806 = vmatprep.subr.bf16.mxu0 0
      %3807 = vmatpush1.bf16.msra.mxu0 0
      %3808 = vmatprep.subr.bf16.mxu0 0
      %3809 = vmatpush1.bf16.msra.mxu0 0
      %3810 = vmatprep.subr.bf16.mxu0 0
      %3811 = vmatpush1.bf16.msra.mxu0 0
      %3812 = vmatprep.subr.bf16.mxu0 0
      %3813 = vmatpush1.bf16.msra.mxu0 0
      %3814 = vmatprep.subr.bf16.mxu0 0
      %3815 = vmatpush1.bf16.msra.mxu0 0
      %3816 = vmatprep.subr.bf16.mxu0 0
      %3817 = vmatpush1.bf16.msra.mxu0 0
      %3818 = vmatprep.subr.bf16.mxu0 0
      %3819 = vmatpush1.bf16.msra.mxu0 0
      %3820 = vmatprep.subr.bf16.mxu0 0
      %3821 = vmatpush1.bf16.msra.mxu0 0
      %3822 = vmatprep.subr.bf16.mxu0 0
      %3823 = vmatpush1.bf16.msra.mxu0 0
      %3824 = vmatprep.subr.bf16.mxu0 0
      %3825 = vmatpush1.bf16.msra.mxu0 0
      %3826 = vmatprep.subr.bf16.mxu0 0
      %3827 = vmatpush1.bf16.msra.mxu0 0
      %3828 = vmatprep.mubr.bf16.mxu0 0
      %3829 = vmatmul.mubr.bf16.gmra.mrb[0].mxu0 %v3764
      %v3830 = vpop.f32.mrb[0].mxu0
      %v3831 = vadd.f32 0.0, %v3830
      %v3832 = vpop.f32.mrb[0].mxu0
      %v3833 = vpop.f32.mrb[0].mxu0
      %v3834 = vadd.f32 0.0, %v3833
      %v3835 = vpop.f32.mrb[0].mxu0
      %3836 = vmatprep.mubr.bf16.mxu0 0
      %3837 = vmatmul.mubr.bf16.gmra.mrb[0].mxu0 %v3767
      %v3838 = vpop.f32.mrb[0].mxu0
      %v3839 = vadd.f32 0.0, %v3838
      %v3840 = vpop.f32.mrb[0].mxu0
      %v3841 = vpop.f32.mrb[0].mxu0
      %v3842 = vadd.f32 0.0, %v3841
      %v3843 = vpop.f32.mrb[0].mxu0
      %3844 = vmatprep.mubr.bf16.mxu0 0
      %3845 = vmatmul.mubr.bf16.gmra.mrb[0].mxu0 %v3770
      %v3846 = vpop.f32.mrb[0].mxu0
      %v3847 = vadd.f32 0.0, %v3846
      %v3848 = vpop.f32.mrb[0].mxu0
      %v3849 = vpop.f32.mrb[0].mxu0
      %v3850 = vadd.f32 0.0, %v3849
      %v3851 = vpop.f32.mrb[0].mxu0
      %3852 = vmatprep.mubr.bf16.mxu0 0
      %3853 = vmatmul.mubr.bf16.gmra.mrb[0].mxu0 %v3773
      %v3854 = vpop.f32.mrb[0].mxu0
      %v3855 = vadd.f32 0.0, %v3854
      %v3856 = vpop.f32.mrb[0].mxu0
      %v3857 = vpop.f32.mrb[0].mxu0
      %v3858 = vadd.f32 0.0, %v3857
      %v3859 = vpop.f32.mrb[0].mxu0
      %3860 = vmatprep.mubr.bf16.mxu0 0
      %3861 = vmatmul.mubr.bf16.gmra.mrb[0].mxu0 %v3776
      %v3862 = vpop.f32.mrb[0].mxu0
      %v3863 = vadd.f32 0.0, %v3862
      %v3864 = vpop.f32.mrb[0].mxu0
      %v3865 = vpop.f32.mrb[0].mxu0
      %v3866 = vadd.f32 0.0, %v3865
      %v3867 = vpop.f32.mrb[0].mxu0
      %3868 = vmatprep.mubr.bf16.mxu0 0
      %3869 = vmatmul.mubr.bf16.gmra.mrb[0].mxu0 %v3779
      %v3870 = vpop.f32.mrb[0].mxu0
      %v3871 = vadd.f32 0.0, %v3870
      %v3872 = vpop.f32.mrb[0].mxu0
      %v3873 = vpop.f32.mrb[0].mxu0
      %v3874 = vadd.f32 0.0, %v3873
      %v3875 = vpop.f32.mrb[0].mxu0
      %3876 = vmatprep.mubr.bf16.mxu0 0
      %3877 = vmatmul.mubr.bf16.gmra.mrb[0].mxu0 %v3782
      %v3878 = vpop.f32.mrb[0].mxu0
      %v3879 = vadd.f32 0.0, %v3878
      %v3880 = vpop.f32.mrb[0].mxu0
      %v3881 = vpop.f32.mrb[0].mxu0
      %v3882 = vadd.f32 0.0, %v3881
      %v3883 = vpop.f32.mrb[0].mxu0
      %3884 = vmatprep.mubr.bf16.mxu0 0
      %3885 = vmatmul.mubr.bf16.gmra.mrb[0].mxu0 %v3785
      %v3886 = vpop.f32.mrb[0].mxu0
      %v3887 = vadd.f32 0.0, %v3886
      %v3888 = vpop.f32.mrb[0].mxu0
      %v3889 = vpop.f32.mrb[0].mxu0
      %v3890 = vadd.f32 0.0, %v3889
      %v3891 = vpop.f32.mrb[0].mxu0
      %3892 = vmatprep.mubr.bf16.mxu0 0
      %3893 = vmatmul.mubr.bf16.gmra.mrb[0].mxu0 %v3788
      %v3894 = vpop.f32.mrb[0].mxu0
      %v3895 = vadd.f32 0.0, %v3894
      %v3896 = vpop.f32.mrb[0].mxu0
      %v3897 = vpop.f32.mrb[0].mxu0
      %v3898 = vadd.f32 0.0, %v3897
      %v3899 = vpop.f32.mrb[0].mxu0
      %3900 = vmatprep.mubr.bf16.mxu0 0
      %3901 = vmatmul.mubr.bf16.gmra.mrb[0].mxu0 %v3791
      %v3902 = vpop.f32.mrb[0].mxu0
      %v3903 = vadd.f32 0.0, %v3902
      %v3904 = vpop.f32.mrb[0].mxu0
      %v3905 = vpop.f32.mrb[0].mxu0
      %v3906 = vadd.f32 0.0, %v3905
      %v3907 = vpop.f32.mrb[0].mxu0
      %3908 = vdwg.mxu0
      %v3909 = vadd.f32 %v3601, %v3831
      %v3910 = vadd.f32 %v3602, %v3834
      %v3911 = vadd.f32 %v3603, %v3839
      %v3912 = vadd.f32 %v3604, %v3842
      %v3913 = vadd.f32 %v3605, %v3847
      %v3914 = vadd.f32 %v3606, %v3850
      %v3915 = vadd.f32 %v3607, %v3855
      %v3916 = vadd.f32 %v3608, %v3858
      %v3917 = vadd.f32 %v3609, %v3863
      %v3918 = vadd.f32 %v3610, %v3866
      %v3919 = vadd.f32 %v3611, %v3871
      %v3920 = vadd.f32 %v3612, %v3874
      %v3921 = vadd.f32 %v3613, %v3879
      %v3922 = vadd.f32 %v3614, %v3882
      %v3923 = vadd.f32 %v3615, %v3887
      %v3924 = vadd.f32 %v3616, %v3890
      %v3925 = vadd.f32 %v3617, %v3895
      %v3926 = vadd.f32 %v3618, %v3898
      %v3927 = vadd.f32 %v3619, %v3903
      %v3928 = vadd.f32 %v3620, %v3906
      %v3929 = vmul.f32 %v3909, 0.2
      %v3930 = vmul.f32 %v3910, 0.2
      %v3931 = vmul.f32 %v3911, 0.2
      %v3932 = vmul.f32 %v3912, 0.2
      %v3933 = vmul.f32 %v3913, 0.2
      %v3934 = vmul.f32 %v3914, 0.2
      %v3935 = vmul.f32 %v3915, 0.2
      %v3936 = vmul.f32 %v3916, 0.2
      %v3937 = vmul.f32 %v3917, 0.2
      %v3938 = vmul.f32 %v3918, 0.2
      %v3939 = vmul.f32 %v3919, 0.2
      %v3940 = vmul.f32 %v3920, 0.2
      %v3941 = vmul.f32 %v3921, 0.2
      %v3942 = vmul.f32 %v3922, 0.2
      %v3943 = vmul.f32 %v3923, 0.2
      %v3944 = vmul.f32 %v3924, 0.2
      %v3945 = vmul.f32 %v3925, 0.2
      %v3946 = vmul.f32 %v3926, 0.2
      %v3947 = vmul.f32 %v3927, 0.2
      %v3948 = vmul.f32 %v3928, 0.2
      %v3949 = vmax.f32 %v3909, %v3929
      %v3950 = vmax.f32 %v3910, %v3930
      %v3951 = vmax.f32 %v3911, %v3931
      %v3952 = vmax.f32 %v3912, %v3932
      %v3953 = vmax.f32 %v3913, %v3933
      %v3954 = vmax.f32 %v3914, %v3934
      %v3955 = vmax.f32 %v3915, %v3935
      %v3956 = vmax.f32 %v3916, %v3936
      %v3957 = vmax.f32 %v3917, %v3937
      %v3958 = vmax.f32 %v3918, %v3938
      %v3959 = vmax.f32 %v3919, %v3939
      %v3960 = vmax.f32 %v3920, %v3940
      %v3961 = vmax.f32 %v3921, %v3941
      %v3962 = vmax.f32 %v3922, %v3942
      %v3963 = vmax.f32 %v3923, %v3943
      %v3964 = vmax.f32 %v3924, %v3944
      %v3965 = vmax.f32 %v3925, %v3945
      %v3966 = vmax.f32 %v3926, %v3946
      %v3967 = vmax.f32 %v3927, %v3947
      %v3968 = vmax.f32 %v3928, %v3948
      %v3969 = vpack.c.bf16 %v3950, %v3949
      %v3970 = vpack.c.bf16 %v3952, %v3951
      %v3971 = vpack.c.bf16 %v3954, %v3953
      %v3972 = vpack.c.bf16 %v3956, %v3955
      %v3973 = vpack.c.bf16 %v3958, %v3957
      %v3974 = vpack.c.bf16 %v3960, %v3959
      %v3975 = vpack.c.bf16 %v3962, %v3961
      %v3976 = vpack.c.bf16 %v3964, %v3963
      %v3977 = vpack.c.bf16 %v3966, %v3965
      %v3978 = vpack.c.bf16 %v3968, %v3967
      %v3989 = vunpack.c.l.b16 %v3969
      %v3990 = vunpack.c.h.b16 %v3969
      %v3991 = vunpack.c.l.b16 %v3970
      %v3992 = vunpack.c.h.b16 %v3970
      %v3993 = vunpack.c.l.b16 %v3971
      %v3994 = vunpack.c.h.b16 %v3971
      %v3995 = vunpack.c.l.b16 %v3972
      %v3996 = vunpack.c.h.b16 %v3972
      %v3997 = vunpack.c.l.b16 %v3973
      %v3998 = vunpack.c.h.b16 %v3973
      %v3999 = vunpack.c.l.b16 %v3974
      %v4000 = vunpack.c.h.b16 %v3974
      %v4001 = vunpack.c.l.b16 %v3975
      %v4002 = vunpack.c.h.b16 %v3975
      %v4003 = vunpack.c.l.b16 %v3976
      %v4004 = vunpack.c.h.b16 %v3976
      %v4005 = vunpack.c.l.b16 %v3977
      %v4006 = vunpack.c.h.b16 %v3977
      %v4007 = vunpack.c.l.b16 %v3978
      %v4008 = vunpack.c.h.b16 %v3978
      %v4009 = vpack.c.b16 %v3989, %v3989
      %v4010 = vpack.c.b16 %v3990, %v3990
      %v4011 = vpack.c.b16 %v3991, %v3991
      %v4012 = vpack.c.b16 %v3992, %v3992
      %v4013 = vpack.c.b16 %v3993, %v3993
      %v4014 = vpack.c.b16 %v3994, %v3994
      %v4015 = vpack.c.b16 %v3995, %v3995
      %v4016 = vpack.c.b16 %v3996, %v3996
      %v4017 = vpack.c.b16 %v3997, %v3997
      %v4018 = vpack.c.b16 %v3998, %v3998
      %v4019 = vpack.c.b16 %v3999, %v3999
      %v4020 = vpack.c.b16 %v4000, %v4000
      %v4021 = vpack.c.b16 %v4001, %v4001
      %v4022 = vpack.c.b16 %v4002, %v4002
      %v4023 = vpack.c.b16 %v4003, %v4003
      %v4024 = vpack.c.b16 %v4004, %v4004
      %v4025 = vpack.c.b16 %v4005, %v4005
      %v4026 = vpack.c.b16 %v4006, %v4006
      %v4027 = vpack.c.b16 %v4007, %v4007
      %v4028 = vpack.c.b16 %v4008, %v4008
      %v4030 = vshrl.u32 %v4009, 16
      %v4032 = vrot.slane %v4030, 7
      %v4033 = vshll.u32 %v4009, 16
      %v4035 = vor.u32 %v4032, %v4033
      %v4036 = vrot.slane %v4032, 4
      %v4038 = vshrl.u32 %v4010, 16
      %v4040 = vrot.slane %v4038, 7
      %v4041 = vshll.u32 %v4010, 16
      %v4043 = vor.u32 %v4040, %v4041
      %v4044 = vsel %vm728, %v4036, %v4043
      %v4045 = vrot.slane %v4040, 4
      %v4047 = vshrl.u32 %v4011, 16
      %v4049 = vrot.slane %v4047, 7
      %v4050 = vshll.u32 %v4011, 16
      %v4052 = vor.u32 %v4049, %v4050
      %v4053 = vrot.slane %v4049, 4
      %v4055 = vshrl.u32 %v4012, 16
      %v4057 = vrot.slane %v4055, 7
      %v4058 = vshll.u32 %v4012, 16
      %v4060 = vor.u32 %v4057, %v4058
      %v4061 = vsel %vm728, %v4053, %v4060
      %v4062 = vrot.slane %v4057, 4
      %v4064 = vshrl.u32 %v4013, 16
      %v4066 = vrot.slane %v4064, 7
      %v4067 = vshll.u32 %v4013, 16
      %v4069 = vor.u32 %v4066, %v4067
      %v4070 = vrot.slane %v4066, 4
      %v4072 = vshrl.u32 %v4014, 16
      %v4074 = vrot.slane %v4072, 7
      %v4075 = vshll.u32 %v4014, 16
      %v4077 = vor.u32 %v4074, %v4075
      %v4078 = vsel %vm728, %v4070, %v4077
      %v4079 = vrot.slane %v4074, 4
      %v4081 = vshrl.u32 %v4015, 16
      %v4083 = vrot.slane %v4081, 7
      %v4084 = vshll.u32 %v4015, 16
      %v4086 = vor.u32 %v4083, %v4084
      %v4087 = vrot.slane %v4083, 4
      %v4089 = vshrl.u32 %v4016, 16
      %v4091 = vrot.slane %v4089, 7
      %v4092 = vshll.u32 %v4016, 16
      %v4094 = vor.u32 %v4091, %v4092
      %v4095 = vsel %vm728, %v4087, %v4094
      %v4096 = vrot.slane %v4091, 4
      %v4098 = vshrl.u32 %v4017, 16
      %v4100 = vrot.slane %v4098, 7
      %v4101 = vshll.u32 %v4017, 16
      %v4103 = vor.u32 %v4100, %v4101
      %v4104 = vrot.slane %v4100, 4
      %v4106 = vshrl.u32 %v4018, 16
      %v4108 = vrot.slane %v4106, 7
      %v4109 = vshll.u32 %v4018, 16
      %v4111 = vor.u32 %v4108, %v4109
      %v4112 = vsel %vm728, %v4104, %v4111
      %v4113 = vrot.slane %v4108, 4
      %v4115 = vshrl.u32 %v4019, 16
      %v4117 = vrot.slane %v4115, 7
      %v4118 = vshll.u32 %v4019, 16
      %v4120 = vor.u32 %v4117, %v4118
      %v4121 = vrot.slane %v4117, 4
      %v4123 = vshrl.u32 %v4020, 16
      %v4125 = vrot.slane %v4123, 7
      %v4126 = vshll.u32 %v4020, 16
      %v4128 = vor.u32 %v4125, %v4126
      %v4129 = vsel %vm728, %v4121, %v4128
      %v4130 = vrot.slane %v4125, 4
      %v4132 = vshrl.u32 %v4021, 16
      %v4134 = vrot.slane %v4132, 7
      %v4135 = vshll.u32 %v4021, 16
      %v4137 = vor.u32 %v4134, %v4135
      %v4138 = vrot.slane %v4134, 4
      %v4140 = vshrl.u32 %v4022, 16
      %v4142 = vrot.slane %v4140, 7
      %v4143 = vshll.u32 %v4022, 16
      %v4145 = vor.u32 %v4142, %v4143
      %v4146 = vsel %vm728, %v4138, %v4145
      %v4147 = vrot.slane %v4142, 4
      %v4149 = vshrl.u32 %v4023, 16
      %v4151 = vrot.slane %v4149, 7
      %v4152 = vshll.u32 %v4023, 16
      %v4154 = vor.u32 %v4151, %v4152
      %v4155 = vrot.slane %v4151, 4
      %v4157 = vshrl.u32 %v4024, 16
      %v4159 = vrot.slane %v4157, 7
      %v4160 = vshll.u32 %v4024, 16
      %v4162 = vor.u32 %v4159, %v4160
      %v4163 = vsel %vm728, %v4155, %v4162
      %v4164 = vrot.slane %v4159, 4
      %v4166 = vshrl.u32 %v4025, 16
      %v4168 = vrot.slane %v4166, 7
      %v4169 = vshll.u32 %v4025, 16
      %v4171 = vor.u32 %v4168, %v4169
      %v4172 = vrot.slane %v4168, 4
      %v4174 = vshrl.u32 %v4026, 16
      %v4176 = vrot.slane %v4174, 7
      %v4177 = vshll.u32 %v4026, 16
      %v4179 = vor.u32 %v4176, %v4177
      %v4180 = vsel %vm728, %v4172, %v4179
      %v4181 = vrot.slane %v4176, 4
      %v4183 = vshrl.u32 %v4027, 16
      %v4185 = vrot.slane %v4183, 7
      %v4186 = vshll.u32 %v4027, 16
      %v4188 = vor.u32 %v4185, %v4186
      %v4189 = vrot.slane %v4185, 4
      %v4191 = vshrl.u32 %v4028, 16
      %v4193 = vrot.slane %v4191, 7
      %v4194 = vshll.u32 %v4028, 16
      %v4196 = vor.u32 %v4193, %v4194
      %v4197 = vsel %vm728, %v4189, %v4196
      %v4198 = vrot.slane %v4193, 4
      %v4229 = vsel %vm891, %v4035, %v2139
      %4230 = vst [vmem:[%s1900] sm:$0xf] %v4229
      %4231 = vst.msk [vmem:[%s1900 + $0x4] sm:$0xf] %vm895, %v4044
      %v4232 = vld [vmem:[%s1900 + $0x8] sm:$0x1]
      %v4233 = vsel %vm404, %v4045, %v4232
      %4234 = vst [vmem:[%s1900 + $0x8] sm:$0x1] %v4233
      %v4235 = vld [vmem:[%s1900 + $0xc] sm:$0xf]
      %v4236 = vsel %vm891, %v4052, %v4235
      %4237 = vst [vmem:[%s1900 + $0xc] sm:$0xf] %v4236
      %4238 = vst.msk [vmem:[%s1900 + $0x10] sm:$0xf] %vm895, %v4061
      %v4239 = vld [vmem:[%s1900 + $0x14] sm:$0x1]
      %v4240 = vsel %vm404, %v4062, %v4239
      %4241 = vst [vmem:[%s1900 + $0x14] sm:$0x1] %v4240
      %v4242 = vld [vmem:[%s1900 + $0x18] sm:$0xf]
      %v4243 = vsel %vm891, %v4069, %v4242
      %4244 = vst [vmem:[%s1900 + $0x18] sm:$0xf] %v4243
      %4245 = vst.msk [vmem:[%s1900 + $0x1c] sm:$0xf] %vm895, %v4078
      %v4246 = vld [vmem:[%s1900 + $0x20] sm:$0x1]
      %v4247 = vsel %vm404, %v4079, %v4246
      %4248 = vst [vmem:[%s1900 + $0x20] sm:$0x1] %v4247
      %v4249 = vld [vmem:[%s1900 + $0x24] sm:$0xf]
      %v4250 = vsel %vm891, %v4086, %v4249
      %4251 = vst [vmem:[%s1900 + $0x24] sm:$0xf] %v4250
      %4252 = vst.msk [vmem:[%s1900 + $0x28] sm:$0xf] %vm895, %v4095
      %v4253 = vld [vmem:[%s1900 + $0x2c] sm:$0x1]
      %v4254 = vsel %vm404, %v4096, %v4253
      %4255 = vst [vmem:[%s1900 + $0x2c] sm:$0x1] %v4254
      %v4256 = vld [vmem:[%s1900 + $0x30] sm:$0xf]
      %v4257 = vsel %vm891, %v4103, %v4256
      %4258 = vst [vmem:[%s1900 + $0x30] sm:$0xf] %v4257
      %4259 = vst.msk [vmem:[%s1900 + $0x34] sm:$0xf] %vm895, %v4112
      %v4260 = vld [vmem:[%s1900 + $0x38] sm:$0x1]
      %v4261 = vsel %vm404, %v4113, %v4260
      %4262 = vst [vmem:[%s1900 + $0x38] sm:$0x1] %v4261
      %v4263 = vld [vmem:[%s1900 + $0x3c] sm:$0xf]
      %v4264 = vsel %vm891, %v4120, %v4263
      %4265 = vst [vmem:[%s1900 + $0x3c] sm:$0xf] %v4264
      %4266 = vst.msk [vmem:[%s1900 + $0x40] sm:$0xf] %vm895, %v4129
      %v4267 = vld [vmem:[%s1900 + $0x44] sm:$0x1]
      %v4268 = vsel %vm404, %v4130, %v4267
      %4269 = vst [vmem:[%s1900 + $0x44] sm:$0x1] %v4268
      %v4270 = vld [vmem:[%s1900 + $0x48] sm:$0xf]
      %v4271 = vsel %vm891, %v4137, %v4270
      %4272 = vst [vmem:[%s1900 + $0x48] sm:$0xf] %v4271
      %4273 = vst.msk [vmem:[%s1900 + $0x4c] sm:$0xf] %vm895, %v4146
      %v4274 = vld [vmem:[%s1900 + $0x50] sm:$0x1]
      %v4275 = vsel %vm404, %v4147, %v4274
      %4276 = vst [vmem:[%s1900 + $0x50] sm:$0x1] %v4275
      %v4277 = vld [vmem:[%s1900 + $0x54] sm:$0xf]
      %v4278 = vsel %vm891, %v4154, %v4277
      %4279 = vst [vmem:[%s1900 + $0x54] sm:$0xf] %v4278
      %4280 = vst.msk [vmem:[%s1900 + $0x58] sm:$0xf] %vm895, %v4163
      %v4281 = vld [vmem:[%s1900 + $0x5c] sm:$0x1]
      %v4282 = vsel %vm404, %v4164, %v4281
      %4283 = vst [vmem:[%s1900 + $0x5c] sm:$0x1] %v4282
      %v4284 = vld [vmem:[%s1900 + $0x60] sm:$0xf]
      %v4285 = vsel %vm891, %v4171, %v4284
      %4286 = vst [vmem:[%s1900 + $0x60] sm:$0xf] %v4285
      %4287 = vst.msk [vmem:[%s1900 + $0x64] sm:$0xf] %vm895, %v4180
      %v4288 = vld [vmem:[%s1900 + $0x68] sm:$0x1]
      %v4289 = vsel %vm404, %v4181, %v4288
      %4290 = vst [vmem:[%s1900 + $0x68] sm:$0x1] %v4289
      %v4291 = vld [vmem:[%s1900 + $0x6c] sm:$0xf]
      %v4292 = vsel %vm891, %v4188, %v4291
      %4293 = vst [vmem:[%s1900 + $0x6c] sm:$0xf] %v4292
      %4294 = vst.msk [vmem:[%s1900 + $0x70] sm:$0xf] %vm895, %v4197
      %v4295 = vld [vmem:[%s1900 + $0x74] sm:$0x1]
      %v4296 = vsel %vm404, %v4198, %v4295
      %4297 = vst [vmem:[%s1900 + $0x74] sm:$0x1] %v4296
      // Predicated region
      $region57: #{tpu_custom_call.1} parent=39 // pred_check
        %p4298 = pneg %p479
      $region58: #{tpu_custom_call.1} parent=39 // pred_check_branch
        %4300 = sbr.rel (%p4298) target = $region60
      $region59: #{tpu_custom_call.1} parent=39 // pred_region
        %4301 = vst.msk [vmem:[%s1900] sm:$0xf] %vm895, 0
        %4302 = vst.msk [vmem:[%s1900 + $0x4] sm:$0xf] %vm895, 0
        %vm4303 = vcmask 24576
        %4304 = vst.msk [vmem:[%s1900 + $0x8] sm:$0x1] %vm4303, 0
      $region60: #{tpu_custom_call.1} parent=39 // pred_fallthru
        _
      // Predicated region
      $region61: #{tpu_custom_call.1} parent=39 // pred_check
        %p4305 = pneg %p570
      $region62: #{tpu_custom_call.1} parent=39 // pred_check_branch
        %4307 = sbr.rel (%p4305) target = $region64
      $region63: #{tpu_custom_call.1} parent=39 // pred_region
        %s4308 = scalar_lea.vmem [#allocation2], 120
        %4309 = vst.msk [vmem:[%s4308] sm:$0xf] %vm895, 0
        %4310 = vst.msk [vmem:[%s4308 + $0x4] sm:$0xf] %vm895, 0
        %vm4311 = vcmask 24576
        %4312 = vst.msk [vmem:[%s4308 + $0x8] sm:$0x1] %vm4311, 0
      $region64: #{tpu_custom_call.1} parent=39 // pred_fallthru
        _
      %v4313 = vld [vmem:[%s1900] sm:$0xf]
      %v4314 = vld [vmem:[%s1900 + $0x4] sm:$0xf]
      %v4315 = vld [vmem:[%s1900 + $0xc] sm:$0xf]
      %v4316 = vld [vmem:[%s1900 + $0x10] sm:$0xf]
      %v4317 = vld [vmem:[%s1900 + $0x18] sm:$0xf]
      %v4318 = vld [vmem:[%s1900 + $0x1c] sm:$0xf]
      %v4319 = vld [vmem:[%s1900 + $0x24] sm:$0xf]
      %v4320 = vld [vmem:[%s1900 + $0x28] sm:$0xf]
      %v4321 = vld [vmem:[%s1900 + $0x30] sm:$0xf]
      %v4322 = vld [vmem:[%s1900 + $0x34] sm:$0xf]
      %v4323 = vld [vmem:[%s1900 + $0x3c] sm:$0xf]
      %v4324 = vld [vmem:[%s1900 + $0x40] sm:$0xf]
      %v4325 = vld [vmem:[%s1900 + $0x48] sm:$0xf]
      %v4326 = vld [vmem:[%s1900 + $0x4c] sm:$0xf]
      %v4327 = vld [vmem:[%s1900 + $0x54] sm:$0xf]
      %v4328 = vld [vmem:[%s1900 + $0x58] sm:$0xf]
      %v4329 = vld [vmem:[%s4] sm:$0x3]
      %v4330 = vld [vmem:[%s1900 + $0x8] sm:$0x1]
      %v4331 = vld [vmem:[%s1900 + $0x14] sm:$0x1]
      %v4332 = vld [vmem:[%s1900 + $0x20] sm:$0x1]
      %v4333 = vld [vmem:[%s1900 + $0x2c] sm:$0x1]
      %v4334 = vld [vmem:[%s1900 + $0x38] sm:$0x1]
      %v4335 = vld [vmem:[%s1900 + $0x44] sm:$0x1]
      %v4336 = vld [vmem:[%s1900 + $0x50] sm:$0x1]
      %v4337 = vld [vmem:[%s1900 + $0x5c] sm:$0x1]
      %v4339 = vshrl.u32 %v4313, 16
      %v4341 = vrot.slane %v4339, 4
      %v4342 = vshll.u32 %v4313, 16
      %v4344 = vrot.slane %v4342, 5
      %v4345 = vor.u32 %v4341, %v4344
      %v4346 = vrot.slane %v4345, 4
      %v4348 = vshll.u32 %v4314, 16
      %v4350 = vrot.slane %v4348, 5
      %v4351 = vsel %vm982, %v4346, %v4350
      %v4352 = vshrl.u32 %v4314, 16
      %v4354 = vrot.slane %v4352, 4
      %v4355 = vor.u32 %v4354, %v4350
      %v4356 = vrot.slane %v4355, 4
      %v4358 = vshll.u32 %v4330, 16
      %v4360 = vrot.slane %v4358, 5
      %v4361 = vsel %vm982, %v4356, %v4360
      %v4363 = vshrl.u32 %v4315, 16
      %v4365 = vrot.slane %v4363, 4
      %v4366 = vshll.u32 %v4315, 16
      %v4368 = vrot.slane %v4366, 5
      %v4369 = vor.u32 %v4365, %v4368
      %v4370 = vrot.slane %v4369, 4
      %v4372 = vshll.u32 %v4316, 16
      %v4374 = vrot.slane %v4372, 5
      %v4375 = vsel %vm982, %v4370, %v4374
      %v4376 = vshrl.u32 %v4316, 16
      %v4378 = vrot.slane %v4376, 4
      %v4379 = vor.u32 %v4378, %v4374
      %v4380 = vrot.slane %v4379, 4
      %v4382 = vshll.u32 %v4331, 16
      %v4384 = vrot.slane %v4382, 5
      %v4385 = vsel %vm982, %v4380, %v4384
      %v4387 = vshrl.u32 %v4317, 16
      %v4389 = vrot.slane %v4387, 4
      %v4390 = vshll.u32 %v4317, 16
      %v4392 = vrot.slane %v4390, 5
      %v4393 = vor.u32 %v4389, %v4392
      %v4394 = vrot.slane %v4393, 4
      %v4396 = vshll.u32 %v4318, 16
      %v4398 = vrot.slane %v4396, 5
      %v4399 = vsel %vm982, %v4394, %v4398
      %v4400 = vshrl.u32 %v4318, 16
      %v4402 = vrot.slane %v4400, 4
      %v4403 = vor.u32 %v4402, %v4398
      %v4404 = vrot.slane %v4403, 4
      %v4406 = vshll.u32 %v4332, 16
      %v4408 = vrot.slane %v4406, 5
      %v4409 = vsel %vm982, %v4404, %v4408
      %v4411 = vshrl.u32 %v4319, 16
      %v4413 = vrot.slane %v4411, 4
      %v4414 = vshll.u32 %v4319, 16
      %v4416 = vrot.slane %v4414, 5
      %v4417 = vor.u32 %v4413, %v4416
      %v4418 = vrot.slane %v4417, 4
      %v4420 = vshll.u32 %v4320, 16
      %v4422 = vrot.slane %v4420, 5
      %v4423 = vsel %vm982, %v4418, %v4422
      %v4424 = vshrl.u32 %v4320, 16
      %v4426 = vrot.slane %v4424, 4
      %v4427 = vor.u32 %v4426, %v4422
      %v4428 = vrot.slane %v4427, 4
      %v4430 = vshll.u32 %v4333, 16
      %v4432 = vrot.slane %v4430, 5
      %v4433 = vsel %vm982, %v4428, %v4432
      %v4435 = vshrl.u32 %v4321, 16
      %v4437 = vrot.slane %v4435, 4
      %v4438 = vshll.u32 %v4321, 16
      %v4440 = vrot.slane %v4438, 5
      %v4441 = vor.u32 %v4437, %v4440
      %v4442 = vrot.slane %v4441, 4
      %v4444 = vshll.u32 %v4322, 16
      %v4446 = vrot.slane %v4444, 5
      %v4447 = vsel %vm982, %v4442, %v4446
      %v4448 = vshrl.u32 %v4322, 16
      %v4450 = vrot.slane %v4448, 4
      %v4451 = vor.u32 %v4450, %v4446
      %v4452 = vrot.slane %v4451, 4
      %v4454 = vshll.u32 %v4334, 16
      %v4456 = vrot.slane %v4454, 5
      %v4457 = vsel %vm982, %v4452, %v4456
      %v4459 = vshrl.u32 %v4323, 16
      %v4461 = vrot.slane %v4459, 4
      %v4462 = vshll.u32 %v4323, 16
      %v4464 = vrot.slane %v4462, 5
      %v4465 = vor.u32 %v4461, %v4464
      %v4466 = vrot.slane %v4465, 4
      %v4468 = vshll.u32 %v4324, 16
      %v4470 = vrot.slane %v4468, 5
      %v4471 = vsel %vm982, %v4466, %v4470
      %v4472 = vshrl.u32 %v4324, 16
      %v4474 = vrot.slane %v4472, 4
      %v4475 = vor.u32 %v4474, %v4470
      %v4476 = vrot.slane %v4475, 4
      %v4478 = vshll.u32 %v4335, 16
      %v4480 = vrot.slane %v4478, 5
      %v4481 = vsel %vm982, %v4476, %v4480
      %v4483 = vshrl.u32 %v4325, 16
      %v4485 = vrot.slane %v4483, 4
      %v4486 = vshll.u32 %v4325, 16
      %v4488 = vrot.slane %v4486, 5
      %v4489 = vor.u32 %v4485, %v4488
      %v4490 = vrot.slane %v4489, 4
      %v4492 = vshll.u32 %v4326, 16
      %v4494 = vrot.slane %v4492, 5
      %v4495 = vsel %vm982, %v4490, %v4494
      %v4496 = vshrl.u32 %v4326, 16
      %v4498 = vrot.slane %v4496, 4
      %v4499 = vor.u32 %v4498, %v4494
      %v4500 = vrot.slane %v4499, 4
      %v4502 = vshll.u32 %v4336, 16
      %v4504 = vrot.slane %v4502, 5
      %v4505 = vsel %vm982, %v4500, %v4504
      %v4507 = vshrl.u32 %v4327, 16
      %v4509 = vrot.slane %v4507, 4
      %v4510 = vshll.u32 %v4327, 16
      %v4512 = vrot.slane %v4510, 5
      %v4513 = vor.u32 %v4509, %v4512
      %v4514 = vrot.slane %v4513, 4
      %v4516 = vshll.u32 %v4328, 16
      %v4518 = vrot.slane %v4516, 5
      %v4519 = vsel %vm982, %v4514, %v4518
      %v4520 = vshrl.u32 %v4328, 16
      %v4522 = vrot.slane %v4520, 4
      %v4523 = vor.u32 %v4522, %v4518
      %v4524 = vrot.slane %v4523, 4
      %v4526 = vshll.u32 %v4337, 16
      %v4528 = vrot.slane %v4526, 5
      %v4529 = vsel %vm982, %v4524, %v4528
      %s4530 = scalar_lea.vmem %s4, 2
      %v4531 = vld [vmem:[%s4530] sm:$0x3]
      %v4532 = vunpack.c.l.b16 %v4351
      %v4533 = vunpack.c.l.b16 %v4361
      %v4534 = vunpack.c.l.b16 %v4375
      %v4535 = vunpack.c.l.b16 %v4385
      %v4536 = vunpack.c.l.b16 %v4399
      %v4537 = vunpack.c.l.b16 %v4409
      %v4538 = vunpack.c.l.b16 %v4423
      %v4539 = vunpack.c.l.b16 %v4433
      %v4540 = vunpack.c.l.b16 %v4447
      %v4541 = vunpack.c.l.b16 %v4457
      %v4542 = vunpack.c.l.b16 %v4471
      %v4543 = vunpack.c.l.b16 %v4481
      %v4544 = vunpack.c.l.b16 %v4495
      %v4545 = vunpack.c.l.b16 %v4505
      %v4546 = vunpack.c.l.b16 %v4519
      %v4547 = vunpack.c.l.b16 %v4529
      %v4548 = vpack.c.b16 %v4533, %v4532
      %v4549 = vpack.c.b16 %v4535, %v4534
      %v4550 = vpack.c.b16 %v4537, %v4536
      %v4551 = vpack.c.b16 %v4539, %v4538
      %v4552 = vpack.c.b16 %v4541, %v4540
      %v4553 = vpack.c.b16 %v4543, %v4542
      %v4554 = vpack.c.b16 %v4545, %v4544
      %v4555 = vpack.c.b16 %v4547, %v4546
      %v4557 = vsel %vm1255, %v4548, 0
      %v4560 = vsel %vm1255, %v4549, 0
      %v4563 = vsel %vm1255, %v4550, 0
      %v4566 = vsel %vm1255, %v4551, 0
      %v4569 = vsel %vm1255, %v4552, 0
      %v4572 = vsel %vm1255, %v4553, 0
      %v4575 = vsel %vm1255, %v4554, 0
      %v4578 = vsel %vm1255, %v4555, 0
      %v4581 = vsel %vm1286, %v4531, 0
      %4583 = vmatprep.subr.bf16.mxu0 0
      %4584 = vmatpush1.bf16.msra.mxu0 %v4581
      %4585 = vmatprep.subr.bf16.mxu0 0
      %4586 = vmatpush1.bf16.msra.mxu0 0
      %4587 = vmatprep.subr.bf16.mxu0 0
      %4588 = vmatpush1.bf16.msra.mxu0 0
      %4589 = vmatprep.subr.bf16.mxu0 0
      %4590 = vmatpush1.bf16.msra.mxu0 0
      %4591 = vmatprep.subr.bf16.mxu0 0
      %4592 = vmatpush1.bf16.msra.mxu0 0
      %4593 = vmatprep.subr.bf16.mxu0 0
      %4594 = vmatpush1.bf16.msra.mxu0 0
      %4595 = vmatprep.subr.bf16.mxu0 0
      %4596 = vmatpush1.bf16.msra.mxu0 0
      %4597 = vmatprep.subr.bf16.mxu0 0
      %4598 = vmatpush1.bf16.msra.mxu0 0
      %4599 = vmatprep.subr.bf16.mxu0 0
      %4600 = vmatpush1.bf16.msra.mxu0 0
      %4601 = vmatprep.subr.bf16.mxu0 0
      %4602 = vmatpush1.bf16.msra.mxu0 0
      %4603 = vmatprep.subr.bf16.mxu0 0
      %4604 = vmatpush1.bf16.msra.mxu0 0
      %4605 = vmatprep.subr.bf16.mxu0 0
      %4606 = vmatpush1.bf16.msra.mxu0 0
      %4607 = vmatprep.subr.bf16.mxu0 0
      %4608 = vmatpush1.bf16.msra.mxu0 0
      %4609 = vmatprep.subr.bf16.mxu0 0
      %4610 = vmatpush1.bf16.msra.mxu0 0
      %4611 = vmatprep.subr.bf16.mxu0 0
      %4612 = vmatpush1.bf16.msra.mxu0 0
      %4613 = vmatprep.subr.bf16.mxu0 0
      %4614 = vmatpush1.bf16.msra.mxu0 0
      %4615 = vmatprep.mubr.bf16.mxu0 0
      %4616 = vmatmul.mubr.bf16.gmra.mrb[0].mxu0 %v4557
      %v4617 = vpop.f32.mrb[0].mxu0
      %v4618 = vadd.f32 0.0, %v4617
      %v4619 = vpop.f32.mrb[0].mxu0
      %v4620 = vpop.f32.mrb[0].mxu0
      %v4621 = vadd.f32 0.0, %v4620
      %v4622 = vpop.f32.mrb[0].mxu0
      %4623 = vmatprep.mubr.bf16.mxu0 0
      %4624 = vmatmul.mubr.bf16.gmra.mrb[0].mxu0 %v4560
      %v4625 = vpop.f32.mrb[0].mxu0
      %v4626 = vadd.f32 0.0, %v4625
      %v4627 = vpop.f32.mrb[0].mxu0
      %v4628 = vpop.f32.mrb[0].mxu0
      %v4629 = vadd.f32 0.0, %v4628
      %v4630 = vpop.f32.mrb[0].mxu0
      %4631 = vmatprep.mubr.bf16.mxu0 0
      %4632 = vmatmul.mubr.bf16.gmra.mrb[0].mxu0 %v4563
      %v4633 = vpop.f32.mrb[0].mxu0
      %v4634 = vadd.f32 0.0, %v4633
      %v4635 = vpop.f32.mrb[0].mxu0
      %v4636 = vpop.f32.mrb[0].mxu0
      %v4637 = vadd.f32 0.0, %v4636
      %v4638 = vpop.f32.mrb[0].mxu0
      %4639 = vmatprep.mubr.bf16.mxu0 0
      %4640 = vmatmul.mubr.bf16.gmra.mrb[0].mxu0 %v4566
      %v4641 = vpop.f32.mrb[0].mxu0
      %v4642 = vadd.f32 0.0, %v4641
      %v4643 = vpop.f32.mrb[0].mxu0
      %v4644 = vpop.f32.mrb[0].mxu0
      %v4645 = vadd.f32 0.0, %v4644
      %v4646 = vpop.f32.mrb[0].mxu0
      %4647 = vmatprep.mubr.bf16.mxu0 0
      %4648 = vmatmul.mubr.bf16.gmra.mrb[0].mxu0 %v4569
      %v4649 = vpop.f32.mrb[0].mxu0
      %v4650 = vadd.f32 0.0, %v4649
      %v4651 = vpop.f32.mrb[0].mxu0
      %v4652 = vpop.f32.mrb[0].mxu0
      %v4653 = vadd.f32 0.0, %v4652
      %v4654 = vpop.f32.mrb[0].mxu0
      %4655 = vmatprep.mubr.bf16.mxu0 0
      %4656 = vmatmul.mubr.bf16.gmra.mrb[0].mxu0 %v4572
      %v4657 = vpop.f32.mrb[0].mxu0
      %v4658 = vadd.f32 0.0, %v4657
      %v4659 = vpop.f32.mrb[0].mxu0
      %v4660 = vpop.f32.mrb[0].mxu0
      %v4661 = vadd.f32 0.0, %v4660
      %v4662 = vpop.f32.mrb[0].mxu0
      %4663 = vmatprep.mubr.bf16.mxu0 0
      %4664 = vmatmul.mubr.bf16.gmra.mrb[0].mxu0 %v4575
      %v4665 = vpop.f32.mrb[0].mxu0
      %v4666 = vadd.f32 0.0, %v4665
      %v4667 = vpop.f32.mrb[0].mxu0
      %v4668 = vpop.f32.mrb[0].mxu0
      %v4669 = vadd.f32 0.0, %v4668
      %v4670 = vpop.f32.mrb[0].mxu0
      %4671 = vmatprep.mubr.bf16.mxu0 0
      %4672 = vmatmul.mubr.bf16.gmra.mrb[0].mxu0 %v4578
      %v4673 = vpop.f32.mrb[0].mxu0
      %v4674 = vadd.f32 0.0, %v4673
      %v4675 = vpop.f32.mrb[0].mxu0
      %v4676 = vpop.f32.mrb[0].mxu0
      %v4677 = vadd.f32 0.0, %v4676
      %v4678 = vpop.f32.mrb[0].mxu0
      %4679 = vdwg.mxu0
      %v4696 = vunpack.c.l.b16 %v4313
      %v4697 = vunpack.c.l.b16 %v4314
      %v4698 = vunpack.c.l.b16 %v4315
      %v4699 = vunpack.c.l.b16 %v4316
      %v4700 = vunpack.c.l.b16 %v4317
      %v4701 = vunpack.c.l.b16 %v4318
      %v4702 = vunpack.c.l.b16 %v4319
      %v4703 = vunpack.c.l.b16 %v4320
      %v4704 = vunpack.c.l.b16 %v4321
      %v4705 = vunpack.c.l.b16 %v4322
      %v4706 = vunpack.c.l.b16 %v4323
      %v4707 = vunpack.c.l.b16 %v4324
      %v4708 = vunpack.c.l.b16 %v4325
      %v4709 = vunpack.c.l.b16 %v4326
      %v4710 = vunpack.c.l.b16 %v4327
      %v4711 = vunpack.c.l.b16 %v4328
      %v4712 = vpack.c.b16 %v4697, %v4696
      %v4713 = vpack.c.b16 %v4699, %v4698
      %v4714 = vpack.c.b16 %v4701, %v4700
      %v4715 = vpack.c.b16 %v4703, %v4702
      %v4716 = vpack.c.b16 %v4705, %v4704
      %v4717 = vpack.c.b16 %v4707, %v4706
      %v4718 = vpack.c.b16 %v4709, %v4708
      %v4719 = vpack.c.b16 %v4711, %v4710
      %v4721 = vsel %vm1255, %v4712, 0
      %v4724 = vsel %vm1255, %v4713, 0
      %v4727 = vsel %vm1255, %v4714, 0
      %v4730 = vsel %vm1255, %v4715, 0
      %v4733 = vsel %vm1255, %v4716, 0
      %v4736 = vsel %vm1255, %v4717, 0
      %v4739 = vsel %vm1255, %v4718, 0
      %v4742 = vsel %vm1255, %v4719, 0
      %v4745 = vsel %vm1286, %v4329, 0
      %4747 = vmatprep.subr.bf16.mxu0 0
      %4748 = vmatpush1.bf16.msra.mxu0 %v4745
      %4749 = vmatprep.subr.bf16.mxu0 0
      %4750 = vmatpush1.bf16.msra.mxu0 0
      %4751 = vmatprep.subr.bf16.mxu0 0
      %4752 = vmatpush1.bf16.msra.mxu0 0
      %4753 = vmatprep.subr.bf16.mxu0 0
      %4754 = vmatpush1.bf16.msra.mxu0 0
      %4755 = vmatprep.subr.bf16.mxu0 0
      %4756 = vmatpush1.bf16.msra.mxu0 0
      %4757 = vmatprep.subr.bf16.mxu0 0
      %4758 = vmatpush1.bf16.msra.mxu0 0
      %4759 = vmatprep.subr.bf16.mxu0 0
      %4760 = vmatpush1.bf16.msra.mxu0 0
      %4761 = vmatprep.subr.bf16.mxu0 0
      %4762 = vmatpush1.bf16.msra.mxu0 0
      %4763 = vmatprep.subr.bf16.mxu0 0
      %4764 = vmatpush1.bf16.msra.mxu0 0
      %4765 = vmatprep.subr.bf16.mxu0 0
      %4766 = vmatpush1.bf16.msra.mxu0 0
      %4767 = vmatprep.subr.bf16.mxu0 0
      %4768 = vmatpush1.bf16.msra.mxu0 0
      %4769 = vmatprep.subr.bf16.mxu0 0
      %4770 = vmatpush1.bf16.msra.mxu0 0
      %4771 = vmatprep.subr.bf16.mxu0 0
      %4772 = vmatpush1.bf16.msra.mxu0 0
      %4773 = vmatprep.subr.bf16.mxu0 0
      %4774 = vmatpush1.bf16.msra.mxu0 0
      %4775 = vmatprep.subr.bf16.mxu0 0
      %4776 = vmatpush1.bf16.msra.mxu0 0
      %4777 = vmatprep.subr.bf16.mxu0 0
      %4778 = vmatpush1.bf16.msra.mxu0 0
      %4779 = vmatprep.mubr.bf16.mxu0 0
      %4780 = vmatmul.mubr.bf16.gmra.mrb[0].mxu0 %v4721
      %v4781 = vpop.f32.mrb[0].mxu0
      %v4782 = vadd.f32 %v4618, %v4781
      %v4783 = vpop.f32.mrb[0].mxu0
      %v4784 = vpop.f32.mrb[0].mxu0
      %v4785 = vadd.f32 %v4621, %v4784
      %v4786 = vpop.f32.mrb[0].mxu0
      %4787 = vmatprep.mubr.bf16.mxu0 0
      %4788 = vmatmul.mubr.bf16.gmra.mrb[0].mxu0 %v4724
      %v4789 = vpop.f32.mrb[0].mxu0
      %v4790 = vadd.f32 %v4626, %v4789
      %v4791 = vpop.f32.mrb[0].mxu0
      %v4792 = vpop.f32.mrb[0].mxu0
      %v4793 = vadd.f32 %v4629, %v4792
      %v4794 = vpop.f32.mrb[0].mxu0
      %4795 = vmatprep.mubr.bf16.mxu0 0
      %4796 = vmatmul.mubr.bf16.gmra.mrb[0].mxu0 %v4727
      %v4797 = vpop.f32.mrb[0].mxu0
      %v4798 = vadd.f32 %v4634, %v4797
      %v4799 = vpop.f32.mrb[0].mxu0
      %v4800 = vpop.f32.mrb[0].mxu0
      %v4801 = vadd.f32 %v4637, %v4800
      %v4802 = vpop.f32.mrb[0].mxu0
      %4803 = vmatprep.mubr.bf16.mxu0 0
      %4804 = vmatmul.mubr.bf16.gmra.mrb[0].mxu0 %v4730
      %v4805 = vpop.f32.mrb[0].mxu0
      %v4806 = vadd.f32 %v4642, %v4805
      %v4807 = vpop.f32.mrb[0].mxu0
      %v4808 = vpop.f32.mrb[0].mxu0
      %v4809 = vadd.f32 %v4645, %v4808
      %v4810 = vpop.f32.mrb[0].mxu0
      %4811 = vmatprep.mubr.bf16.mxu0 0
      %4812 = vmatmul.mubr.bf16.gmra.mrb[0].mxu0 %v4733
      %v4813 = vpop.f32.mrb[0].mxu0
      %v4814 = vadd.f32 %v4650, %v4813
      %v4815 = vpop.f32.mrb[0].mxu0
      %v4816 = vpop.f32.mrb[0].mxu0
      %v4817 = vadd.f32 %v4653, %v4816
      %v4818 = vpop.f32.mrb[0].mxu0
      %4819 = vmatprep.mubr.bf16.mxu0 0
      %4820 = vmatmul.mubr.bf16.gmra.mrb[0].mxu0 %v4736
      %v4821 = vpop.f32.mrb[0].mxu0
      %v4822 = vadd.f32 %v4658, %v4821
      %v4823 = vpop.f32.mrb[0].mxu0
      %v4824 = vpop.f32.mrb[0].mxu0
      %v4825 = vadd.f32 %v4661, %v4824
      %v4826 = vpop.f32.mrb[0].mxu0
      %4827 = vmatprep.mubr.bf16.mxu0 0
      %4828 = vmatmul.mubr.bf16.gmra.mrb[0].mxu0 %v4739
      %v4829 = vpop.f32.mrb[0].mxu0
      %v4830 = vadd.f32 %v4666, %v4829
      %v4831 = vpop.f32.mrb[0].mxu0
      %v4832 = vpop.f32.mrb[0].mxu0
      %v4833 = vadd.f32 %v4669, %v4832
      %v4834 = vpop.f32.mrb[0].mxu0
      %4835 = vmatprep.mubr.bf16.mxu0 0
      %4836 = vmatmul.mubr.bf16.gmra.mrb[0].mxu0 %v4742
      %v4837 = vpop.f32.mrb[0].mxu0
      %v4838 = vadd.f32 %v4674, %v4837
      %v4839 = vpop.f32.mrb[0].mxu0
      %v4840 = vpop.f32.mrb[0].mxu0
      %v4841 = vadd.f32 %v4677, %v4840
      %v4842 = vpop.f32.mrb[0].mxu0
      %4843 = vdwg.mxu0
      %v4844 = vld [vmem:[%s1900] sm:$0xe]
      %v4845 = vld [vmem:[%s1900 + $0xc] sm:$0xe]
      %v4846 = vld [vmem:[%s1900 + $0x18] sm:$0xe]
      %v4847 = vld [vmem:[%s1900 + $0x24] sm:$0xe]
      %v4848 = vld [vmem:[%s1900 + $0x30] sm:$0xe]
      %v4849 = vld [vmem:[%s1900 + $0x3c] sm:$0xe]
      %v4850 = vld [vmem:[%s1900 + $0x48] sm:$0xe]
      %v4851 = vld [vmem:[%s1900 + $0x54] sm:$0xe]
      %v4868 = vrot.slane %v4844, 5
      %v4869 = vrot.slane %v4868, 4
      %v4870 = vrot.slane %v4314, 5
      %v4871 = vsel %vm1631, %v4869, %v4870
      %v4872 = vrot.slane %v4870, 4
      %v4873 = vrot.slane %v4330, 5
      %v4874 = vsel %vm1631, %v4872, %v4873
      %v4875 = vrot.slane %v4845, 5
      %v4876 = vrot.slane %v4875, 4
      %v4877 = vrot.slane %v4316, 5
      %v4878 = vsel %vm1631, %v4876, %v4877
      %v4879 = vrot.slane %v4877, 4
      %v4880 = vrot.slane %v4331, 5
      %v4881 = vsel %vm1631, %v4879, %v4880
      %v4882 = vrot.slane %v4846, 5
      %v4883 = vrot.slane %v4882, 4
      %v4884 = vrot.slane %v4318, 5
      %v4885 = vsel %vm1631, %v4883, %v4884
      %v4886 = vrot.slane %v4884, 4
      %v4887 = vrot.slane %v4332, 5
      %v4888 = vsel %vm1631, %v4886, %v4887
      %v4889 = vrot.slane %v4847, 5
      %v4890 = vrot.slane %v4889, 4
      %v4891 = vrot.slane %v4320, 5
      %v4892 = vsel %vm1631, %v4890, %v4891
      %v4893 = vrot.slane %v4891, 4
      %v4894 = vrot.slane %v4333, 5
      %v4895 = vsel %vm1631, %v4893, %v4894
      %v4896 = vrot.slane %v4848, 5
      %v4897 = vrot.slane %v4896, 4
      %v4898 = vrot.slane %v4322, 5
      %v4899 = vsel %vm1631, %v4897, %v4898
      %v4900 = vrot.slane %v4898, 4
      %v4901 = vrot.slane %v4334, 5
      %v4902 = vsel %vm1631, %v4900, %v4901
      %v4903 = vrot.slane %v4849, 5
      %v4904 = vrot.slane %v4903, 4
      %v4905 = vrot.slane %v4324, 5
      %v4906 = vsel %vm1631, %v4904, %v4905
      %v4907 = vrot.slane %v4905, 4
      %v4908 = vrot.slane %v4335, 5
      %v4909 = vsel %vm1631, %v4907, %v4908
      %v4910 = vrot.slane %v4850, 5
      %v4911 = vrot.slane %v4910, 4
      %v4912 = vrot.slane %v4326, 5
      %v4913 = vsel %vm1631, %v4911, %v4912
      %v4914 = vrot.slane %v4912, 4
      %v4915 = vrot.slane %v4336, 5
      %v4916 = vsel %vm1631, %v4914, %v4915
      %v4917 = vrot.slane %v4851, 5
      %v4918 = vrot.slane %v4917, 4
      %v4919 = vrot.slane %v4328, 5
      %v4920 = vsel %vm1631, %v4918, %v4919
      %v4921 = vrot.slane %v4919, 4
      %v4922 = vrot.slane %v4337, 5
      %v4923 = vsel %vm1631, %v4921, %v4922
      %s4924 = scalar_lea.vmem %s4, 4
      %v4925 = vld [vmem:[%s4924] sm:$0x3]
      %v4926 = vunpack.c.l.b16 %v4871
      %v4927 = vunpack.c.l.b16 %v4874
      %v4928 = vunpack.c.l.b16 %v4878
      %v4929 = vunpack.c.l.b16 %v4881
      %v4930 = vunpack.c.l.b16 %v4885
      %v4931 = vunpack.c.l.b16 %v4888
      %v4932 = vunpack.c.l.b16 %v4892
      %v4933 = vunpack.c.l.b16 %v4895
      %v4934 = vunpack.c.l.b16 %v4899
      %v4935 = vunpack.c.l.b16 %v4902
      %v4936 = vunpack.c.l.b16 %v4906
      %v4937 = vunpack.c.l.b16 %v4909
      %v4938 = vunpack.c.l.b16 %v4913
      %v4939 = vunpack.c.l.b16 %v4916
      %v4940 = vunpack.c.l.b16 %v4920
      %v4941 = vunpack.c.l.b16 %v4923
      %v4942 = vpack.c.b16 %v4927, %v4926
      %v4943 = vpack.c.b16 %v4929, %v4928
      %v4944 = vpack.c.b16 %v4931, %v4930
      %v4945 = vpack.c.b16 %v4933, %v4932
      %v4946 = vpack.c.b16 %v4935, %v4934
      %v4947 = vpack.c.b16 %v4937, %v4936
      %v4948 = vpack.c.b16 %v4939, %v4938
      %v4949 = vpack.c.b16 %v4941, %v4940
      %v4951 = vsel %vm1255, %v4942, 0
      %v4954 = vsel %vm1255, %v4943, 0
      %v4957 = vsel %vm1255, %v4944, 0
      %v4960 = vsel %vm1255, %v4945, 0
      %v4963 = vsel %vm1255, %v4946, 0
      %v4966 = vsel %vm1255, %v4947, 0
      %v4969 = vsel %vm1255, %v4948, 0
      %v4972 = vsel %vm1255, %v4949, 0
      %v4975 = vsel %vm1286, %v4925, 0
      %4977 = vmatprep.subr.bf16.mxu0 0
      %4978 = vmatpush1.bf16.msra.mxu0 %v4975
      %4979 = vmatprep.subr.bf16.mxu0 0
      %4980 = vmatpush1.bf16.msra.mxu0 0
      %4981 = vmatprep.subr.bf16.mxu0 0
      %4982 = vmatpush1.bf16.msra.mxu0 0
      %4983 = vmatprep.subr.bf16.mxu0 0
      %4984 = vmatpush1.bf16.msra.mxu0 0
      %4985 = vmatprep.subr.bf16.mxu0 0
      %4986 = vmatpush1.bf16.msra.mxu0 0
      %4987 = vmatprep.subr.bf16.mxu0 0
      %4988 = vmatpush1.bf16.msra.mxu0 0
      %4989 = vmatprep.subr.bf16.mxu0 0
      %4990 = vmatpush1.bf16.msra.mxu0 0
      %4991 = vmatprep.subr.bf16.mxu0 0
      %4992 = vmatpush1.bf16.msra.mxu0 0
      %4993 = vmatprep.subr.bf16.mxu0 0
      %4994 = vmatpush1.bf16.msra.mxu0 0
      %4995 = vmatprep.subr.bf16.mxu0 0
      %4996 = vmatpush1.bf16.msra.mxu0 0
      %4997 = vmatprep.subr.bf16.mxu0 0
      %4998 = vmatpush1.bf16.msra.mxu0 0
      %4999 = vmatprep.subr.bf16.mxu0 0
      %5000 = vmatpush1.bf16.msra.mxu0 0
      %5001 = vmatprep.subr.bf16.mxu0 0
      %5002 = vmatpush1.bf16.msra.mxu0 0
      %5003 = vmatprep.subr.bf16.mxu0 0
      %5004 = vmatpush1.bf16.msra.mxu0 0
      %5005 = vmatprep.subr.bf16.mxu0 0
      %5006 = vmatpush1.bf16.msra.mxu0 0
      %5007 = vmatprep.subr.bf16.mxu0 0
      %5008 = vmatpush1.bf16.msra.mxu0 0
      %5009 = vmatprep.mubr.bf16.mxu0 0
      %5010 = vmatmul.mubr.bf16.gmra.mrb[0].mxu0 %v4951
      %v5011 = vpop.f32.mrb[0].mxu0
      %v5012 = vadd.f32 0.0, %v5011
      %v5013 = vpop.f32.mrb[0].mxu0
      %v5014 = vpop.f32.mrb[0].mxu0
      %v5015 = vadd.f32 0.0, %v5014
      %v5016 = vpop.f32.mrb[0].mxu0
      %5017 = vmatprep.mubr.bf16.mxu0 0
      %5018 = vmatmul.mubr.bf16.gmra.mrb[0].mxu0 %v4954
      %v5019 = vpop.f32.mrb[0].mxu0
      %v5020 = vadd.f32 0.0, %v5019
      %v5021 = vpop.f32.mrb[0].mxu0
      %v5022 = vpop.f32.mrb[0].mxu0
      %v5023 = vadd.f32 0.0, %v5022
      %v5024 = vpop.f32.mrb[0].mxu0
      %5025 = vmatprep.mubr.bf16.mxu0 0
      %5026 = vmatmul.mubr.bf16.gmra.mrb[0].mxu0 %v4957
      %v5027 = vpop.f32.mrb[0].mxu0
      %v5028 = vadd.f32 0.0, %v5027
      %v5029 = vpop.f32.mrb[0].mxu0
      %v5030 = vpop.f32.mrb[0].mxu0
      %v5031 = vadd.f32 0.0, %v5030
      %v5032 = vpop.f32.mrb[0].mxu0
      %5033 = vmatprep.mubr.bf16.mxu0 0
      %5034 = vmatmul.mubr.bf16.gmra.mrb[0].mxu0 %v4960
      %v5035 = vpop.f32.mrb[0].mxu0
      %v5036 = vadd.f32 0.0, %v5035
      %v5037 = vpop.f32.mrb[0].mxu0
      %v5038 = vpop.f32.mrb[0].mxu0
      %v5039 = vadd.f32 0.0, %v5038
      %v5040 = vpop.f32.mrb[0].mxu0
      %5041 = vmatprep.mubr.bf16.mxu0 0
      %5042 = vmatmul.mubr.bf16.gmra.mrb[0].mxu0 %v4963
      %v5043 = vpop.f32.mrb[0].mxu0
      %v5044 = vadd.f32 0.0, %v5043
      %v5045 = vpop.f32.mrb[0].mxu0
      %v5046 = vpop.f32.mrb[0].mxu0
      %v5047 = vadd.f32 0.0, %v5046
      %v5048 = vpop.f32.mrb[0].mxu0
      %5049 = vmatprep.mubr.bf16.mxu0 0
      %5050 = vmatmul.mubr.bf16.gmra.mrb[0].mxu0 %v4966
      %v5051 = vpop.f32.mrb[0].mxu0
      %v5052 = vadd.f32 0.0, %v5051
      %v5053 = vpop.f32.mrb[0].mxu0
      %v5054 = vpop.f32.mrb[0].mxu0
      %v5055 = vadd.f32 0.0, %v5054
      %v5056 = vpop.f32.mrb[0].mxu0
      %5057 = vmatprep.mubr.bf16.mxu0 0
      %5058 = vmatmul.mubr.bf16.gmra.mrb[0].mxu0 %v4969
      %v5059 = vpop.f32.mrb[0].mxu0
      %v5060 = vadd.f32 0.0, %v5059
      %v5061 = vpop.f32.mrb[0].mxu0
      %v5062 = vpop.f32.mrb[0].mxu0
      %v5063 = vadd.f32 0.0, %v5062
      %v5064 = vpop.f32.mrb[0].mxu0
      %5065 = vmatprep.mubr.bf16.mxu0 0
      %5066 = vmatmul.mubr.bf16.gmra.mrb[0].mxu0 %v4972
      %v5067 = vpop.f32.mrb[0].mxu0
      %v5068 = vadd.f32 0.0, %v5067
      %v5069 = vpop.f32.mrb[0].mxu0
      %v5070 = vpop.f32.mrb[0].mxu0
      %v5071 = vadd.f32 0.0, %v5070
      %v5072 = vpop.f32.mrb[0].mxu0
      %5073 = vdwg.mxu0
      %v5074 = vadd.f32 %v4782, %v5012
      %v5075 = vadd.f32 %v4785, %v5015
      %v5076 = vadd.f32 %v4790, %v5020
      %v5077 = vadd.f32 %v4793, %v5023
      %v5078 = vadd.f32 %v4798, %v5028
      %v5079 = vadd.f32 %v4801, %v5031
      %v5080 = vadd.f32 %v4806, %v5036
      %v5081 = vadd.f32 %v4809, %v5039
      %v5082 = vadd.f32 %v4814, %v5044
      %v5083 = vadd.f32 %v4817, %v5047
      %v5084 = vadd.f32 %v4822, %v5052
      %v5085 = vadd.f32 %v4825, %v5055
      %v5086 = vadd.f32 %v4830, %v5060
      %v5087 = vadd.f32 %v4833, %v5063
      %v5088 = vadd.f32 %v4838, %v5068
      %v5089 = vadd.f32 %v4841, %v5071
      %v5090 = vld [vmem:[%s889] sm:$0xf]
      %v5091 = vld [vmem:[%s889 + $0x4] sm:$0xf]
      %v5092 = vld [vmem:[%s889 + $0xc] sm:$0xf]
      %v5093 = vld [vmem:[%s889 + $0x10] sm:$0xf]
      %v5094 = vld [vmem:[%s889 + $0x18] sm:$0xf]
      %v5095 = vld [vmem:[%s889 + $0x1c] sm:$0xf]
      %v5096 = vld [vmem:[%s889 + $0x24] sm:$0xf]
      %v5097 = vld [vmem:[%s889 + $0x28] sm:$0xf]
      %v5098 = vld [vmem:[%s889 + $0x30] sm:$0xf]
      %v5099 = vld [vmem:[%s889 + $0x34] sm:$0xf]
      %v5100 = vld [vmem:[%s889 + $0x3c] sm:$0xf]
      %v5101 = vld [vmem:[%s889 + $0x40] sm:$0xf]
      %v5102 = vld [vmem:[%s889 + $0x48] sm:$0xf]
      %v5103 = vld [vmem:[%s889 + $0x4c] sm:$0xf]
      %v5104 = vld [vmem:[%s889 + $0x54] sm:$0xf]
      %v5105 = vld [vmem:[%s889 + $0x58] sm:$0xf]
      %s5106 = scalar_lea.vmem %s4, 6
      %v5107 = vld [vmem:[%s5106] sm:$0x3]
      %v5124 = vunpack.c.l.b16 %v5090
      %v5125 = vunpack.c.l.b16 %v5091
      %v5126 = vunpack.c.l.b16 %v5092
      %v5127 = vunpack.c.l.b16 %v5093
      %v5128 = vunpack.c.l.b16 %v5094
      %v5129 = vunpack.c.l.b16 %v5095
      %v5130 = vunpack.c.l.b16 %v5096
      %v5131 = vunpack.c.l.b16 %v5097
      %v5132 = vunpack.c.l.b16 %v5098
      %v5133 = vunpack.c.l.b16 %v5099
      %v5134 = vunpack.c.l.b16 %v5100
      %v5135 = vunpack.c.l.b16 %v5101
      %v5136 = vunpack.c.l.b16 %v5102
      %v5137 = vunpack.c.l.b16 %v5103
      %v5138 = vunpack.c.l.b16 %v5104
      %v5139 = vunpack.c.l.b16 %v5105
      %v5140 = vpack.c.b16 %v5125, %v5124
      %v5141 = vpack.c.b16 %v5127, %v5126
      %v5142 = vpack.c.b16 %v5129, %v5128
      %v5143 = vpack.c.b16 %v5131, %v5130
      %v5144 = vpack.c.b16 %v5133, %v5132
      %v5145 = vpack.c.b16 %v5135, %v5134
      %v5146 = vpack.c.b16 %v5137, %v5136
      %v5147 = vpack.c.b16 %v5139, %v5138
      %v5149 = vsel %vm1255, %v5140, 0
      %v5152 = vsel %vm1255, %v5141, 0
      %v5155 = vsel %vm1255, %v5142, 0
      %v5158 = vsel %vm1255, %v5143, 0
      %v5161 = vsel %vm1255, %v5144, 0
      %v5164 = vsel %vm1255, %v5145, 0
      %v5167 = vsel %vm1255, %v5146, 0
      %v5170 = vsel %vm1255, %v5147, 0
      %v5173 = vsel %vm1286, %v5107, 0
      %5175 = vmatprep.subr.bf16.mxu0 0
      %5176 = vmatpush1.bf16.msra.mxu0 %v5173
      %5177 = vmatprep.subr.bf16.mxu0 0
      %5178 = vmatpush1.bf16.msra.mxu0 0
      %5179 = vmatprep.subr.bf16.mxu0 0
      %5180 = vmatpush1.bf16.msra.mxu0 0
      %5181 = vmatprep.subr.bf16.mxu0 0
      %5182 = vmatpush1.bf16.msra.mxu0 0
      %5183 = vmatprep.subr.bf16.mxu0 0
      %5184 = vmatpush1.bf16.msra.mxu0 0
      %5185 = vmatprep.subr.bf16.mxu0 0
      %5186 = vmatpush1.bf16.msra.mxu0 0
      %5187 = vmatprep.subr.bf16.mxu0 0
      %5188 = vmatpush1.bf16.msra.mxu0 0
      %5189 = vmatprep.subr.bf16.mxu0 0
      %5190 = vmatpush1.bf16.msra.mxu0 0
      %5191 = vmatprep.subr.bf16.mxu0 0
      %5192 = vmatpush1.bf16.msra.mxu0 0
      %5193 = vmatprep.subr.bf16.mxu0 0
      %5194 = vmatpush1.bf16.msra.mxu0 0
      %5195 = vmatprep.subr.bf16.mxu0 0
      %5196 = vmatpush1.bf16.msra.mxu0 0
      %5197 = vmatprep.subr.bf16.mxu0 0
      %5198 = vmatpush1.bf16.msra.mxu0 0
      %5199 = vmatprep.subr.bf16.mxu0 0
      %5200 = vmatpush1.bf16.msra.mxu0 0
      %5201 = vmatprep.subr.bf16.mxu0 0
      %5202 = vmatpush1.bf16.msra.mxu0 0
      %5203 = vmatprep.subr.bf16.mxu0 0
      %5204 = vmatpush1.bf16.msra.mxu0 0
      %5205 = vmatprep.subr.bf16.mxu0 0
      %5206 = vmatpush1.bf16.msra.mxu0 0
      %5207 = vmatprep.mubr.bf16.mxu0 0
      %5208 = vmatmul.mubr.bf16.gmra.mrb[0].mxu0 %v5149
      %v5209 = vpop.f32.mrb[0].mxu0
      %v5210 = vadd.f32 0.0, %v5209
      %v5211 = vpop.f32.mrb[0].mxu0
      %v5212 = vpop.f32.mrb[0].mxu0
      %v5213 = vadd.f32 0.0, %v5212
      %v5214 = vpop.f32.mrb[0].mxu0
      %5215 = vmatprep.mubr.bf16.mxu0 0
      %5216 = vmatmul.mubr.bf16.gmra.mrb[0].mxu0 %v5152
      %v5217 = vpop.f32.mrb[0].mxu0
      %v5218 = vadd.f32 0.0, %v5217
      %v5219 = vpop.f32.mrb[0].mxu0
      %v5220 = vpop.f32.mrb[0].mxu0
      %v5221 = vadd.f32 0.0, %v5220
      %v5222 = vpop.f32.mrb[0].mxu0
      %5223 = vmatprep.mubr.bf16.mxu0 0
      %5224 = vmatmul.mubr.bf16.gmra.mrb[0].mxu0 %v5155
      %v5225 = vpop.f32.mrb[0].mxu0
      %v5226 = vadd.f32 0.0, %v5225
      %v5227 = vpop.f32.mrb[0].mxu0
      %v5228 = vpop.f32.mrb[0].mxu0
      %v5229 = vadd.f32 0.0, %v5228
      %v5230 = vpop.f32.mrb[0].mxu0
      %5231 = vmatprep.mubr.bf16.mxu0 0
      %5232 = vmatmul.mubr.bf16.gmra.mrb[0].mxu0 %v5158
      %v5233 = vpop.f32.mrb[0].mxu0
      %v5234 = vadd.f32 0.0, %v5233
      %v5235 = vpop.f32.mrb[0].mxu0
      %v5236 = vpop.f32.mrb[0].mxu0
      %v5237 = vadd.f32 0.0, %v5236
      %v5238 = vpop.f32.mrb[0].mxu0
      %5239 = vmatprep.mubr.bf16.mxu0 0
      %5240 = vmatmul.mubr.bf16.gmra.mrb[0].mxu0 %v5161
      %v5241 = vpop.f32.mrb[0].mxu0
      %v5242 = vadd.f32 0.0, %v5241
      %v5243 = vpop.f32.mrb[0].mxu0
      %v5244 = vpop.f32.mrb[0].mxu0
      %v5245 = vadd.f32 0.0, %v5244
      %v5246 = vpop.f32.mrb[0].mxu0
      %5247 = vmatprep.mubr.bf16.mxu0 0
      %5248 = vmatmul.mubr.bf16.gmra.mrb[0].mxu0 %v5164
      %v5249 = vpop.f32.mrb[0].mxu0
      %v5250 = vadd.f32 0.0, %v5249
      %v5251 = vpop.f32.mrb[0].mxu0
      %v5252 = vpop.f32.mrb[0].mxu0
      %v5253 = vadd.f32 0.0, %v5252
      %v5254 = vpop.f32.mrb[0].mxu0
      %5255 = vmatprep.mubr.bf16.mxu0 0
      %5256 = vmatmul.mubr.bf16.gmra.mrb[0].mxu0 %v5167
      %v5257 = vpop.f32.mrb[0].mxu0
      %v5258 = vadd.f32 0.0, %v5257
      %v5259 = vpop.f32.mrb[0].mxu0
      %v5260 = vpop.f32.mrb[0].mxu0
      %v5261 = vadd.f32 0.0, %v5260
      %v5262 = vpop.f32.mrb[0].mxu0
      %5263 = vmatprep.mubr.bf16.mxu0 0
      %5264 = vmatmul.mubr.bf16.gmra.mrb[0].mxu0 %v5170
      %v5265 = vpop.f32.mrb[0].mxu0
      %v5266 = vadd.f32 0.0, %v5265
      %v5267 = vpop.f32.mrb[0].mxu0
      %v5268 = vpop.f32.mrb[0].mxu0
      %v5269 = vadd.f32 0.0, %v5268
      %v5270 = vpop.f32.mrb[0].mxu0
      %5271 = vdwg.mxu0
      %v5272 = vadd.f32 %v5074, %v5210
      %v5273 = vadd.f32 %v5075, %v5213
      %v5274 = vadd.f32 %v5076, %v5218
      %v5275 = vadd.f32 %v5077, %v5221
      %v5276 = vadd.f32 %v5078, %v5226
      %v5277 = vadd.f32 %v5079, %v5229
      %v5278 = vadd.f32 %v5080, %v5234
      %v5279 = vadd.f32 %v5081, %v5237
      %v5280 = vadd.f32 %v5082, %v5242
      %v5281 = vadd.f32 %v5083, %v5245
      %v5282 = vadd.f32 %v5084, %v5250
      %v5283 = vadd.f32 %v5085, %v5253
      %v5284 = vadd.f32 %v5086, %v5258
      %v5285 = vadd.f32 %v5087, %v5261
      %v5286 = vadd.f32 %v5088, %v5266
      %v5287 = vadd.f32 %v5089, %v5269
      %v5288 = vld [vmem:[%s889] sm:$0xf]
      %v5289 = vld [vmem:[%s889 + $0x4] sm:$0xf]
      %v5290 = vld [vmem:[%s889 + $0x8] sm:$0x1]
      %v5291 = vld [vmem:[%s889 + $0xc] sm:$0xf]
      %v5292 = vld [vmem:[%s889 + $0x10] sm:$0xf]
      %v5293 = vld [vmem:[%s889 + $0x14] sm:$0x1]
      %v5294 = vld [vmem:[%s889 + $0x18] sm:$0xf]
      %v5295 = vld [vmem:[%s889 + $0x1c] sm:$0xf]
      %v5296 = vld [vmem:[%s889 + $0x20] sm:$0x1]
      %v5297 = vld [vmem:[%s889 + $0x24] sm:$0xf]
      %v5298 = vld [vmem:[%s889 + $0x28] sm:$0xf]
      %v5299 = vld [vmem:[%s889 + $0x2c] sm:$0x1]
      %v5300 = vld [vmem:[%s889 + $0x30] sm:$0xf]
      %v5301 = vld [vmem:[%s889 + $0x34] sm:$0xf]
      %v5302 = vld [vmem:[%s889 + $0x38] sm:$0x1]
      %v5303 = vld [vmem:[%s889 + $0x3c] sm:$0xf]
      %v5304 = vld [vmem:[%s889 + $0x40] sm:$0xf]
      %v5305 = vld [vmem:[%s889 + $0x44] sm:$0x1]
      %v5306 = vld [vmem:[%s889 + $0x48] sm:$0xf]
      %v5307 = vld [vmem:[%s889 + $0x4c] sm:$0xf]
      %v5308 = vld [vmem:[%s889 + $0x50] sm:$0x1]
      %v5309 = vld [vmem:[%s889 + $0x54] sm:$0xf]
      %v5310 = vld [vmem:[%s889 + $0x58] sm:$0xf]
      %v5311 = vld [vmem:[%s889 + $0x5c] sm:$0x1]
      %v5313 = vshrl.u32 %v5288, 16
      %v5315 = vrot.slane %v5313, 4
      %v5316 = vshll.u32 %v5288, 16
      %v5318 = vrot.slane %v5316, 5
      %v5319 = vor.u32 %v5315, %v5318
      %v5320 = vrot.slane %v5319, 4
      %v5322 = vshll.u32 %v5289, 16
      %v5324 = vrot.slane %v5322, 5
      %v5325 = vsel %vm982, %v5320, %v5324
      %v5326 = vshrl.u32 %v5289, 16
      %v5328 = vrot.slane %v5326, 4
      %v5329 = vor.u32 %v5328, %v5324
      %v5330 = vrot.slane %v5329, 4
      %v5332 = vshll.u32 %v5290, 16
      %v5334 = vrot.slane %v5332, 5
      %v5335 = vsel %vm982, %v5330, %v5334
      %v5337 = vshrl.u32 %v5291, 16
      %v5339 = vrot.slane %v5337, 4
      %v5340 = vshll.u32 %v5291, 16
      %v5342 = vrot.slane %v5340, 5
      %v5343 = vor.u32 %v5339, %v5342
      %v5344 = vrot.slane %v5343, 4
      %v5346 = vshll.u32 %v5292, 16
      %v5348 = vrot.slane %v5346, 5
      %v5349 = vsel %vm982, %v5344, %v5348
      %v5350 = vshrl.u32 %v5292, 16
      %v5352 = vrot.slane %v5350, 4
      %v5353 = vor.u32 %v5352, %v5348
      %v5354 = vrot.slane %v5353, 4
      %v5356 = vshll.u32 %v5293, 16
      %v5358 = vrot.slane %v5356, 5
      %v5359 = vsel %vm982, %v5354, %v5358
      %v5361 = vshrl.u32 %v5294, 16
      %v5363 = vrot.slane %v5361, 4
      %v5364 = vshll.u32 %v5294, 16
      %v5366 = vrot.slane %v5364, 5
      %v5367 = vor.u32 %v5363, %v5366
      %v5368 = vrot.slane %v5367, 4
      %v5370 = vshll.u32 %v5295, 16
      %v5372 = vrot.slane %v5370, 5
      %v5373 = vsel %vm982, %v5368, %v5372
      %v5374 = vshrl.u32 %v5295, 16
      %v5376 = vrot.slane %v5374, 4
      %v5377 = vor.u32 %v5376, %v5372
      %v5378 = vrot.slane %v5377, 4
      %v5380 = vshll.u32 %v5296, 16
      %v5382 = vrot.slane %v5380, 5
      %v5383 = vsel %vm982, %v5378, %v5382
      %v5385 = vshrl.u32 %v5297, 16
      %v5387 = vrot.slane %v5385, 4
      %v5388 = vshll.u32 %v5297, 16
      %v5390 = vrot.slane %v5388, 5
      %v5391 = vor.u32 %v5387, %v5390
      %v5392 = vrot.slane %v5391, 4
      %v5394 = vshll.u32 %v5298, 16
      %v5396 = vrot.slane %v5394, 5
      %v5397 = vsel %vm982, %v5392, %v5396
      %v5398 = vshrl.u32 %v5298, 16
      %v5400 = vrot.slane %v5398, 4
      %v5401 = vor.u32 %v5400, %v5396
      %v5402 = vrot.slane %v5401, 4
      %v5404 = vshll.u32 %v5299, 16
      %v5406 = vrot.slane %v5404, 5
      %v5407 = vsel %vm982, %v5402, %v5406
      %v5409 = vshrl.u32 %v5300, 16
      %v5411 = vrot.slane %v5409, 4
      %v5412 = vshll.u32 %v5300, 16
      %v5414 = vrot.slane %v5412, 5
      %v5415 = vor.u32 %v5411, %v5414
      %v5416 = vrot.slane %v5415, 4
      %v5418 = vshll.u32 %v5301, 16
      %v5420 = vrot.slane %v5418, 5
      %v5421 = vsel %vm982, %v5416, %v5420
      %v5422 = vshrl.u32 %v5301, 16
      %v5424 = vrot.slane %v5422, 4
      %v5425 = vor.u32 %v5424, %v5420
      %v5426 = vrot.slane %v5425, 4
      %v5428 = vshll.u32 %v5302, 16
      %v5430 = vrot.slane %v5428, 5
      %v5431 = vsel %vm982, %v5426, %v5430
      %v5433 = vshrl.u32 %v5303, 16
      %v5435 = vrot.slane %v5433, 4
      %v5436 = vshll.u32 %v5303, 16
      %v5438 = vrot.slane %v5436, 5
      %v5439 = vor.u32 %v5435, %v5438
      %v5440 = vrot.slane %v5439, 4
      %v5442 = vshll.u32 %v5304, 16
      %v5444 = vrot.slane %v5442, 5
      %v5445 = vsel %vm982, %v5440, %v5444
      %v5446 = vshrl.u32 %v5304, 16
      %v5448 = vrot.slane %v5446, 4
      %v5449 = vor.u32 %v5448, %v5444
      %v5450 = vrot.slane %v5449, 4
      %v5452 = vshll.u32 %v5305, 16
      %v5454 = vrot.slane %v5452, 5
      %v5455 = vsel %vm982, %v5450, %v5454
      %v5457 = vshrl.u32 %v5306, 16
      %v5459 = vrot.slane %v5457, 4
      %v5460 = vshll.u32 %v5306, 16
      %v5462 = vrot.slane %v5460, 5
      %v5463 = vor.u32 %v5459, %v5462
      %v5464 = vrot.slane %v5463, 4
      %v5466 = vshll.u32 %v5307, 16
      %v5468 = vrot.slane %v5466, 5
      %v5469 = vsel %vm982, %v5464, %v5468
      %v5470 = vshrl.u32 %v5307, 16
      %v5472 = vrot.slane %v5470, 4
      %v5473 = vor.u32 %v5472, %v5468
      %v5474 = vrot.slane %v5473, 4
      %v5476 = vshll.u32 %v5308, 16
      %v5478 = vrot.slane %v5476, 5
      %v5479 = vsel %vm982, %v5474, %v5478
      %v5481 = vshrl.u32 %v5309, 16
      %v5483 = vrot.slane %v5481, 4
      %v5484 = vshll.u32 %v5309, 16
      %v5486 = vrot.slane %v5484, 5
      %v5487 = vor.u32 %v5483, %v5486
      %v5488 = vrot.slane %v5487, 4
      %v5490 = vshll.u32 %v5310, 16
      %v5492 = vrot.slane %v5490, 5
      %v5493 = vsel %vm982, %v5488, %v5492
      %v5494 = vshrl.u32 %v5310, 16
      %v5496 = vrot.slane %v5494, 4
      %v5497 = vor.u32 %v5496, %v5492
      %v5498 = vrot.slane %v5497, 4
      %v5500 = vshll.u32 %v5311, 16
      %v5502 = vrot.slane %v5500, 5
      %v5503 = vsel %vm982, %v5498, %v5502
      %s5504 = scalar_lea.vmem %s4, 8
      %v5505 = vld [vmem:[%s5504] sm:$0x3]
      %v5506 = vunpack.c.l.b16 %v5325
      %v5507 = vunpack.c.l.b16 %v5335
      %v5508 = vunpack.c.l.b16 %v5349
      %v5509 = vunpack.c.l.b16 %v5359
      %v5510 = vunpack.c.l.b16 %v5373
      %v5511 = vunpack.c.l.b16 %v5383
      %v5512 = vunpack.c.l.b16 %v5397
      %v5513 = vunpack.c.l.b16 %v5407
      %v5514 = vunpack.c.l.b16 %v5421
      %v5515 = vunpack.c.l.b16 %v5431
      %v5516 = vunpack.c.l.b16 %v5445
      %v5517 = vunpack.c.l.b16 %v5455
      %v5518 = vunpack.c.l.b16 %v5469
      %v5519 = vunpack.c.l.b16 %v5479
      %v5520 = vunpack.c.l.b16 %v5493
      %v5521 = vunpack.c.l.b16 %v5503
      %v5522 = vpack.c.b16 %v5507, %v5506
      %v5523 = vpack.c.b16 %v5509, %v5508
      %v5524 = vpack.c.b16 %v5511, %v5510
      %v5525 = vpack.c.b16 %v5513, %v5512
      %v5526 = vpack.c.b16 %v5515, %v5514
      %v5527 = vpack.c.b16 %v5517, %v5516
      %v5528 = vpack.c.b16 %v5519, %v5518
      %v5529 = vpack.c.b16 %v5521, %v5520
      %v5531 = vsel %vm1255, %v5522, 0
      %v5534 = vsel %vm1255, %v5523, 0
      %v5537 = vsel %vm1255, %v5524, 0
      %v5540 = vsel %vm1255, %v5525, 0
      %v5543 = vsel %vm1255, %v5526, 0
      %v5546 = vsel %vm1255, %v5527, 0
      %v5549 = vsel %vm1255, %v5528, 0
      %v5552 = vsel %vm1255, %v5529, 0
      %v5555 = vsel %vm1286, %v5505, 0
      %5557 = vmatprep.subr.bf16.mxu0 0
      %5558 = vmatpush1.bf16.msra.mxu0 %v5555
      %5559 = vmatprep.subr.bf16.mxu0 0
      %5560 = vmatpush1.bf16.msra.mxu0 0
      %5561 = vmatprep.subr.bf16.mxu0 0
      %5562 = vmatpush1.bf16.msra.mxu0 0
      %5563 = vmatprep.subr.bf16.mxu0 0
      %5564 = vmatpush1.bf16.msra.mxu0 0
      %5565 = vmatprep.subr.bf16.mxu0 0
      %5566 = vmatpush1.bf16.msra.mxu0 0
      %5567 = vmatprep.subr.bf16.mxu0 0
      %5568 = vmatpush1.bf16.msra.mxu0 0
      %5569 = vmatprep.subr.bf16.mxu0 0
      %5570 = vmatpush1.bf16.msra.mxu0 0
      %5571 = vmatprep.subr.bf16.mxu0 0
      %5572 = vmatpush1.bf16.msra.mxu0 0
      %5573 = vmatprep.subr.bf16.mxu0 0
      %5574 = vmatpush1.bf16.msra.mxu0 0
      %5575 = vmatprep.subr.bf16.mxu0 0
      %5576 = vmatpush1.bf16.msra.mxu0 0
      %5577 = vmatprep.subr.bf16.mxu0 0
      %5578 = vmatpush1.bf16.msra.mxu0 0
      %5579 = vmatprep.subr.bf16.mxu0 0
      %5580 = vmatpush1.bf16.msra.mxu0 0
      %5581 = vmatprep.subr.bf16.mxu0 0
      %5582 = vmatpush1.bf16.msra.mxu0 0
      %5583 = vmatprep.subr.bf16.mxu0 0
      %5584 = vmatpush1.bf16.msra.mxu0 0
      %5585 = vmatprep.subr.bf16.mxu0 0
      %5586 = vmatpush1.bf16.msra.mxu0 0
      %5587 = vmatprep.subr.bf16.mxu0 0
      %5588 = vmatpush1.bf16.msra.mxu0 0
      %5589 = vmatprep.mubr.bf16.mxu0 0
      %5590 = vmatmul.mubr.bf16.gmra.mrb[0].mxu0 %v5531
      %v5591 = vpop.f32.mrb[0].mxu0
      %v5592 = vadd.f32 0.0, %v5591
      %v5593 = vpop.f32.mrb[0].mxu0
      %v5594 = vpop.f32.mrb[0].mxu0
      %v5595 = vadd.f32 0.0, %v5594
      %v5596 = vpop.f32.mrb[0].mxu0
      %5597 = vmatprep.mubr.bf16.mxu0 0
      %5598 = vmatmul.mubr.bf16.gmra.mrb[0].mxu0 %v5534
      %v5599 = vpop.f32.mrb[0].mxu0
      %v5600 = vadd.f32 0.0, %v5599
      %v5601 = vpop.f32.mrb[0].mxu0
      %v5602 = vpop.f32.mrb[0].mxu0
      %v5603 = vadd.f32 0.0, %v5602
      %v5604 = vpop.f32.mrb[0].mxu0
      %5605 = vmatprep.mubr.bf16.mxu0 0
      %5606 = vmatmul.mubr.bf16.gmra.mrb[0].mxu0 %v5537
      %v5607 = vpop.f32.mrb[0].mxu0
      %v5608 = vadd.f32 0.0, %v5607
      %v5609 = vpop.f32.mrb[0].mxu0
      %v5610 = vpop.f32.mrb[0].mxu0
      %v5611 = vadd.f32 0.0, %v5610
      %v5612 = vpop.f32.mrb[0].mxu0
      %5613 = vmatprep.mubr.bf16.mxu0 0
      %5614 = vmatmul.mubr.bf16.gmra.mrb[0].mxu0 %v5540
      %v5615 = vpop.f32.mrb[0].mxu0
      %v5616 = vadd.f32 0.0, %v5615
      %v5617 = vpop.f32.mrb[0].mxu0
      %v5618 = vpop.f32.mrb[0].mxu0
      %v5619 = vadd.f32 0.0, %v5618
      %v5620 = vpop.f32.mrb[0].mxu0
      %5621 = vmatprep.mubr.bf16.mxu0 0
      %5622 = vmatmul.mubr.bf16.gmra.mrb[0].mxu0 %v5543
      %v5623 = vpop.f32.mrb[0].mxu0
      %v5624 = vadd.f32 0.0, %v5623
      %v5625 = vpop.f32.mrb[0].mxu0
      %v5626 = vpop.f32.mrb[0].mxu0
      %v5627 = vadd.f32 0.0, %v5626
      %v5628 = vpop.f32.mrb[0].mxu0
      %5629 = vmatprep.mubr.bf16.mxu0 0
      %5630 = vmatmul.mubr.bf16.gmra.mrb[0].mxu0 %v5546
      %v5631 = vpop.f32.mrb[0].mxu0
      %v5632 = vadd.f32 0.0, %v5631
      %v5633 = vpop.f32.mrb[0].mxu0
      %v5634 = vpop.f32.mrb[0].mxu0
      %v5635 = vadd.f32 0.0, %v5634
      %v5636 = vpop.f32.mrb[0].mxu0
      %5637 = vmatprep.mubr.bf16.mxu0 0
      %5638 = vmatmul.mubr.bf16.gmra.mrb[0].mxu0 %v5549
      %v5639 = vpop.f32.mrb[0].mxu0
      %v5640 = vadd.f32 0.0, %v5639
      %v5641 = vpop.f32.mrb[0].mxu0
      %v5642 = vpop.f32.mrb[0].mxu0
      %v5643 = vadd.f32 0.0, %v5642
      %v5644 = vpop.f32.mrb[0].mxu0
      %5645 = vmatprep.mubr.bf16.mxu0 0
      %5646 = vmatmul.mubr.bf16.gmra.mrb[0].mxu0 %v5552
      %v5647 = vpop.f32.mrb[0].mxu0
      %v5648 = vadd.f32 0.0, %v5647
      %v5649 = vpop.f32.mrb[0].mxu0
      %v5650 = vpop.f32.mrb[0].mxu0
      %v5651 = vadd.f32 0.0, %v5650
      %v5652 = vpop.f32.mrb[0].mxu0
      %5653 = vdwg.mxu0
      %v5654 = vadd.f32 %v5272, %v5592
      %v5655 = vadd.f32 %v5273, %v5595
      %v5656 = vadd.f32 %v5274, %v5600
      %v5657 = vadd.f32 %v5275, %v5603
      %v5658 = vadd.f32 %v5276, %v5608
      %v5659 = vadd.f32 %v5277, %v5611
      %v5660 = vadd.f32 %v5278, %v5616
      %v5661 = vadd.f32 %v5279, %v5619
      %v5662 = vadd.f32 %v5280, %v5624
      %v5663 = vadd.f32 %v5281, %v5627
      %v5664 = vadd.f32 %v5282, %v5632
      %v5665 = vadd.f32 %v5283, %v5635
      %v5666 = vadd.f32 %v5284, %v5640
      %v5667 = vadd.f32 %v5285, %v5643
      %v5668 = vadd.f32 %v5286, %v5648
      %v5669 = vadd.f32 %v5287, %v5651
      %v5670 = vld [vmem:[%s889] sm:$0xe]
      %v5671 = vld [vmem:[%s889 + $0xc] sm:$0xe]
      %v5672 = vld [vmem:[%s889 + $0x18] sm:$0xe]
      %v5673 = vld [vmem:[%s889 + $0x24] sm:$0xe]
      %v5674 = vld [vmem:[%s889 + $0x30] sm:$0xe]
      %v5675 = vld [vmem:[%s889 + $0x3c] sm:$0xe]
      %v5676 = vld [vmem:[%s889 + $0x48] sm:$0xe]
      %v5677 = vld [vmem:[%s889 + $0x54] sm:$0xe]
      %v5702 = vrot.slane %v5670, 5
      %v5703 = vrot.slane %v5702, 4
      %v5704 = vrot.slane %v5289, 5
      %v5705 = vsel %vm1631, %v5703, %v5704
      %v5706 = vrot.slane %v5704, 4
      %v5707 = vrot.slane %v5290, 5
      %v5708 = vsel %vm1631, %v5706, %v5707
      %v5709 = vrot.slane %v5671, 5
      %v5710 = vrot.slane %v5709, 4
      %v5711 = vrot.slane %v5292, 5
      %v5712 = vsel %vm1631, %v5710, %v5711
      %v5713 = vrot.slane %v5711, 4
      %v5714 = vrot.slane %v5293, 5
      %v5715 = vsel %vm1631, %v5713, %v5714
      %v5716 = vrot.slane %v5672, 5
      %v5717 = vrot.slane %v5716, 4
      %v5718 = vrot.slane %v5295, 5
      %v5719 = vsel %vm1631, %v5717, %v5718
      %v5720 = vrot.slane %v5718, 4
      %v5721 = vrot.slane %v5296, 5
      %v5722 = vsel %vm1631, %v5720, %v5721
      %v5723 = vrot.slane %v5673, 5
      %v5724 = vrot.slane %v5723, 4
      %v5725 = vrot.slane %v5298, 5
      %v5726 = vsel %vm1631, %v5724, %v5725
      %v5727 = vrot.slane %v5725, 4
      %v5728 = vrot.slane %v5299, 5
      %v5729 = vsel %vm1631, %v5727, %v5728
      %v5730 = vrot.slane %v5674, 5
      %v5731 = vrot.slane %v5730, 4
      %v5732 = vrot.slane %v5301, 5
      %v5733 = vsel %vm1631, %v5731, %v5732
      %v5734 = vrot.slane %v5732, 4
      %v5735 = vrot.slane %v5302, 5
      %v5736 = vsel %vm1631, %v5734, %v5735
      %v5737 = vrot.slane %v5675, 5
      %v5738 = vrot.slane %v5737, 4
      %v5739 = vrot.slane %v5304, 5
      %v5740 = vsel %vm1631, %v5738, %v5739
      %v5741 = vrot.slane %v5739, 4
      %v5742 = vrot.slane %v5305, 5
      %v5743 = vsel %vm1631, %v5741, %v5742
      %v5744 = vrot.slane %v5676, 5
      %v5745 = vrot.slane %v5744, 4
      %v5746 = vrot.slane %v5307, 5
      %v5747 = vsel %vm1631, %v5745, %v5746
      %v5748 = vrot.slane %v5746, 4
      %v5749 = vrot.slane %v5308, 5
      %v5750 = vsel %vm1631, %v5748, %v5749
      %v5751 = vrot.slane %v5677, 5
      %v5752 = vrot.slane %v5751, 4
      %v5753 = vrot.slane %v5310, 5
      %v5754 = vsel %vm1631, %v5752, %v5753
      %v5755 = vrot.slane %v5753, 4
      %v5756 = vrot.slane %v5311, 5
      %v5757 = vsel %vm1631, %v5755, %v5756
      %s5758 = scalar_lea.vmem %s4, 10
      %v5759 = vld [vmem:[%s5758] sm:$0x3]
      %v5760 = vunpack.c.l.b16 %v5705
      %v5761 = vunpack.c.l.b16 %v5708
      %v5762 = vunpack.c.l.b16 %v5712
      %v5763 = vunpack.c.l.b16 %v5715
      %v5764 = vunpack.c.l.b16 %v5719
      %v5765 = vunpack.c.l.b16 %v5722
      %v5766 = vunpack.c.l.b16 %v5726
      %v5767 = vunpack.c.l.b16 %v5729
      %v5768 = vunpack.c.l.b16 %v5733
      %v5769 = vunpack.c.l.b16 %v5736
      %v5770 = vunpack.c.l.b16 %v5740
      %v5771 = vunpack.c.l.b16 %v5743
      %v5772 = vunpack.c.l.b16 %v5747
      %v5773 = vunpack.c.l.b16 %v5750
      %v5774 = vunpack.c.l.b16 %v5754
      %v5775 = vunpack.c.l.b16 %v5757
      %v5776 = vpack.c.b16 %v5761, %v5760
      %v5777 = vpack.c.b16 %v5763, %v5762
      %v5778 = vpack.c.b16 %v5765, %v5764
      %v5779 = vpack.c.b16 %v5767, %v5766
      %v5780 = vpack.c.b16 %v5769, %v5768
      %v5781 = vpack.c.b16 %v5771, %v5770
      %v5782 = vpack.c.b16 %v5773, %v5772
      %v5783 = vpack.c.b16 %v5775, %v5774
      %v5785 = vsel %vm1255, %v5776, 0
      %v5788 = vsel %vm1255, %v5777, 0
      %v5791 = vsel %vm1255, %v5778, 0
      %v5794 = vsel %vm1255, %v5779, 0
      %v5797 = vsel %vm1255, %v5780, 0
      %v5800 = vsel %vm1255, %v5781, 0
      %v5803 = vsel %vm1255, %v5782, 0
      %v5806 = vsel %vm1255, %v5783, 0
      %v5809 = vsel %vm1286, %v5759, 0
      %5811 = vmatprep.subr.bf16.mxu0 0
      %5812 = vmatpush1.bf16.msra.mxu0 %v5809
      %5813 = vmatprep.subr.bf16.mxu0 0
      %5814 = vmatpush1.bf16.msra.mxu0 0
      %5815 = vmatprep.subr.bf16.mxu0 0
      %5816 = vmatpush1.bf16.msra.mxu0 0
      %5817 = vmatprep.subr.bf16.mxu0 0
      %5818 = vmatpush1.bf16.msra.mxu0 0
      %5819 = vmatprep.subr.bf16.mxu0 0
      %5820 = vmatpush1.bf16.msra.mxu0 0
      %5821 = vmatprep.subr.bf16.mxu0 0
      %5822 = vmatpush1.bf16.msra.mxu0 0
      %5823 = vmatprep.subr.bf16.mxu0 0
      %5824 = vmatpush1.bf16.msra.mxu0 0
      %5825 = vmatprep.subr.bf16.mxu0 0
      %5826 = vmatpush1.bf16.msra.mxu0 0
      %5827 = vmatprep.subr.bf16.mxu0 0
      %5828 = vmatpush1.bf16.msra.mxu0 0
      %5829 = vmatprep.subr.bf16.mxu0 0
      %5830 = vmatpush1.bf16.msra.mxu0 0
      %5831 = vmatprep.subr.bf16.mxu0 0
      %5832 = vmatpush1.bf16.msra.mxu0 0
      %5833 = vmatprep.subr.bf16.mxu0 0
      %5834 = vmatpush1.bf16.msra.mxu0 0
      %5835 = vmatprep.subr.bf16.mxu0 0
      %5836 = vmatpush1.bf16.msra.mxu0 0
      %5837 = vmatprep.subr.bf16.mxu0 0
      %5838 = vmatpush1.bf16.msra.mxu0 0
      %5839 = vmatprep.subr.bf16.mxu0 0
      %5840 = vmatpush1.bf16.msra.mxu0 0
      %5841 = vmatprep.subr.bf16.mxu0 0
      %5842 = vmatpush1.bf16.msra.mxu0 0
      %5843 = vmatprep.mubr.bf16.mxu0 0
      %5844 = vmatmul.mubr.bf16.gmra.mrb[0].mxu0 %v5785
      %v5845 = vpop.f32.mrb[0].mxu0
      %v5846 = vadd.f32 0.0, %v5845
      %v5847 = vpop.f32.mrb[0].mxu0
      %v5848 = vpop.f32.mrb[0].mxu0
      %v5849 = vadd.f32 0.0, %v5848
      %v5850 = vpop.f32.mrb[0].mxu0
      %5851 = vmatprep.mubr.bf16.mxu0 0
      %5852 = vmatmul.mubr.bf16.gmra.mrb[0].mxu0 %v5788
      %v5853 = vpop.f32.mrb[0].mxu0
      %v5854 = vadd.f32 0.0, %v5853
      %v5855 = vpop.f32.mrb[0].mxu0
      %v5856 = vpop.f32.mrb[0].mxu0
      %v5857 = vadd.f32 0.0, %v5856
      %v5858 = vpop.f32.mrb[0].mxu0
      %5859 = vmatprep.mubr.bf16.mxu0 0
      %5860 = vmatmul.mubr.bf16.gmra.mrb[0].mxu0 %v5791
      %v5861 = vpop.f32.mrb[0].mxu0
      %v5862 = vadd.f32 0.0, %v5861
      %v5863 = vpop.f32.mrb[0].mxu0
      %v5864 = vpop.f32.mrb[0].mxu0
      %v5865 = vadd.f32 0.0, %v5864
      %v5866 = vpop.f32.mrb[0].mxu0
      %5867 = vmatprep.mubr.bf16.mxu0 0
      %5868 = vmatmul.mubr.bf16.gmra.mrb[0].mxu0 %v5794
      %v5869 = vpop.f32.mrb[0].mxu0
      %v5870 = vadd.f32 0.0, %v5869
      %v5871 = vpop.f32.mrb[0].mxu0
      %v5872 = vpop.f32.mrb[0].mxu0
      %v5873 = vadd.f32 0.0, %v5872
      %v5874 = vpop.f32.mrb[0].mxu0
      %5875 = vmatprep.mubr.bf16.mxu0 0
      %5876 = vmatmul.mubr.bf16.gmra.mrb[0].mxu0 %v5797
      %v5877 = vpop.f32.mrb[0].mxu0
      %v5878 = vadd.f32 0.0, %v5877
      %v5879 = vpop.f32.mrb[0].mxu0
      %v5880 = vpop.f32.mrb[0].mxu0
      %v5881 = vadd.f32 0.0, %v5880
      %v5882 = vpop.f32.mrb[0].mxu0
      %5883 = vmatprep.mubr.bf16.mxu0 0
      %5884 = vmatmul.mubr.bf16.gmra.mrb[0].mxu0 %v5800
      %v5885 = vpop.f32.mrb[0].mxu0
      %v5886 = vadd.f32 0.0, %v5885
      %v5887 = vpop.f32.mrb[0].mxu0
      %v5888 = vpop.f32.mrb[0].mxu0
      %v5889 = vadd.f32 0.0, %v5888
      %v5890 = vpop.f32.mrb[0].mxu0
      %5891 = vmatprep.mubr.bf16.mxu0 0
      %5892 = vmatmul.mubr.bf16.gmra.mrb[0].mxu0 %v5803
      %v5893 = vpop.f32.mrb[0].mxu0
      %v5894 = vadd.f32 0.0, %v5893
      %v5895 = vpop.f32.mrb[0].mxu0
      %v5896 = vpop.f32.mrb[0].mxu0
      %v5897 = vadd.f32 0.0, %v5896
      %v5898 = vpop.f32.mrb[0].mxu0
      %5899 = vmatprep.mubr.bf16.mxu0 0
      %5900 = vmatmul.mubr.bf16.gmra.mrb[0].mxu0 %v5806
      %v5901 = vpop.f32.mrb[0].mxu0
      %v5902 = vadd.f32 0.0, %v5901
      %v5903 = vpop.f32.mrb[0].mxu0
      %v5904 = vpop.f32.mrb[0].mxu0
      %v5905 = vadd.f32 0.0, %v5904
      %v5906 = vpop.f32.mrb[0].mxu0
      %5907 = vdwg.mxu0
      %v5908 = vadd.f32 %v5654, %v5846
      %v5909 = vadd.f32 %v5655, %v5849
      %v5910 = vadd.f32 %v5656, %v5854
      %v5911 = vadd.f32 %v5657, %v5857
      %v5912 = vadd.f32 %v5658, %v5862
      %v5913 = vadd.f32 %v5659, %v5865
      %v5914 = vadd.f32 %v5660, %v5870
      %v5915 = vadd.f32 %v5661, %v5873
      %v5916 = vadd.f32 %v5662, %v5878
      %v5917 = vadd.f32 %v5663, %v5881
      %v5918 = vadd.f32 %v5664, %v5886
      %v5919 = vadd.f32 %v5665, %v5889
      %v5920 = vadd.f32 %v5666, %v5894
      %v5921 = vadd.f32 %v5667, %v5897
      %v5922 = vadd.f32 %v5668, %v5902
      %v5923 = vadd.f32 %v5669, %v5905
      %s5924 = scalar_lea.vmem [#allocation2], 36
      %v5925 = vld [vmem:[%s5924] sm:$0xf]
      %v5926 = vld [vmem:[%s5924 + $0x4] sm:$0xf]
      %v5927 = vld [vmem:[%s5924 + $0xc] sm:$0xf]
      %v5928 = vld [vmem:[%s5924 + $0x10] sm:$0xf]
      %v5929 = vld [vmem:[%s5924 + $0x18] sm:$0xf]
      %v5930 = vld [vmem:[%s5924 + $0x1c] sm:$0xf]
      %v5931 = vld [vmem:[%s5924 + $0x24] sm:$0xf]
      %v5932 = vld [vmem:[%s5924 + $0x28] sm:$0xf]
      %v5933 = vld [vmem:[%s5924 + $0x30] sm:$0xf]
      %v5934 = vld [vmem:[%s5924 + $0x34] sm:$0xf]
      %v5935 = vld [vmem:[%s5924 + $0x3c] sm:$0xf]
      %v5936 = vld [vmem:[%s5924 + $0x40] sm:$0xf]
      %v5937 = vld [vmem:[%s5924 + $0x48] sm:$0xf]
      %v5938 = vld [vmem:[%s5924 + $0x4c] sm:$0xf]
      %v5939 = vld [vmem:[%s5924 + $0x54] sm:$0xf]
      %v5940 = vld [vmem:[%s5924 + $0x58] sm:$0xf]
      %s5941 = scalar_lea.vmem %s4, 12
      %v5942 = vld [vmem:[%s5941] sm:$0x3]
      %v5959 = vunpack.c.l.b16 %v5925
      %v5960 = vunpack.c.l.b16 %v5926
      %v5961 = vunpack.c.l.b16 %v5927
      %v5962 = vunpack.c.l.b16 %v5928
      %v5963 = vunpack.c.l.b16 %v5929
      %v5964 = vunpack.c.l.b16 %v5930
      %v5965 = vunpack.c.l.b16 %v5931
      %v5966 = vunpack.c.l.b16 %v5932
      %v5967 = vunpack.c.l.b16 %v5933
      %v5968 = vunpack.c.l.b16 %v5934
      %v5969 = vunpack.c.l.b16 %v5935
      %v5970 = vunpack.c.l.b16 %v5936
      %v5971 = vunpack.c.l.b16 %v5937
      %v5972 = vunpack.c.l.b16 %v5938
      %v5973 = vunpack.c.l.b16 %v5939
      %v5974 = vunpack.c.l.b16 %v5940
      %v5975 = vpack.c.b16 %v5960, %v5959
      %v5976 = vpack.c.b16 %v5962, %v5961
      %v5977 = vpack.c.b16 %v5964, %v5963
      %v5978 = vpack.c.b16 %v5966, %v5965
      %v5979 = vpack.c.b16 %v5968, %v5967
      %v5980 = vpack.c.b16 %v5970, %v5969
      %v5981 = vpack.c.b16 %v5972, %v5971
      %v5982 = vpack.c.b16 %v5974, %v5973
      %v5984 = vsel %vm1255, %v5975, 0
      %v5987 = vsel %vm1255, %v5976, 0
      %v5990 = vsel %vm1255, %v5977, 0
      %v5993 = vsel %vm1255, %v5978, 0
      %v5996 = vsel %vm1255, %v5979, 0
      %v5999 = vsel %vm1255, %v5980, 0
      %v6002 = vsel %vm1255, %v5981, 0
      %v6005 = vsel %vm1255, %v5982, 0
      %v6008 = vsel %vm1286, %v5942, 0
      %6010 = vmatprep.subr.bf16.mxu0 0
      %6011 = vmatpush1.bf16.msra.mxu0 %v6008
      %6012 = vmatprep.subr.bf16.mxu0 0
      %6013 = vmatpush1.bf16.msra.mxu0 0
      %6014 = vmatprep.subr.bf16.mxu0 0
      %6015 = vmatpush1.bf16.msra.mxu0 0
      %6016 = vmatprep.subr.bf16.mxu0 0
      %6017 = vmatpush1.bf16.msra.mxu0 0
      %6018 = vmatprep.subr.bf16.mxu0 0
      %6019 = vmatpush1.bf16.msra.mxu0 0
      %6020 = vmatprep.subr.bf16.mxu0 0
      %6021 = vmatpush1.bf16.msra.mxu0 0
      %6022 = vmatprep.subr.bf16.mxu0 0
      %6023 = vmatpush1.bf16.msra.mxu0 0
      %6024 = vmatprep.subr.bf16.mxu0 0
      %6025 = vmatpush1.bf16.msra.mxu0 0
      %6026 = vmatprep.subr.bf16.mxu0 0
      %6027 = vmatpush1.bf16.msra.mxu0 0
      %6028 = vmatprep.subr.bf16.mxu0 0
      %6029 = vmatpush1.bf16.msra.mxu0 0
      %6030 = vmatprep.subr.bf16.mxu0 0
      %6031 = vmatpush1.bf16.msra.mxu0 0
      %6032 = vmatprep.subr.bf16.mxu0 0
      %6033 = vmatpush1.bf16.msra.mxu0 0
      %6034 = vmatprep.subr.bf16.mxu0 0
      %6035 = vmatpush1.bf16.msra.mxu0 0
      %6036 = vmatprep.subr.bf16.mxu0 0
      %6037 = vmatpush1.bf16.msra.mxu0 0
      %6038 = vmatprep.subr.bf16.mxu0 0
      %6039 = vmatpush1.bf16.msra.mxu0 0
      %6040 = vmatprep.subr.bf16.mxu0 0
      %6041 = vmatpush1.bf16.msra.mxu0 0
      %6042 = vmatprep.mubr.bf16.mxu0 0
      %6043 = vmatmul.mubr.bf16.gmra.mrb[0].mxu0 %v5984
      %v6044 = vpop.f32.mrb[0].mxu0
      %v6045 = vadd.f32 0.0, %v6044
      %v6046 = vpop.f32.mrb[0].mxu0
      %v6047 = vpop.f32.mrb[0].mxu0
      %v6048 = vadd.f32 0.0, %v6047
      %v6049 = vpop.f32.mrb[0].mxu0
      %6050 = vmatprep.mubr.bf16.mxu0 0
      %6051 = vmatmul.mubr.bf16.gmra.mrb[0].mxu0 %v5987
      %v6052 = vpop.f32.mrb[0].mxu0
      %v6053 = vadd.f32 0.0, %v6052
      %v6054 = vpop.f32.mrb[0].mxu0
      %v6055 = vpop.f32.mrb[0].mxu0
      %v6056 = vadd.f32 0.0, %v6055
      %v6057 = vpop.f32.mrb[0].mxu0
      %6058 = vmatprep.mubr.bf16.mxu0 0
      %6059 = vmatmul.mubr.bf16.gmra.mrb[0].mxu0 %v5990
      %v6060 = vpop.f32.mrb[0].mxu0
      %v6061 = vadd.f32 0.0, %v6060
      %v6062 = vpop.f32.mrb[0].mxu0
      %v6063 = vpop.f32.mrb[0].mxu0
      %v6064 = vadd.f32 0.0, %v6063
      %v6065 = vpop.f32.mrb[0].mxu0
      %6066 = vmatprep.mubr.bf16.mxu0 0
      %6067 = vmatmul.mubr.bf16.gmra.mrb[0].mxu0 %v5993
      %v6068 = vpop.f32.mrb[0].mxu0
      %v6069 = vadd.f32 0.0, %v6068
      %v6070 = vpop.f32.mrb[0].mxu0
      %v6071 = vpop.f32.mrb[0].mxu0
      %v6072 = vadd.f32 0.0, %v6071
      %v6073 = vpop.f32.mrb[0].mxu0
      %6074 = vmatprep.mubr.bf16.mxu0 0
      %6075 = vmatmul.mubr.bf16.gmra.mrb[0].mxu0 %v5996
      %v6076 = vpop.f32.mrb[0].mxu0
      %v6077 = vadd.f32 0.0, %v6076
      %v6078 = vpop.f32.mrb[0].mxu0
      %v6079 = vpop.f32.mrb[0].mxu0
      %v6080 = vadd.f32 0.0, %v6079
      %v6081 = vpop.f32.mrb[0].mxu0
      %6082 = vmatprep.mubr.bf16.mxu0 0
      %6083 = vmatmul.mubr.bf16.gmra.mrb[0].mxu0 %v5999
      %v6084 = vpop.f32.mrb[0].mxu0
      %v6085 = vadd.f32 0.0, %v6084
      %v6086 = vpop.f32.mrb[0].mxu0
      %v6087 = vpop.f32.mrb[0].mxu0
      %v6088 = vadd.f32 0.0, %v6087
      %v6089 = vpop.f32.mrb[0].mxu0
      %6090 = vmatprep.mubr.bf16.mxu0 0
      %6091 = vmatmul.mubr.bf16.gmra.mrb[0].mxu0 %v6002
      %v6092 = vpop.f32.mrb[0].mxu0
      %v6093 = vadd.f32 0.0, %v6092
      %v6094 = vpop.f32.mrb[0].mxu0
      %v6095 = vpop.f32.mrb[0].mxu0
      %v6096 = vadd.f32 0.0, %v6095
      %v6097 = vpop.f32.mrb[0].mxu0
      %6098 = vmatprep.mubr.bf16.mxu0 0
      %6099 = vmatmul.mubr.bf16.gmra.mrb[0].mxu0 %v6005
      %v6100 = vpop.f32.mrb[0].mxu0
      %v6101 = vadd.f32 0.0, %v6100
      %v6102 = vpop.f32.mrb[0].mxu0
      %v6103 = vpop.f32.mrb[0].mxu0
      %v6104 = vadd.f32 0.0, %v6103
      %v6105 = vpop.f32.mrb[0].mxu0
      %6106 = vdwg.mxu0
      %v6107 = vadd.f32 %v5908, %v6045
      %v6108 = vadd.f32 %v5909, %v6048
      %v6109 = vadd.f32 %v5910, %v6053
      %v6110 = vadd.f32 %v5911, %v6056
      %v6111 = vadd.f32 %v5912, %v6061
      %v6112 = vadd.f32 %v5913, %v6064
      %v6113 = vadd.f32 %v5914, %v6069
      %v6114 = vadd.f32 %v5915, %v6072
      %v6115 = vadd.f32 %v5916, %v6077
      %v6116 = vadd.f32 %v5917, %v6080
      %v6117 = vadd.f32 %v5918, %v6085
      %v6118 = vadd.f32 %v5919, %v6088
      %v6119 = vadd.f32 %v5920, %v6093
      %v6120 = vadd.f32 %v5921, %v6096
      %v6121 = vadd.f32 %v5922, %v6101
      %v6122 = vadd.f32 %v5923, %v6104
      %v6123 = vld [vmem:[%s5924] sm:$0xf]
      %v6124 = vld [vmem:[%s5924 + $0x4] sm:$0xf]
      %v6125 = vld [vmem:[%s5924 + $0x8] sm:$0x1]
      %v6126 = vld [vmem:[%s5924 + $0xc] sm:$0xf]
      %v6127 = vld [vmem:[%s5924 + $0x10] sm:$0xf]
      %v6128 = vld [vmem:[%s5924 + $0x14] sm:$0x1]
      %v6129 = vld [vmem:[%s5924 + $0x18] sm:$0xf]
      %v6130 = vld [vmem:[%s5924 + $0x1c] sm:$0xf]
      %v6131 = vld [vmem:[%s5924 + $0x20] sm:$0x1]
      %v6132 = vld [vmem:[%s5924 + $0x24] sm:$0xf]
      %v6133 = vld [vmem:[%s5924 + $0x28] sm:$0xf]
      %v6134 = vld [vmem:[%s5924 + $0x2c] sm:$0x1]
      %v6135 = vld [vmem:[%s5924 + $0x30] sm:$0xf]
      %v6136 = vld [vmem:[%s5924 + $0x34] sm:$0xf]
      %v6137 = vld [vmem:[%s5924 + $0x38] sm:$0x1]
      %v6138 = vld [vmem:[%s5924 + $0x3c] sm:$0xf]
      %v6139 = vld [vmem:[%s5924 + $0x40] sm:$0xf]
      %v6140 = vld [vmem:[%s5924 + $0x44] sm:$0x1]
      %v6141 = vld [vmem:[%s5924 + $0x48] sm:$0xf]
      %v6142 = vld [vmem:[%s5924 + $0x4c] sm:$0xf]
      %v6143 = vld [vmem:[%s5924 + $0x50] sm:$0x1]
      %v6144 = vld [vmem:[%s5924 + $0x54] sm:$0xf]
      %v6145 = vld [vmem:[%s5924 + $0x58] sm:$0xf]
      %v6146 = vld [vmem:[%s5924 + $0x5c] sm:$0x1]
      %v6148 = vshrl.u32 %v6123, 16
      %v6150 = vrot.slane %v6148, 4
      %v6151 = vshll.u32 %v6123, 16
      %v6153 = vrot.slane %v6151, 5
      %v6154 = vor.u32 %v6150, %v6153
      %v6155 = vrot.slane %v6154, 4
      %v6157 = vshll.u32 %v6124, 16
      %v6159 = vrot.slane %v6157, 5
      %v6160 = vsel %vm982, %v6155, %v6159
      %v6161 = vshrl.u32 %v6124, 16
      %v6163 = vrot.slane %v6161, 4
      %v6164 = vor.u32 %v6163, %v6159
      %v6165 = vrot.slane %v6164, 4
      %v6167 = vshll.u32 %v6125, 16
      %v6169 = vrot.slane %v6167, 5
      %v6170 = vsel %vm982, %v6165, %v6169
      %v6172 = vshrl.u32 %v6126, 16
      %v6174 = vrot.slane %v6172, 4
      %v6175 = vshll.u32 %v6126, 16
      %v6177 = vrot.slane %v6175, 5
      %v6178 = vor.u32 %v6174, %v6177
      %v6179 = vrot.slane %v6178, 4
      %v6181 = vshll.u32 %v6127, 16
      %v6183 = vrot.slane %v6181, 5
      %v6184 = vsel %vm982, %v6179, %v6183
      %v6185 = vshrl.u32 %v6127, 16
      %v6187 = vrot.slane %v6185, 4
      %v6188 = vor.u32 %v6187, %v6183
      %v6189 = vrot.slane %v6188, 4
      %v6191 = vshll.u32 %v6128, 16
      %v6193 = vrot.slane %v6191, 5
      %v6194 = vsel %vm982, %v6189, %v6193
      %v6196 = vshrl.u32 %v6129, 16
      %v6198 = vrot.slane %v6196, 4
      %v6199 = vshll.u32 %v6129, 16
      %v6201 = vrot.slane %v6199, 5
      %v6202 = vor.u32 %v6198, %v6201
      %v6203 = vrot.slane %v6202, 4
      %v6205 = vshll.u32 %v6130, 16
      %v6207 = vrot.slane %v6205, 5
      %v6208 = vsel %vm982, %v6203, %v6207
      %v6209 = vshrl.u32 %v6130, 16
      %v6211 = vrot.slane %v6209, 4
      %v6212 = vor.u32 %v6211, %v6207
      %v6213 = vrot.slane %v6212, 4
      %v6215 = vshll.u32 %v6131, 16
      %v6217 = vrot.slane %v6215, 5
      %v6218 = vsel %vm982, %v6213, %v6217
      %v6220 = vshrl.u32 %v6132, 16
      %v6222 = vrot.slane %v6220, 4
      %v6223 = vshll.u32 %v6132, 16
      %v6225 = vrot.slane %v6223, 5
      %v6226 = vor.u32 %v6222, %v6225
      %v6227 = vrot.slane %v6226, 4
      %v6229 = vshll.u32 %v6133, 16
      %v6231 = vrot.slane %v6229, 5
      %v6232 = vsel %vm982, %v6227, %v6231
      %v6233 = vshrl.u32 %v6133, 16
      %v6235 = vrot.slane %v6233, 4
      %v6236 = vor.u32 %v6235, %v6231
      %v6237 = vrot.slane %v6236, 4
      %v6239 = vshll.u32 %v6134, 16
      %v6241 = vrot.slane %v6239, 5
      %v6242 = vsel %vm982, %v6237, %v6241
      %v6244 = vshrl.u32 %v6135, 16
      %v6246 = vrot.slane %v6244, 4
      %v6247 = vshll.u32 %v6135, 16
      %v6249 = vrot.slane %v6247, 5
      %v6250 = vor.u32 %v6246, %v6249
      %v6251 = vrot.slane %v6250, 4
      %v6253 = vshll.u32 %v6136, 16
      %v6255 = vrot.slane %v6253, 5
      %v6256 = vsel %vm982, %v6251, %v6255
      %v6257 = vshrl.u32 %v6136, 16
      %v6259 = vrot.slane %v6257, 4
      %v6260 = vor.u32 %v6259, %v6255
      %v6261 = vrot.slane %v6260, 4
      %v6263 = vshll.u32 %v6137, 16
      %v6265 = vrot.slane %v6263, 5
      %v6266 = vsel %vm982, %v6261, %v6265
      %v6268 = vshrl.u32 %v6138, 16
      %v6270 = vrot.slane %v6268, 4
      %v6271 = vshll.u32 %v6138, 16
      %v6273 = vrot.slane %v6271, 5
      %v6274 = vor.u32 %v6270, %v6273
      %v6275 = vrot.slane %v6274, 4
      %v6277 = vshll.u32 %v6139, 16
      %v6279 = vrot.slane %v6277, 5
      %v6280 = vsel %vm982, %v6275, %v6279
      %v6281 = vshrl.u32 %v6139, 16
      %v6283 = vrot.slane %v6281, 4
      %v6284 = vor.u32 %v6283, %v6279
      %v6285 = vrot.slane %v6284, 4
      %v6287 = vshll.u32 %v6140, 16
      %v6289 = vrot.slane %v6287, 5
      %v6290 = vsel %vm982, %v6285, %v6289
      %v6292 = vshrl.u32 %v6141, 16
      %v6294 = vrot.slane %v6292, 4
      %v6295 = vshll.u32 %v6141, 16
      %v6297 = vrot.slane %v6295, 5
      %v6298 = vor.u32 %v6294, %v6297
      %v6299 = vrot.slane %v6298, 4
      %v6301 = vshll.u32 %v6142, 16
      %v6303 = vrot.slane %v6301, 5
      %v6304 = vsel %vm982, %v6299, %v6303
      %v6305 = vshrl.u32 %v6142, 16
      %v6307 = vrot.slane %v6305, 4
      %v6308 = vor.u32 %v6307, %v6303
      %v6309 = vrot.slane %v6308, 4
      %v6311 = vshll.u32 %v6143, 16
      %v6313 = vrot.slane %v6311, 5
      %v6314 = vsel %vm982, %v6309, %v6313
      %v6316 = vshrl.u32 %v6144, 16
      %v6318 = vrot.slane %v6316, 4
      %v6319 = vshll.u32 %v6144, 16
      %v6321 = vrot.slane %v6319, 5
      %v6322 = vor.u32 %v6318, %v6321
      %v6323 = vrot.slane %v6322, 4
      %v6325 = vshll.u32 %v6145, 16
      %v6327 = vrot.slane %v6325, 5
      %v6328 = vsel %vm982, %v6323, %v6327
      %v6329 = vshrl.u32 %v6145, 16
      %v6331 = vrot.slane %v6329, 4
      %v6332 = vor.u32 %v6331, %v6327
      %v6333 = vrot.slane %v6332, 4
      %v6335 = vshll.u32 %v6146, 16
      %v6337 = vrot.slane %v6335, 5
      %v6338 = vsel %vm982, %v6333, %v6337
      %s6339 = scalar_lea.vmem %s4, 14
      %v6340 = vld [vmem:[%s6339] sm:$0x3]
      %v6341 = vunpack.c.l.b16 %v6160
      %v6342 = vunpack.c.l.b16 %v6170
      %v6343 = vunpack.c.l.b16 %v6184
      %v6344 = vunpack.c.l.b16 %v6194
      %v6345 = vunpack.c.l.b16 %v6208
      %v6346 = vunpack.c.l.b16 %v6218
      %v6347 = vunpack.c.l.b16 %v6232
      %v6348 = vunpack.c.l.b16 %v6242
      %v6349 = vunpack.c.l.b16 %v6256
      %v6350 = vunpack.c.l.b16 %v6266
      %v6351 = vunpack.c.l.b16 %v6280
      %v6352 = vunpack.c.l.b16 %v6290
      %v6353 = vunpack.c.l.b16 %v6304
      %v6354 = vunpack.c.l.b16 %v6314
      %v6355 = vunpack.c.l.b16 %v6328
      %v6356 = vunpack.c.l.b16 %v6338
      %v6357 = vpack.c.b16 %v6342, %v6341
      %v6358 = vpack.c.b16 %v6344, %v6343
      %v6359 = vpack.c.b16 %v6346, %v6345
      %v6360 = vpack.c.b16 %v6348, %v6347
      %v6361 = vpack.c.b16 %v6350, %v6349
      %v6362 = vpack.c.b16 %v6352, %v6351
      %v6363 = vpack.c.b16 %v6354, %v6353
      %v6364 = vpack.c.b16 %v6356, %v6355
      %v6366 = vsel %vm1255, %v6357, 0
      %v6369 = vsel %vm1255, %v6358, 0
      %v6372 = vsel %vm1255, %v6359, 0
      %v6375 = vsel %vm1255, %v6360, 0
      %v6378 = vsel %vm1255, %v6361, 0
      %v6381 = vsel %vm1255, %v6362, 0
      %v6384 = vsel %vm1255, %v6363, 0
      %v6387 = vsel %vm1255, %v6364, 0
      %v6390 = vsel %vm1286, %v6340, 0
      %6392 = vmatprep.subr.bf16.mxu0 0
      %6393 = vmatpush1.bf16.msra.mxu0 %v6390
      %6394 = vmatprep.subr.bf16.mxu0 0
      %6395 = vmatpush1.bf16.msra.mxu0 0
      %6396 = vmatprep.subr.bf16.mxu0 0
      %6397 = vmatpush1.bf16.msra.mxu0 0
      %6398 = vmatprep.subr.bf16.mxu0 0
      %6399 = vmatpush1.bf16.msra.mxu0 0
      %6400 = vmatprep.subr.bf16.mxu0 0
      %6401 = vmatpush1.bf16.msra.mxu0 0
      %6402 = vmatprep.subr.bf16.mxu0 0
      %6403 = vmatpush1.bf16.msra.mxu0 0
      %6404 = vmatprep.subr.bf16.mxu0 0
      %6405 = vmatpush1.bf16.msra.mxu0 0
      %6406 = vmatprep.subr.bf16.mxu0 0
      %6407 = vmatpush1.bf16.msra.mxu0 0
      %6408 = vmatprep.subr.bf16.mxu0 0
      %6409 = vmatpush1.bf16.msra.mxu0 0
      %6410 = vmatprep.subr.bf16.mxu0 0
      %6411 = vmatpush1.bf16.msra.mxu0 0
      %6412 = vmatprep.subr.bf16.mxu0 0
      %6413 = vmatpush1.bf16.msra.mxu0 0
      %6414 = vmatprep.subr.bf16.mxu0 0
      %6415 = vmatpush1.bf16.msra.mxu0 0
      %6416 = vmatprep.subr.bf16.mxu0 0
      %6417 = vmatpush1.bf16.msra.mxu0 0
      %6418 = vmatprep.subr.bf16.mxu0 0
      %6419 = vmatpush1.bf16.msra.mxu0 0
      %6420 = vmatprep.subr.bf16.mxu0 0
      %6421 = vmatpush1.bf16.msra.mxu0 0
      %6422 = vmatprep.subr.bf16.mxu0 0
      %6423 = vmatpush1.bf16.msra.mxu0 0
      %6424 = vmatprep.mubr.bf16.mxu0 0
      %6425 = vmatmul.mubr.bf16.gmra.mrb[0].mxu0 %v6366
      %v6426 = vpop.f32.mrb[0].mxu0
      %v6427 = vadd.f32 0.0, %v6426
      %v6428 = vpop.f32.mrb[0].mxu0
      %v6429 = vpop.f32.mrb[0].mxu0
      %v6430 = vadd.f32 0.0, %v6429
      %v6431 = vpop.f32.mrb[0].mxu0
      %6432 = vmatprep.mubr.bf16.mxu0 0
      %6433 = vmatmul.mubr.bf16.gmra.mrb[0].mxu0 %v6369
      %v6434 = vpop.f32.mrb[0].mxu0
      %v6435 = vadd.f32 0.0, %v6434
      %v6436 = vpop.f32.mrb[0].mxu0
      %v6437 = vpop.f32.mrb[0].mxu0
      %v6438 = vadd.f32 0.0, %v6437
      %v6439 = vpop.f32.mrb[0].mxu0
      %6440 = vmatprep.mubr.bf16.mxu0 0
      %6441 = vmatmul.mubr.bf16.gmra.mrb[0].mxu0 %v6372
      %v6442 = vpop.f32.mrb[0].mxu0
      %v6443 = vadd.f32 0.0, %v6442
      %v6444 = vpop.f32.mrb[0].mxu0
      %v6445 = vpop.f32.mrb[0].mxu0
      %v6446 = vadd.f32 0.0, %v6445
      %v6447 = vpop.f32.mrb[0].mxu0
      %6448 = vmatprep.mubr.bf16.mxu0 0
      %6449 = vmatmul.mubr.bf16.gmra.mrb[0].mxu0 %v6375
      %v6450 = vpop.f32.mrb[0].mxu0
      %v6451 = vadd.f32 0.0, %v6450
      %v6452 = vpop.f32.mrb[0].mxu0
      %v6453 = vpop.f32.mrb[0].mxu0
      %v6454 = vadd.f32 0.0, %v6453
      %v6455 = vpop.f32.mrb[0].mxu0
      %6456 = vmatprep.mubr.bf16.mxu0 0
      %6457 = vmatmul.mubr.bf16.gmra.mrb[0].mxu0 %v6378
      %v6458 = vpop.f32.mrb[0].mxu0
      %v6459 = vadd.f32 0.0, %v6458
      %v6460 = vpop.f32.mrb[0].mxu0
      %v6461 = vpop.f32.mrb[0].mxu0
      %v6462 = vadd.f32 0.0, %v6461
      %v6463 = vpop.f32.mrb[0].mxu0
      %6464 = vmatprep.mubr.bf16.mxu0 0
      %6465 = vmatmul.mubr.bf16.gmra.mrb[0].mxu0 %v6381
      %v6466 = vpop.f32.mrb[0].mxu0
      %v6467 = vadd.f32 0.0, %v6466
      %v6468 = vpop.f32.mrb[0].mxu0
      %v6469 = vpop.f32.mrb[0].mxu0
      %v6470 = vadd.f32 0.0, %v6469
      %v6471 = vpop.f32.mrb[0].mxu0
      %6472 = vmatprep.mubr.bf16.mxu0 0
      %6473 = vmatmul.mubr.bf16.gmra.mrb[0].mxu0 %v6384
      %v6474 = vpop.f32.mrb[0].mxu0
      %v6475 = vadd.f32 0.0, %v6474
      %v6476 = vpop.f32.mrb[0].mxu0
      %v6477 = vpop.f32.mrb[0].mxu0
      %v6478 = vadd.f32 0.0, %v6477
      %v6479 = vpop.f32.mrb[0].mxu0
      %6480 = vmatprep.mubr.bf16.mxu0 0
      %6481 = vmatmul.mubr.bf16.gmra.mrb[0].mxu0 %v6387
      %v6482 = vpop.f32.mrb[0].mxu0
      %v6483 = vadd.f32 0.0, %v6482
      %v6484 = vpop.f32.mrb[0].mxu0
      %v6485 = vpop.f32.mrb[0].mxu0
      %v6486 = vadd.f32 0.0, %v6485
      %v6487 = vpop.f32.mrb[0].mxu0
      %6488 = vdwg.mxu0
      %v6489 = vadd.f32 %v6107, %v6427
      %v6490 = vadd.f32 %v6108, %v6430
      %v6491 = vadd.f32 %v6109, %v6435
      %v6492 = vadd.f32 %v6110, %v6438
      %v6493 = vadd.f32 %v6111, %v6443
      %v6494 = vadd.f32 %v6112, %v6446
      %v6495 = vadd.f32 %v6113, %v6451
      %v6496 = vadd.f32 %v6114, %v6454
      %v6497 = vadd.f32 %v6115, %v6459
      %v6498 = vadd.f32 %v6116, %v6462
      %v6499 = vadd.f32 %v6117, %v6467
      %v6500 = vadd.f32 %v6118, %v6470
      %v6501 = vadd.f32 %v6119, %v6475
      %v6502 = vadd.f32 %v6120, %v6478
      %v6503 = vadd.f32 %v6121, %v6483
      %v6504 = vadd.f32 %v6122, %v6486
      %v6505 = vld [vmem:[%s5924] sm:$0xe]
      %v6506 = vld [vmem:[%s5924 + $0xc] sm:$0xe]
      %v6507 = vld [vmem:[%s5924 + $0x18] sm:$0xe]
      %v6508 = vld [vmem:[%s5924 + $0x24] sm:$0xe]
      %v6509 = vld [vmem:[%s5924 + $0x30] sm:$0xe]
      %v6510 = vld [vmem:[%s5924 + $0x3c] sm:$0xe]
      %v6511 = vld [vmem:[%s5924 + $0x48] sm:$0xe]
      %v6512 = vld [vmem:[%s5924 + $0x54] sm:$0xe]
      %v6537 = vrot.slane %v6505, 5
      %v6538 = vrot.slane %v6537, 4
      %v6539 = vrot.slane %v6124, 5
      %v6540 = vsel %vm1631, %v6538, %v6539
      %v6541 = vrot.slane %v6539, 4
      %v6542 = vrot.slane %v6125, 5
      %v6543 = vsel %vm1631, %v6541, %v6542
      %v6544 = vrot.slane %v6506, 5
      %v6545 = vrot.slane %v6544, 4
      %v6546 = vrot.slane %v6127, 5
      %v6547 = vsel %vm1631, %v6545, %v6546
      %v6548 = vrot.slane %v6546, 4
      %v6549 = vrot.slane %v6128, 5
      %v6550 = vsel %vm1631, %v6548, %v6549
      %v6551 = vrot.slane %v6507, 5
      %v6552 = vrot.slane %v6551, 4
      %v6553 = vrot.slane %v6130, 5
      %v6554 = vsel %vm1631, %v6552, %v6553
      %v6555 = vrot.slane %v6553, 4
      %v6556 = vrot.slane %v6131, 5
      %v6557 = vsel %vm1631, %v6555, %v6556
      %v6558 = vrot.slane %v6508, 5
      %v6559 = vrot.slane %v6558, 4
      %v6560 = vrot.slane %v6133, 5
      %v6561 = vsel %vm1631, %v6559, %v6560
      %v6562 = vrot.slane %v6560, 4
      %v6563 = vrot.slane %v6134, 5
      %v6564 = vsel %vm1631, %v6562, %v6563
      %v6565 = vrot.slane %v6509, 5
      %v6566 = vrot.slane %v6565, 4
      %v6567 = vrot.slane %v6136, 5
      %v6568 = vsel %vm1631, %v6566, %v6567
      %v6569 = vrot.slane %v6567, 4
      %v6570 = vrot.slane %v6137, 5
      %v6571 = vsel %vm1631, %v6569, %v6570
      %v6572 = vrot.slane %v6510, 5
      %v6573 = vrot.slane %v6572, 4
      %v6574 = vrot.slane %v6139, 5
      %v6575 = vsel %vm1631, %v6573, %v6574
      %v6576 = vrot.slane %v6574, 4
      %v6577 = vrot.slane %v6140, 5
      %v6578 = vsel %vm1631, %v6576, %v6577
      %v6579 = vrot.slane %v6511, 5
      %v6580 = vrot.slane %v6579, 4
      %v6581 = vrot.slane %v6142, 5
      %v6582 = vsel %vm1631, %v6580, %v6581
      %v6583 = vrot.slane %v6581, 4
      %v6584 = vrot.slane %v6143, 5
      %v6585 = vsel %vm1631, %v6583, %v6584
      %v6586 = vrot.slane %v6512, 5
      %v6587 = vrot.slane %v6586, 4
      %v6588 = vrot.slane %v6145, 5
      %v6589 = vsel %vm1631, %v6587, %v6588
      %v6590 = vrot.slane %v6588, 4
      %v6591 = vrot.slane %v6146, 5
      %v6592 = vsel %vm1631, %v6590, %v6591
      %s6593 = scalar_lea.vmem %s4, 16
      %v6594 = vld [vmem:[%s6593] sm:$0x3]
      %v6595 = vunpack.c.l.b16 %v6540
      %v6596 = vunpack.c.l.b16 %v6543
      %v6597 = vunpack.c.l.b16 %v6547
      %v6598 = vunpack.c.l.b16 %v6550
      %v6599 = vunpack.c.l.b16 %v6554
      %v6600 = vunpack.c.l.b16 %v6557
      %v6601 = vunpack.c.l.b16 %v6561
      %v6602 = vunpack.c.l.b16 %v6564
      %v6603 = vunpack.c.l.b16 %v6568
      %v6604 = vunpack.c.l.b16 %v6571
      %v6605 = vunpack.c.l.b16 %v6575
      %v6606 = vunpack.c.l.b16 %v6578
      %v6607 = vunpack.c.l.b16 %v6582
      %v6608 = vunpack.c.l.b16 %v6585
      %v6609 = vunpack.c.l.b16 %v6589
      %v6610 = vunpack.c.l.b16 %v6592
      %v6611 = vpack.c.b16 %v6596, %v6595
      %v6612 = vpack.c.b16 %v6598, %v6597
      %v6613 = vpack.c.b16 %v6600, %v6599
      %v6614 = vpack.c.b16 %v6602, %v6601
      %v6615 = vpack.c.b16 %v6604, %v6603
      %v6616 = vpack.c.b16 %v6606, %v6605
      %v6617 = vpack.c.b16 %v6608, %v6607
      %v6618 = vpack.c.b16 %v6610, %v6609
      %v6620 = vsel %vm1255, %v6611, 0
      %v6623 = vsel %vm1255, %v6612, 0
      %v6626 = vsel %vm1255, %v6613, 0
      %v6629 = vsel %vm1255, %v6614, 0
      %v6632 = vsel %vm1255, %v6615, 0
      %v6635 = vsel %vm1255, %v6616, 0
      %v6638 = vsel %vm1255, %v6617, 0
      %v6641 = vsel %vm1255, %v6618, 0
      %v6644 = vsel %vm1286, %v6594, 0
      %6646 = vmatprep.subr.bf16.mxu0 0
      %6647 = vmatpush1.bf16.msra.mxu0 %v6644
      %6648 = vmatprep.subr.bf16.mxu0 0
      %6649 = vmatpush1.bf16.msra.mxu0 0
      %6650 = vmatprep.subr.bf16.mxu0 0
      %6651 = vmatpush1.bf16.msra.mxu0 0
      %6652 = vmatprep.subr.bf16.mxu0 0
      %6653 = vmatpush1.bf16.msra.mxu0 0
      %6654 = vmatprep.subr.bf16.mxu0 0
      %6655 = vmatpush1.bf16.msra.mxu0 0
      %6656 = vmatprep.subr.bf16.mxu0 0
      %6657 = vmatpush1.bf16.msra.mxu0 0
      %6658 = vmatprep.subr.bf16.mxu0 0
      %6659 = vmatpush1.bf16.msra.mxu0 0
      %6660 = vmatprep.subr.bf16.mxu0 0
      %6661 = vmatpush1.bf16.msra.mxu0 0
      %6662 = vmatprep.subr.bf16.mxu0 0
      %6663 = vmatpush1.bf16.msra.mxu0 0
      %6664 = vmatprep.subr.bf16.mxu0 0
      %6665 = vmatpush1.bf16.msra.mxu0 0
      %6666 = vmatprep.subr.bf16.mxu0 0
      %6667 = vmatpush1.bf16.msra.mxu0 0
      %6668 = vmatprep.subr.bf16.mxu0 0
      %6669 = vmatpush1.bf16.msra.mxu0 0
      %6670 = vmatprep.subr.bf16.mxu0 0
      %6671 = vmatpush1.bf16.msra.mxu0 0
      %6672 = vmatprep.subr.bf16.mxu0 0
      %6673 = vmatpush1.bf16.msra.mxu0 0
      %6674 = vmatprep.subr.bf16.mxu0 0
      %6675 = vmatpush1.bf16.msra.mxu0 0
      %6676 = vmatprep.subr.bf16.mxu0 0
      %6677 = vmatpush1.bf16.msra.mxu0 0
      %6678 = vmatprep.mubr.bf16.mxu0 0
      %6679 = vmatmul.mubr.bf16.gmra.mrb[0].mxu0 %v6620
      %v6680 = vpop.f32.mrb[0].mxu0
      %v6681 = vadd.f32 0.0, %v6680
      %v6682 = vpop.f32.mrb[0].mxu0
      %v6683 = vpop.f32.mrb[0].mxu0
      %v6684 = vadd.f32 0.0, %v6683
      %v6685 = vpop.f32.mrb[0].mxu0
      %6686 = vmatprep.mubr.bf16.mxu0 0
      %6687 = vmatmul.mubr.bf16.gmra.mrb[0].mxu0 %v6623
      %v6688 = vpop.f32.mrb[0].mxu0
      %v6689 = vadd.f32 0.0, %v6688
      %v6690 = vpop.f32.mrb[0].mxu0
      %v6691 = vpop.f32.mrb[0].mxu0
      %v6692 = vadd.f32 0.0, %v6691
      %v6693 = vpop.f32.mrb[0].mxu0
      %6694 = vmatprep.mubr.bf16.mxu0 0
      %6695 = vmatmul.mubr.bf16.gmra.mrb[0].mxu0 %v6626
      %v6696 = vpop.f32.mrb[0].mxu0
      %v6697 = vadd.f32 0.0, %v6696
      %v6698 = vpop.f32.mrb[0].mxu0
      %v6699 = vpop.f32.mrb[0].mxu0
      %v6700 = vadd.f32 0.0, %v6699
      %v6701 = vpop.f32.mrb[0].mxu0
      %6702 = vmatprep.mubr.bf16.mxu0 0
      %6703 = vmatmul.mubr.bf16.gmra.mrb[0].mxu0 %v6629
      %v6704 = vpop.f32.mrb[0].mxu0
      %v6705 = vadd.f32 0.0, %v6704
      %v6706 = vpop.f32.mrb[0].mxu0
      %v6707 = vpop.f32.mrb[0].mxu0
      %v6708 = vadd.f32 0.0, %v6707
      %v6709 = vpop.f32.mrb[0].mxu0
      %6710 = vmatprep.mubr.bf16.mxu0 0
      %6711 = vmatmul.mubr.bf16.gmra.mrb[0].mxu0 %v6632
      %v6712 = vpop.f32.mrb[0].mxu0
      %v6713 = vadd.f32 0.0, %v6712
      %v6714 = vpop.f32.mrb[0].mxu0
      %v6715 = vpop.f32.mrb[0].mxu0
      %v6716 = vadd.f32 0.0, %v6715
      %v6717 = vpop.f32.mrb[0].mxu0
      %6718 = vmatprep.mubr.bf16.mxu0 0
      %6719 = vmatmul.mubr.bf16.gmra.mrb[0].mxu0 %v6635
      %v6720 = vpop.f32.mrb[0].mxu0
      %v6721 = vadd.f32 0.0, %v6720
      %v6722 = vpop.f32.mrb[0].mxu0
      %v6723 = vpop.f32.mrb[0].mxu0
      %v6724 = vadd.f32 0.0, %v6723
      %v6725 = vpop.f32.mrb[0].mxu0
      %6726 = vmatprep.mubr.bf16.mxu0 0
      %6727 = vmatmul.mubr.bf16.gmra.mrb[0].mxu0 %v6638
      %v6728 = vpop.f32.mrb[0].mxu0
      %v6729 = vadd.f32 0.0, %v6728
      %v6730 = vpop.f32.mrb[0].mxu0
      %v6731 = vpop.f32.mrb[0].mxu0
      %v6732 = vadd.f32 0.0, %v6731
      %v6733 = vpop.f32.mrb[0].mxu0
      %6734 = vmatprep.mubr.bf16.mxu0 0
      %6735 = vmatmul.mubr.bf16.gmra.mrb[0].mxu0 %v6641
      %v6736 = vpop.f32.mrb[0].mxu0
      %v6737 = vadd.f32 0.0, %v6736
      %v6738 = vpop.f32.mrb[0].mxu0
      %v6739 = vpop.f32.mrb[0].mxu0
      %v6740 = vadd.f32 0.0, %v6739
      %v6741 = vpop.f32.mrb[0].mxu0
      %6742 = vdwg.mxu0
      %v6743 = vadd.f32 %v6489, %v6681
      %v6744 = vadd.f32 %v6490, %v6684
      %v6745 = vadd.f32 %v6491, %v6689
      %v6746 = vadd.f32 %v6492, %v6692
      %v6747 = vadd.f32 %v6493, %v6697
      %v6748 = vadd.f32 %v6494, %v6700
      %v6749 = vadd.f32 %v6495, %v6705
      %v6750 = vadd.f32 %v6496, %v6708
      %v6751 = vadd.f32 %v6497, %v6713
      %v6752 = vadd.f32 %v6498, %v6716
      %v6753 = vadd.f32 %v6499, %v6721
      %v6754 = vadd.f32 %v6500, %v6724
      %v6755 = vadd.f32 %v6501, %v6729
      %v6756 = vadd.f32 %v6502, %v6732
      %v6757 = vadd.f32 %v6503, %v6737
      %v6758 = vadd.f32 %v6504, %v6740
      %v6759 = vmul.f32 %v6743, 0.2
      %v6760 = vmul.f32 %v6744, 0.2
      %v6761 = vmul.f32 %v6745, 0.2
      %v6762 = vmul.f32 %v6746, 0.2
      %v6763 = vmul.f32 %v6747, 0.2
      %v6764 = vmul.f32 %v6748, 0.2
      %v6765 = vmul.f32 %v6749, 0.2
      %v6766 = vmul.f32 %v6750, 0.2
      %v6767 = vmul.f32 %v6751, 0.2
      %v6768 = vmul.f32 %v6752, 0.2
      %v6769 = vmul.f32 %v6753, 0.2
      %v6770 = vmul.f32 %v6754, 0.2
      %v6771 = vmul.f32 %v6755, 0.2
      %v6772 = vmul.f32 %v6756, 0.2
      %v6773 = vmul.f32 %v6757, 0.2
      %v6774 = vmul.f32 %v6758, 0.2
      %v6775 = vmax.f32 %v6743, %v6759
      %v6776 = vmax.f32 %v6744, %v6760
      %v6777 = vmax.f32 %v6745, %v6761
      %v6778 = vmax.f32 %v6746, %v6762
      %v6779 = vmax.f32 %v6747, %v6763
      %v6780 = vmax.f32 %v6748, %v6764
      %v6781 = vmax.f32 %v6749, %v6765
      %v6782 = vmax.f32 %v6750, %v6766
      %v6783 = vmax.f32 %v6751, %v6767
      %v6784 = vmax.f32 %v6752, %v6768
      %v6785 = vmax.f32 %v6753, %v6769
      %v6786 = vmax.f32 %v6754, %v6770
      %v6787 = vmax.f32 %v6755, %v6771
      %v6788 = vmax.f32 %v6756, %v6772
      %v6789 = vmax.f32 %v6757, %v6773
      %v6790 = vmax.f32 %v6758, %v6774
      %v6791 = vpack.c.bf16 %v6776, %v6775
      %v6792 = vpack.c.bf16 %v6778, %v6777
      %v6793 = vpack.c.bf16 %v6780, %v6779
      %v6794 = vpack.c.bf16 %v6782, %v6781
      %v6795 = vpack.c.bf16 %v6784, %v6783
      %v6796 = vpack.c.bf16 %v6786, %v6785
      %v6797 = vpack.c.bf16 %v6788, %v6787
      %v6798 = vpack.c.bf16 %v6790, %v6789
      %v6807 = vunpack.c.l.b16 %v6791
      %v6808 = vunpack.c.h.b16 %v6791
      %v6809 = vunpack.c.l.b16 %v6792
      %v6810 = vunpack.c.h.b16 %v6792
      %v6811 = vunpack.c.l.b16 %v6793
      %v6812 = vunpack.c.h.b16 %v6793
      %v6813 = vunpack.c.l.b16 %v6794
      %v6814 = vunpack.c.h.b16 %v6794
      %v6815 = vunpack.c.l.b16 %v6795
      %v6816 = vunpack.c.h.b16 %v6795
      %v6817 = vunpack.c.l.b16 %v6796
      %v6818 = vunpack.c.h.b16 %v6796
      %v6819 = vunpack.c.l.b16 %v6797
      %v6820 = vunpack.c.h.b16 %v6797
      %v6821 = vunpack.c.l.b16 %v6798
      %v6822 = vunpack.c.h.b16 %v6798
      %v6823 = vpack.c.b16 %v6807, %v6807
      %v6824 = vpack.c.b16 %v6808, %v6808
      %v6825 = vpack.c.b16 %v6809, %v6809
      %v6826 = vpack.c.b16 %v6810, %v6810
      %v6827 = vpack.c.b16 %v6811, %v6811
      %v6828 = vpack.c.b16 %v6812, %v6812
      %v6829 = vpack.c.b16 %v6813, %v6813
      %v6830 = vpack.c.b16 %v6814, %v6814
      %v6831 = vpack.c.b16 %v6815, %v6815
      %v6832 = vpack.c.b16 %v6816, %v6816
      %v6833 = vpack.c.b16 %v6817, %v6817
      %v6834 = vpack.c.b16 %v6818, %v6818
      %v6835 = vpack.c.b16 %v6819, %v6819
      %v6836 = vpack.c.b16 %v6820, %v6820
      %v6837 = vpack.c.b16 %v6821, %v6821
      %v6838 = vpack.c.b16 %v6822, %v6822
      %6855 = vst.msk [vmem:[%s399] sm:$0xf] %vm895, %v6823
      %6856 = vst.msk [vmem:[%s399 + $0x4] sm:$0xf] %vm895, %v6824
      %6857 = vst.msk [vmem:[%s399 + $0x8] sm:$0xf] %vm895, %v6825
      %6858 = vst.msk [vmem:[%s399 + $0xc] sm:$0xf] %vm895, %v6826
      %6859 = vst.msk [vmem:[%s399 + $0x10] sm:$0xf] %vm895, %v6827
      %6860 = vst.msk [vmem:[%s399 + $0x14] sm:$0xf] %vm895, %v6828
      %6861 = vst.msk [vmem:[%s399 + $0x18] sm:$0xf] %vm895, %v6829
      %6862 = vst.msk [vmem:[%s399 + $0x1c] sm:$0xf] %vm895, %v6830
      %6863 = vst.msk [vmem:[%s399 + $0x20] sm:$0xf] %vm895, %v6831
      %6864 = vst.msk [vmem:[%s399 + $0x24] sm:$0xf] %vm895, %v6832
      %6865 = vst.msk [vmem:[%s399 + $0x28] sm:$0xf] %vm895, %v6833
      %6866 = vst.msk [vmem:[%s399 + $0x2c] sm:$0xf] %vm895, %v6834
      %6867 = vst.msk [vmem:[%s399 + $0x30] sm:$0xf] %vm895, %v6835
      %6868 = vst.msk [vmem:[%s399 + $0x34] sm:$0xf] %vm895, %v6836
      %6869 = vst.msk [vmem:[%s399 + $0x38] sm:$0xf] %vm895, %v6837
      %6870 = vst.msk [vmem:[%s399 + $0x3c] sm:$0xf] %vm895, %v6838
      %s6871 = smul.u32 16, %s21
      %p6872 = scmp.lt.s32.totalorder %s20, 1
      %s6873 = scalar_select %p6872, %s20, 1
      %p6874 = scmp.lt.s32.totalorder %s6871, 31
      %s6875 = scalar_select %p6874, %s6871, 31
      %s6876 = smul.addr %s6873, 32
      %s6877 = sadd.s32 %s6875, %s6876
      %s6878 = smul.addr %s6877, 4
      %s6879 = scalar_lea.vmem %s5, %s6878
      // Predicated region
      $region65: #{tpu_custom_call.1} parent=39 // pred_check
        %p6880 = pneg %p190
      $region66: #{tpu_custom_call.1} parent=39 // pred_check_branch
        %6882 = sbr.rel (%p6880) target = $region68
      $region67: #{tpu_custom_call.1} parent=39 // pred_region
        %s6883 = smul.u32 16, %s21
      $region68: #{tpu_custom_call.1} parent=39 // pred_fallthru
        _
    $region40: #{tpu_custom_call.1} parent=5 // pred_fallthru
      _
    %p6884 = scmp.le.s32.totalorder 2, %s11
    // Predicated region
    $region69: #{tpu_custom_call.1} parent=5 // pred_check
      %p6885 = pneg %p6884
    $region70: #{tpu_custom_call.1} parent=5 // pred_check_branch
      %6887 = sbr.rel (%p6885) target = $region72
    $region71: #{tpu_custom_call.1} parent=5 // pred_region
      %s6888 = ssub.s32 %s11, 2
      // Predicated region
      $region73: #{tpu_custom_call.1} parent=71 // pred_check
        %p6889 = pneg %p196
      $region74: #{tpu_custom_call.1} parent=71 // pred_check_branch
        %6891 = sbr.rel (%p6889) target = $region76
      $region75: #{tpu_custom_call.1} parent=71 // pred_region
        %s6892 = smul.u32 16, %s23
        %p6893 = scmp.lt.s32.totalorder %s22, 1
        %s6894 = scalar_select %p6893, %s22, 1
        %p6895 = scmp.lt.s32.totalorder %s6892, 31
        %s6896 = scalar_select %p6895, %s6892, 31
        %s6897 = smul.addr %s6894, 32
        %s6898 = sadd.s32 %s6896, %s6897
        %s6899 = smul.addr %s6898, 4
        %s6900 = scalar_lea.vmem %s5, %s6899
      $region76: #{tpu_custom_call.1} parent=71 // pred_fallthru
        _
    $region72: #{tpu_custom_call.1} parent=5 // pred_fallthru
      _
  $region6: #{tpu_custom_call.1} parent=0 // loop_footer
    %s15 = sadd.s32 1, %s11
  $region7: #{tpu_custom_call.1} parent=0 // loop_footer_branch
    %10 = sbr.rel target = $region3
  $region8: #{tpu_custom_call.1} parent=0 // loop_exit
    _

</llo_original>
